<compile_context>
chip_gen: v6e
topology: v6e:2x2x1
jax: 0.10.0
libtpu: 0.0.40
codegen_flags: <defaults>
</compile_context>

<pallas_src>
import functools

import jax
import jax.numpy as jnp
from jax.experimental import pallas as pl
from jax.experimental.pallas import tpu as pltpu


# --------------------------- small config helpers ----------------------------
def _vmem_limit_bytes(default=32 << 20):
    """Scoped-VMEM limit: half the physical VMEM (64 MiB on v5e/v6e, 32 MiB on v7x)."""
    try:
        cap = getattr(pltpu.get_tpu_info(), "vmem_capacity_bytes", None)
        if cap:
            return int(cap) // 2
    except Exception:
        pass
    return default


def _pick_tile(dim, *, target, prefer_split=False, lane=128):
    """Largest multiple-of-`lane` divisor of `dim` that is <= target.
    With prefer_split, avoid a single-tile axis when `dim` allows splitting
    (keeps >=2 programs on 'parallel' grid axes for v7x's two TensorCores)."""
    if dim % lane != 0:
        return dim                       # irregular / tiny shape: one full tile
    cands = [t for t in range(lane, dim + 1, lane) if dim % t == 0]
    fit = [t for t in cands if t <= target] or [lane]
    t = max(fit)
    if prefer_split and t == dim and len(cands) > 1:
        t = max(c for c in cands if c < dim)
    return t


def _head_tile(k_dim, n_dim, vmem_limit):
    """Output-feature tile for a streamed [k_dim, n] bf16 weight: the
    double-buffered weight tile should take <= ~1/3 of the scoped VMEM."""
    per_lane = 2 * k_dim * 2                     # 2 buffers x bf16 bytes per lane
    budget = max(vmem_limit // 3, 1 << 20)
    target = max(128, min(1024, (budget // per_lane) // 128 * 128))
    return _pick_tile(n_dim, target=target, prefer_split=True)


# ---------------------------------------------------------------------------
# Encoder stand-in: 1x1 conv + ReLU + global average pool.
# Grid: (F tiles [parallel], spatial tiles [arbitrary, accumulated]).
# ---------------------------------------------------------------------------
def encoder_kernel(x_ref, w_ref, b_ref, o_ref, acc_ref, *, inv_hw):
    # x_ref: [B, C, ts] f32   w_ref: [tf, C] f32   b_ref: [tf, 1] f32
    # o_ref: [B, tf] bf16     acc_ref: VMEM [B, tf] f32 (pooled sum)
    s = pl.program_id(1)

    @pl.when(s == 0)
    def _():
        acc_ref[...] = jnp.zeros_like(acc_ref)

    n_batch = x_ref.shape[0]
    for b in range(n_batch):                       # unrolled; B is small
        hb = jnp.dot(w_ref[...], x_ref[b],          # [tf, C] @ [C, ts] -> [tf, ts]
                     preferred_element_type=jnp.float32)
        hb = jnp.maximum(hb + b_ref[...], 0.0)      # conv bias + ReLU
        acc_ref[b, :] += jnp.sum(hb, axis=-1)       # pooled sum over spatial

    @pl.when(s == pl.num_programs(1) - 1)
    def _():
        o_ref[...] = (acc_ref[...] * inv_hw).astype(o_ref.dtype)   # mean, bf16


def encoder_forward(x_nchw, w_conv, b_conv):
    B, C, H, W = x_nchw.shape
    HW = H * W
    F = w_conv.shape[0]

    x = x_nchw.reshape(B, C, HW)                    # free on NCHW (no transpose)

    ts = _pick_tile(HW, target=2048)                # spatial (reduction) tile
    tf = _pick_tile(F, target=512, prefer_split=True)
    nf, ns = F // tf, HW // ts

    return pl.pallas_call(
        functools.partial(encoder_kernel, inv_hw=1.0 / HW),
        out_shape=jax.ShapeDtypeStruct((B, F), jnp.bfloat16),
        grid=(nf, ns),
        in_specs=[
            pl.BlockSpec((B, C, ts), lambda f, s: (0, 0, s)),
            pl.BlockSpec((tf, C), lambda f, s: (f, 0)),
            pl.BlockSpec((tf, 1), lambda f, s: (f, 0)),
        ],
        out_specs=pl.BlockSpec((B, tf), lambda f, s: (0, f)),
        scratch_shapes=[pltpu.VMEM((B, tf), jnp.float32)],
        compiler_params=pltpu.CompilerParams(
            dimension_semantics=("parallel", "arbitrary"),
            vmem_limit_bytes=_vmem_limit_bytes()),
    )(x, w_conv, b_conv)


# ---------------------------------------------------------------------------
# Projection head, kernel 1: Linear(F -> D) + BatchNorm1d (training-mode
# batch stats) + ReLU.  Grid: (D tiles [parallel]) only -- K is collapsed,
# feats stays resident, one full-K dot per step.  The Linear-1 bias is
# dropped: a per-feature constant added right before BatchNorm is exactly
# cancelled by the mean subtraction.
# ---------------------------------------------------------------------------
def proj1_kernel(x_ref, w1_ref, g_ref, beta_ref, hn_ref, *, eps):
    # x_ref: [B, F] bf16 (resident)  w1_ref: [F, td] bf16
    # g_ref/beta_ref: [1, td] f32    hn_ref: [B, td] bf16
    h = jnp.dot(x_ref[...], w1_ref[...], preferred_element_type=jnp.float32)
    mean = jnp.mean(h, axis=0, keepdims=True)       # two-pass BN stats (stable)
    ctr = h - mean
    var = jnp.mean(ctr * ctr, axis=0, keepdims=True)
    hn = ctr * jax.lax.rsqrt(var + eps)
    hn = hn * g_ref[...] + beta_ref[...]
    hn_ref[...] = jnp.maximum(hn, 0.0).astype(hn_ref.dtype)       # ReLU, bf16


# ---------------------------------------------------------------------------
# Projection head, kernel 2: Linear(D -> D).  Grid: (N tiles [parallel]);
# hn resident, w2 streamed in [D, tn] tiles, one full-K dot per step.
# ---------------------------------------------------------------------------
def proj2_kernel(hn_ref, w2_ref, b2_ref, o_ref):
    # hn_ref: [B, D] bf16 (resident)  w2_ref: [D, tn] bf16  b2_ref: [1, tn] f32
    o_ref[...] = (jnp.dot(hn_ref[...], w2_ref[...],
                          preferred_element_type=jnp.float32)
                  + b2_ref[...]).astype(o_ref.dtype)


def projection_head_forward(feats, params):
    B, F = feats.shape
    D = params["w1"].shape[1]
    limit = _vmem_limit_bytes()

    td = _head_tile(F, D, limit)
    nd = D // td

    hn = pl.pallas_call(
        functools.partial(proj1_kernel, eps=1e-5),
        out_shape=jax.ShapeDtypeStruct((B, D), jnp.bfloat16),
        grid=(nd,),
        in_specs=[
            pl.BlockSpec((B, F), lambda d: (0, 0)),        # resident activations
            pl.BlockSpec((F, td), lambda d: (0, d)),        # streamed weights
            pl.BlockSpec((1, td), lambda d: (0, d)),
            pl.BlockSpec((1, td), lambda d: (0, d)),
        ],
        out_specs=pl.BlockSpec((B, td), lambda d: (0, d)),
        compiler_params=pltpu.CompilerParams(
            dimension_semantics=("parallel",),
            vmem_limit_bytes=limit),
    )(feats, params["w1"], params["gamma"], params["beta"])

    tn = _head_tile(D, D, limit)
    nn = D // tn

    out = pl.pallas_call(
        proj2_kernel,
        out_shape=jax.ShapeDtypeStruct((B, D), jnp.float32),
        grid=(nn,),
        in_specs=[
            pl.BlockSpec((B, D), lambda n: (0, 0)),        # resident activations
            pl.BlockSpec((D, tn), lambda n: (0, n)),        # streamed weights
            pl.BlockSpec((1, tn), lambda n: (0, n)),
        ],
        out_specs=pl.BlockSpec((B, tn), lambda n: (0, n)),
        compiler_params=pltpu.CompilerParams(
            dimension_semantics=("parallel",),
            vmem_limit_bytes=limit),
    )(hn, params["w2"], params["b2"])
    return out


# ------------------------------- Full forward --------------------------------
def tico_forward(x_nchw, params):
    feats = encoder_forward(x_nchw, params["w_conv"], params["b_conv"])
    # encoder(x).flatten(start_dim=1): feats is already [B, F] -> no-op.
    return projection_head_forward(feats, params)


def init_params(key, c_in, in_feats, out_dim):
    ks = jax.random.split(key, 5)
    return {
        # 1x1 conv weight in PyTorch layout [out_channels, in_channels].
        "w_conv": 0.1 * jax.random.normal(ks[0], (in_feats, c_in), jnp.float32),
        "b_conv": 0.01 * jax.random.normal(ks[4], (in_feats, 1), jnp.float32),
        # Linear weights pre-transposed (y = x @ W), stored bf16 (MXU-native,
        # halves HBM/VMEM bytes for the dominant [D, D] weight).
        # NOTE: Linear-1 bias is omitted on purpose: a per-feature constant
        # added right before BatchNorm cancels exactly under mean subtraction.
        "w1": (0.05 * jax.random.normal(ks[1], (in_feats, out_dim))
               ).astype(jnp.bfloat16),
        # BatchNorm1d affine params (PyTorch defaults: gamma=1, beta=0).
        "gamma": jnp.ones((1, out_dim), jnp.float32),
        "beta": jnp.zeros((1, out_dim), jnp.float32),
        "w2": (0.05 * jax.random.normal(ks[2], (out_dim, out_dim))
               ).astype(jnp.bfloat16),
        "b2": 0.01 * jax.random.normal(ks[3], (1, out_dim), jnp.float32),
    }


def tico_reference(x_nchw, params, eps=1e-5):
    # Pure-JAX reference with the same precision choices (bf16 MXU operands).
    B, C, H, W = x_nchw.shape
    x = x_nchw.reshape(B, C, H * W)
    h = jnp.einsum("fc,bct->bft", params["w_conv"], x,
                   preferred_element_type=jnp.float32)
    h = jnp.maximum(h + params["b_conv"][None, :, :], 0.0)
    feats = jnp.mean(h, axis=-1).astype(jnp.bfloat16)             # [B, F]
    h1 = jnp.dot(feats, params["w1"], preferred_element_type=jnp.float32)
    mean = jnp.mean(h1, axis=0, keepdims=True)
    var = jnp.mean((h1 - mean) ** 2, axis=0, keepdims=True)
    hn = (h1 - mean) * jax.lax.rsqrt(var + eps)
    hn = jnp.maximum(hn * params["gamma"] + params["beta"], 0.0
                     ).astype(jnp.bfloat16)
    return jnp.dot(hn, params["w2"],
                   preferred_element_type=jnp.float32) + params["b2"]


if __name__ == "__main__":
    B, C, H, W = 8, 4, 16, 16
    IN_FEATS, OUT_DIM = 256, 256   # lane-dense small stand-ins (prod out_dim=4096)

    key = jax.random.PRNGKey(0)
    kx, kp = jax.random.split(key)
    x = jax.random.normal(kx, (B, C, H, W), jnp.float32)
    params = init_params(kp, C, IN_FEATS, OUT_DIM)

    out = jax.block_until_ready(tico_forward(x, params))
    assert out.shape == (B, OUT_DIM) and out.dtype == jnp.float32
    assert bool(jnp.all(jnp.isfinite(out)))

    ref = jax.block_until_ready(tico_reference(x, params))
    assert bool(jnp.allclose(out, ref, rtol=3e-2, atol=3e-2))

    print("KERNEL_OK")
</pallas_src>

<mosaic_0001>
module attributes {stable_mosaic.version = 11 : i64} {
  func.func @encoder_kernel(%arg0: i32, %arg1: i32, %arg2: memref<8x4x256xf32, #tpu.memory_space<vmem>>, %arg3: memref<128x4xf32, #tpu.memory_space<vmem>>, %arg4: memref<128x1xf32, #tpu.memory_space<vmem>>, %arg5: memref<8x128xbf16, #tpu.memory_space<vmem>>, %arg6: memref<8x128xf32, #tpu.memory_space<vmem>>) attributes {dimension_semantics = [#tpu.dimension_semantics<parallel>, #tpu.dimension_semantics<arbitrary>], iteration_bounds = array<i64: 2, 1>, scalar_prefetch = 0 : i64, scratch_operands = 1 : i64, tpu.core_type = #tpu.core_type<tc>, window_params = [{transform_indices = @transform_0, window_bounds = array<i64: 8, 4, 256>}, {transform_indices = @transform_1, window_bounds = array<i64: 128, 4>}, {transform_indices = @transform_2, window_bounds = array<i64: 128, 1>}, {transform_indices = @transform_3, window_bounds = array<i64: 8, 128>}]} {
    %c0_i32 = arith.constant 0 : i32
    %0 = arith.cmpi eq, %arg1, %c0_i32 : i32
    %1 = arith.extui %0 : i1 to i32
    %c0_i32_0 = arith.constant 0 : i32
    %2 = arith.cmpi ne, %1, %c0_i32_0 : i32
    scf.if %2 {
      %cst_106 = arith.constant 0.000000e+00 : f32
      %134 = vector.broadcast %cst_106 : f32 to vector<8x128xf32>
      %c0_107 = arith.constant 0 : index
      %c0_108 = arith.constant 0 : index
      %135 = vector.load %arg6[%c0_107, %c0_108] : memref<8x128xf32, #tpu.memory_space<vmem>>, vector<8x128xf32>
      tpu.vector_store %arg6[%c0_107, %c0_108], %134 {strides = array<i32>} : memref<8x128xf32, #tpu.memory_space<vmem>>, vector<8x128xf32>,
    } else {
    }
    %c0 = arith.constant 0 : index
    %c0_1 = arith.constant 0 : index
    %3 = vector.load %arg3[%c0, %c0_1] : memref<128x4xf32, #tpu.memory_space<vmem>>, vector<128x4xf32>
    %c0_2 = arith.constant 0 : index
    %c0_3 = arith.constant 0 : index
    %c0_4 = arith.constant 0 : index
    %4 = vector.load %arg2[%c0_2, %c0_3, %c0_4] : memref<8x4x256xf32, #tpu.memory_space<vmem>>, vector<1x4x256xf32>
    %5 = vector.shape_cast %4 : vector<1x4x256xf32> to vector<4x256xf32>
    %cst = arith.constant dense<0.000000e+00> : vector<128x256xf32>
    %6 = tpu.matmul %3, %5, %cst {dimension_numbers = #tpu.dot_dimension_numbers<[1], [0], [0], [1], [0, 0, 1, 1], [], []>} : vector<128x4xf32>, vector<4x256xf32>, vector<128x256xf32> -> vector<128x256xf32>
    %c0_5 = arith.constant 0 : index
    %c0_6 = arith.constant 0 : index
    %7 = vector.load %arg4[%c0_5, %c0_6] : memref<128x1xf32, #tpu.memory_space<vmem>>, vector<128x1xf32>
    %8 = vector.broadcast %7 : vector<128x1xf32> to vector<128x256xf32>
    %9 = arith.addf %6, %8 : vector<128x256xf32>
    %cst_7 = arith.constant 0.000000e+00 : f32
    %10 = vector.broadcast %cst_7 : f32 to vector<128x256xf32>
    %11 = arith.maximumf %9, %10 : vector<128x256xf32>
    %c0_8 = arith.constant 0 : index
    %c0_9 = arith.constant 0 : index
    %12 = vector.load %arg6[%c0_8, %c0_9] : memref<8x128xf32, #tpu.memory_space<vmem>>, vector<1x128xf32>
    %13 = vector.shape_cast %12 : vector<1x128xf32> to vector<128xf32>
    %cst_10 = arith.constant dense<0.000000e+00> : vector<128xf32>
    %14 = vector.multi_reduction <add>, %11, %cst_10 [1] : vector<128x256xf32> to vector<128xf32>
    %15 = arith.addf %13, %14 : vector<128xf32>
    %c0_11 = arith.constant 0 : index
    %c0_12 = arith.constant 0 : index
    %16 = vector.load %arg6[%c0_11, %c0_12] : memref<8x128xf32, #tpu.memory_space<vmem>>, vector<1x128xf32>
    %17 = vector.shape_cast %16 : vector<1x128xf32> to vector<128xf32>
    %18 = vector.shape_cast %15 : vector<128xf32> to vector<1x128xf32>
    tpu.vector_store %arg6[%c0_11, %c0_12], %18 {strides = array<i32>} : memref<8x128xf32, #tpu.memory_space<vmem>>, vector<1x128xf32>,
    %c0_13 = arith.constant 0 : index
    %c0_14 = arith.constant 0 : index
    %19 = vector.load %arg3[%c0_13, %c0_14] : memref<128x4xf32, #tpu.memory_space<vmem>>, vector<128x4xf32>
    %c1 = arith.constant 1 : index
    %c0_15 = arith.constant 0 : index
    %c0_16 = arith.constant 0 : index
    %20 = vector.load %arg2[%c1, %c0_15, %c0_16] : memref<8x4x256xf32, #tpu.memory_space<vmem>>, vector<1x4x256xf32>
    %21 = vector.shape_cast %20 : vector<1x4x256xf32> to vector<4x256xf32>
    %cst_17 = arith.constant dense<0.000000e+00> : vector<128x256xf32>
    %22 = tpu.matmul %19, %21, %cst_17 {dimension_numbers = #tpu.dot_dimension_numbers<[1], [0], [0], [1], [0, 0, 1, 1], [], []>} : vector<128x4xf32>, vector<4x256xf32>, vector<128x256xf32> -> vector<128x256xf32>
    %c0_18 = arith.constant 0 : index
    %c0_19 = arith.constant 0 : index
    %23 = vector.load %arg4[%c0_18, %c0_19] : memref<128x1xf32, #tpu.memory_space<vmem>>, vector<128x1xf32>
    %24 = vector.broadcast %23 : vector<128x1xf32> to vector<128x256xf32>
    %25 = arith.addf %22, %24 : vector<128x256xf32>
    %cst_20 = arith.constant 0.000000e+00 : f32
    %26 = vector.broadcast %cst_20 : f32 to vector<128x256xf32>
    %27 = arith.maximumf %25, %26 : vector<128x256xf32>
    %c1_21 = arith.constant 1 : index
    %c0_22 = arith.constant 0 : index
    %28 = vector.load %arg6[%c1_21, %c0_22] : memref<8x128xf32, #tpu.memory_space<vmem>>, vector<1x128xf32>
    %29 = vector.shape_cast %28 : vector<1x128xf32> to vector<128xf32>
    %cst_23 = arith.constant dense<0.000000e+00> : vector<128xf32>
    %30 = vector.multi_reduction <add>, %27, %cst_23 [1] : vector<128x256xf32> to vector<128xf32>
    %31 = arith.addf %29, %30 : vector<128xf32>
    %c1_24 = arith.constant 1 : index
    %c0_25 = arith.constant 0 : index
    %32 = vector.load %arg6[%c1_24, %c0_25] : memref<8x128xf32, #tpu.memory_space<vmem>>, vector<1x128xf32>
    %33 = vector.shape_cast %32 : vector<1x128xf32> to vector<128xf32>
    %34 = vector.shape_cast %31 : vector<128xf32> to vector<1x128xf32>
    tpu.vector_store %arg6[%c1_24, %c0_25], %34 {strides = array<i32>} : memref<8x128xf32, #tpu.memory_space<vmem>>, vector<1x128xf32>,
    %c0_26 = arith.constant 0 : index
    %c0_27 = arith.constant 0 : index
    %35 = vector.load %arg3[%c0_26, %c0_27] : memref<128x4xf32, #tpu.memory_space<vmem>>, vector<128x4xf32>
    %c2 = arith.constant 2 : index
    %c0_28 = arith.constant 0 : index
    %c0_29 = arith.constant 0 : index
    %36 = vector.load %arg2[%c2, %c0_28, %c0_29] : memref<8x4x256xf32, #tpu.memory_space<vmem>>, vector<1x4x256xf32>
    %37 = vector.shape_cast %36 : vector<1x4x256xf32> to vector<4x256xf32>
    %cst_30 = arith.constant dense<0.000000e+00> : vector<128x256xf32>
    %38 = tpu.matmul %35, %37, %cst_30 {dimension_numbers = #tpu.dot_dimension_numbers<[1], [0], [0], [1], [0, 0, 1, 1], [], []>} : vector<128x4xf32>, vector<4x256xf32>, vector<128x256xf32> -> vector<128x256xf32>
    %c0_31 = arith.constant 0 : index
    %c0_32 = arith.constant 0 : index
    %39 = vector.load %arg4[%c0_31, %c0_32] : memref<128x1xf32, #tpu.memory_space<vmem>>, vector<128x1xf32>
    %40 = vector.broadcast %39 : vector<128x1xf32> to vector<128x256xf32>
    %41 = arith.addf %38, %40 : vector<128x256xf32>
    %cst_33 = arith.constant 0.000000e+00 : f32
    %42 = vector.broadcast %cst_33 : f32 to vector<128x256xf32>
    %43 = arith.maximumf %41, %42 : vector<128x256xf32>
    %c2_34 = arith.constant 2 : index
    %c0_35 = arith.constant 0 : index
    %44 = vector.load %arg6[%c2_34, %c0_35] : memref<8x128xf32, #tpu.memory_space<vmem>>, vector<1x128xf32>
    %45 = vector.shape_cast %44 : vector<1x128xf32> to vector<128xf32>
    %cst_36 = arith.constant dense<0.000000e+00> : vector<128xf32>
    %46 = vector.multi_reduction <add>, %43, %cst_36 [1] : vector<128x256xf32> to vector<128xf32>
    %47 = arith.addf %45, %46 : vector<128xf32>
    %c2_37 = arith.constant 2 : index
    %c0_38 = arith.constant 0 : index
    %48 = vector.load %arg6[%c2_37, %c0_38] : memref<8x128xf32, #tpu.memory_space<vmem>>, vector<1x128xf32>
    %49 = vector.shape_cast %48 : vector<1x128xf32> to vector<128xf32>
    %50 = vector.shape_cast %47 : vector<128xf32> to vector<1x128xf32>
    tpu.vector_store %arg6[%c2_37, %c0_38], %50 {strides = array<i32>} : memref<8x128xf32, #tpu.memory_space<vmem>>, vector<1x128xf32>,
    %c0_39 = arith.constant 0 : index
    %c0_40 = arith.constant 0 : index
    %51 = vector.load %arg3[%c0_39, %c0_40] : memref<128x4xf32, #tpu.memory_space<vmem>>, vector<128x4xf32>
    %c3 = arith.constant 3 : index
    %c0_41 = arith.constant 0 : index
    %c0_42 = arith.constant 0 : index
    %52 = vector.load %arg2[%c3, %c0_41, %c0_42] : memref<8x4x256xf32, #tpu.memory_space<vmem>>, vector<1x4x256xf32>
    %53 = vector.shape_cast %52 : vector<1x4x256xf32> to vector<4x256xf32>
    %cst_43 = arith.constant dense<0.000000e+00> : vector<128x256xf32>
    %54 = tpu.matmul %51, %53, %cst_43 {dimension_numbers = #tpu.dot_dimension_numbers<[1], [0], [0], [1], [0, 0, 1, 1], [], []>} : vector<128x4xf32>, vector<4x256xf32>, vector<128x256xf32> -> vector<128x256xf32>
    %c0_44 = arith.constant 0 : index
    %c0_45 = arith.constant 0 : index
    %55 = vector.load %arg4[%c0_44, %c0_45] : memref<128x1xf32, #tpu.memory_space<vmem>>, vector<128x1xf32>
    %56 = vector.broadcast %55 : vector<128x1xf32> to vector<128x256xf32>
    %57 = arith.addf %54, %56 : vector<128x256xf32>
    %cst_46 = arith.constant 0.000000e+00 : f32
    %58 = vector.broadcast %cst_46 : f32 to vector<128x256xf32>
    %59 = arith.maximumf %57, %58 : vector<128x256xf32>
    %c3_47 = arith.constant 3 : index
    %c0_48 = arith.constant 0 : index
    %60 = vector.load %arg6[%c3_47, %c0_48] : memref<8x128xf32, #tpu.memory_space<vmem>>, vector<1x128xf32>
    %61 = vector.shape_cast %60 : vector<1x128xf32> to vector<128xf32>
    %cst_49 = arith.constant dense<0.000000e+00> : vector<128xf32>
    %62 = vector.multi_reduction <add>, %59, %cst_49 [1] : vector<128x256xf32> to vector<128xf32>
    %63 = arith.addf %61, %62 : vector<128xf32>
    %c3_50 = arith.constant 3 : index
    %c0_51 = arith.constant 0 : index
    %64 = vector.load %arg6[%c3_50, %c0_51] : memref<8x128xf32, #tpu.memory_space<vmem>>, vector<1x128xf32>
    %65 = vector.shape_cast %64 : vector<1x128xf32> to vector<128xf32>
    %66 = vector.shape_cast %63 : vector<128xf32> to vector<1x128xf32>
    tpu.vector_store %arg6[%c3_50, %c0_51], %66 {strides = array<i32>} : memref<8x128xf32, #tpu.memory_space<vmem>>, vector<1x128xf32>,
    %c0_52 = arith.constant 0 : index
    %c0_53 = arith.constant 0 : index
    %67 = vector.load %arg3[%c0_52, %c0_53] : memref<128x4xf32, #tpu.memory_space<vmem>>, vector<128x4xf32>
    %c4 = arith.constant 4 : index
    %c0_54 = arith.constant 0 : index
    %c0_55 = arith.constant 0 : index
    %68 = vector.load %arg2[%c4, %c0_54, %c0_55] : memref<8x4x256xf32, #tpu.memory_space<vmem>>, vector<1x4x256xf32>
    %69 = vector.shape_cast %68 : vector<1x4x256xf32> to vector<4x256xf32>
    %cst_56 = arith.constant dense<0.000000e+00> : vector<128x256xf32>
    %70 = tpu.matmul %67, %69, %cst_56 {dimension_numbers = #tpu.dot_dimension_numbers<[1], [0], [0], [1], [0, 0, 1, 1], [], []>} : vector<128x4xf32>, vector<4x256xf32>, vector<128x256xf32> -> vector<128x256xf32>
    %c0_57 = arith.constant 0 : index
    %c0_58 = arith.constant 0 : index
    %71 = vector.load %arg4[%c0_57, %c0_58] : memref<128x1xf32, #tpu.memory_space<vmem>>, vector<128x1xf32>
    %72 = vector.broadcast %71 : vector<128x1xf32> to vector<128x256xf32>
    %73 = arith.addf %70, %72 : vector<128x256xf32>
    %cst_59 = arith.constant 0.000000e+00 : f32
    %74 = vector.broadcast %cst_59 : f32 to vector<128x256xf32>
    %75 = arith.maximumf %73, %74 : vector<128x256xf32>
    %c4_60 = arith.constant 4 : index
    %c0_61 = arith.constant 0 : index
    %76 = vector.load %arg6[%c4_60, %c0_61] : memref<8x128xf32, #tpu.memory_space<vmem>>, vector<1x128xf32>
    %77 = vector.shape_cast %76 : vector<1x128xf32> to vector<128xf32>
    %cst_62 = arith.constant dense<0.000000e+00> : vector<128xf32>
    %78 = vector.multi_reduction <add>, %75, %cst_62 [1] : vector<128x256xf32> to vector<128xf32>
    %79 = arith.addf %77, %78 : vector<128xf32>
    %c4_63 = arith.constant 4 : index
    %c0_64 = arith.constant 0 : index
    %80 = vector.load %arg6[%c4_63, %c0_64] : memref<8x128xf32, #tpu.memory_space<vmem>>, vector<1x128xf32>
    %81 = vector.shape_cast %80 : vector<1x128xf32> to vector<128xf32>
    %82 = vector.shape_cast %79 : vector<128xf32> to vector<1x128xf32>
    tpu.vector_store %arg6[%c4_63, %c0_64], %82 {strides = array<i32>} : memref<8x128xf32, #tpu.memory_space<vmem>>, vector<1x128xf32>,
    %c0_65 = arith.constant 0 : index
    %c0_66 = arith.constant 0 : index
    %83 = vector.load %arg3[%c0_65, %c0_66] : memref<128x4xf32, #tpu.memory_space<vmem>>, vector<128x4xf32>
    %c5 = arith.constant 5 : index
    %c0_67 = arith.constant 0 : index
    %c0_68 = arith.constant 0 : index
    %84 = vector.load %arg2[%c5, %c0_67, %c0_68] : memref<8x4x256xf32, #tpu.memory_space<vmem>>, vector<1x4x256xf32>
    %85 = vector.shape_cast %84 : vector<1x4x256xf32> to vector<4x256xf32>
    %cst_69 = arith.constant dense<0.000000e+00> : vector<128x256xf32>
    %86 = tpu.matmul %83, %85, %cst_69 {dimension_numbers = #tpu.dot_dimension_numbers<[1], [0], [0], [1], [0, 0, 1, 1], [], []>} : vector<128x4xf32>, vector<4x256xf32>, vector<128x256xf32> -> vector<128x256xf32>
    %c0_70 = arith.constant 0 : index
    %c0_71 = arith.constant 0 : index
    %87 = vector.load %arg4[%c0_70, %c0_71] : memref<128x1xf32, #tpu.memory_space<vmem>>, vector<128x1xf32>
    %88 = vector.broadcast %87 : vector<128x1xf32> to vector<128x256xf32>
    %89 = arith.addf %86, %88 : vector<128x256xf32>
    %cst_72 = arith.constant 0.000000e+00 : f32
    %90 = vector.broadcast %cst_72 : f32 to vector<128x256xf32>
    %91 = arith.maximumf %89, %90 : vector<128x256xf32>
    %c5_73 = arith.constant 5 : index
    %c0_74 = arith.constant 0 : index
    %92 = vector.load %arg6[%c5_73, %c0_74] : memref<8x128xf32, #tpu.memory_space<vmem>>, vector<1x128xf32>
    %93 = vector.shape_cast %92 : vector<1x128xf32> to vector<128xf32>
    %cst_75 = arith.constant dense<0.000000e+00> : vector<128xf32>
    %94 = vector.multi_reduction <add>, %91, %cst_75 [1] : vector<128x256xf32> to vector<128xf32>
    %95 = arith.addf %93, %94 : vector<128xf32>
    %c5_76 = arith.constant 5 : index
    %c0_77 = arith.constant 0 : index
    %96 = vector.load %arg6[%c5_76, %c0_77] : memref<8x128xf32, #tpu.memory_space<vmem>>, vector<1x128xf32>
    %97 = vector.shape_cast %96 : vector<1x128xf32> to vector<128xf32>
    %98 = vector.shape_cast %95 : vector<128xf32> to vector<1x128xf32>
    tpu.vector_store %arg6[%c5_76, %c0_77], %98 {strides = array<i32>} : memref<8x128xf32, #tpu.memory_space<vmem>>, vector<1x128xf32>,
    %c0_78 = arith.constant 0 : index
    %c0_79 = arith.constant 0 : index
    %99 = vector.load %arg3[%c0_78, %c0_79] : memref<128x4xf32, #tpu.memory_space<vmem>>, vector<128x4xf32>
    %c6 = arith.constant 6 : index
    %c0_80 = arith.constant 0 : index
    %c0_81 = arith.constant 0 : index
    %100 = vector.load %arg2[%c6, %c0_80, %c0_81] : memref<8x4x256xf32, #tpu.memory_space<vmem>>, vector<1x4x256xf32>
    %101 = vector.shape_cast %100 : vector<1x4x256xf32> to vector<4x256xf32>
    %cst_82 = arith.constant dense<0.000000e+00> : vector<128x256xf32>
    %102 = tpu.matmul %99, %101, %cst_82 {dimension_numbers = #tpu.dot_dimension_numbers<[1], [0], [0], [1], [0, 0, 1, 1], [], []>} : vector<128x4xf32>, vector<4x256xf32>, vector<128x256xf32> -> vector<128x256xf32>
    %c0_83 = arith.constant 0 : index
    %c0_84 = arith.constant 0 : index
    %103 = vector.load %arg4[%c0_83, %c0_84] : memref<128x1xf32, #tpu.memory_space<vmem>>, vector<128x1xf32>
    %104 = vector.broadcast %103 : vector<128x1xf32> to vector<128x256xf32>
    %105 = arith.addf %102, %104 : vector<128x256xf32>
    %cst_85 = arith.constant 0.000000e+00 : f32
    %106 = vector.broadcast %cst_85 : f32 to vector<128x256xf32>
    %107 = arith.maximumf %105, %106 : vector<128x256xf32>
    %c6_86 = arith.constant 6 : index
    %c0_87 = arith.constant 0 : index
    %108 = vector.load %arg6[%c6_86, %c0_87] : memref<8x128xf32, #tpu.memory_space<vmem>>, vector<1x128xf32>
    %109 = vector.shape_cast %108 : vector<1x128xf32> to vector<128xf32>
    %cst_88 = arith.constant dense<0.000000e+00> : vector<128xf32>
    %110 = vector.multi_reduction <add>, %107, %cst_88 [1] : vector<128x256xf32> to vector<128xf32>
    %111 = arith.addf %109, %110 : vector<128xf32>
    %c6_89 = arith.constant 6 : index
    %c0_90 = arith.constant 0 : index
    %112 = vector.load %arg6[%c6_89, %c0_90] : memref<8x128xf32, #tpu.memory_space<vmem>>, vector<1x128xf32>
    %113 = vector.shape_cast %112 : vector<1x128xf32> to vector<128xf32>
    %114 = vector.shape_cast %111 : vector<128xf32> to vector<1x128xf32>
    tpu.vector_store %arg6[%c6_89, %c0_90], %114 {strides = array<i32>} : memref<8x128xf32, #tpu.memory_space<vmem>>, vector<1x128xf32>,
    %c0_91 = arith.constant 0 : index
    %c0_92 = arith.constant 0 : index
    %115 = vector.load %arg3[%c0_91, %c0_92] : memref<128x4xf32, #tpu.memory_space<vmem>>, vector<128x4xf32>
    %c7 = arith.constant 7 : index
    %c0_93 = arith.constant 0 : index
    %c0_94 = arith.constant 0 : index
    %116 = vector.load %arg2[%c7, %c0_93, %c0_94] : memref<8x4x256xf32, #tpu.memory_space<vmem>>, vector<1x4x256xf32>
    %117 = vector.shape_cast %116 : vector<1x4x256xf32> to vector<4x256xf32>
    %cst_95 = arith.constant dense<0.000000e+00> : vector<128x256xf32>
    %118 = tpu.matmul %115, %117, %cst_95 {dimension_numbers = #tpu.dot_dimension_numbers<[1], [0], [0], [1], [0, 0, 1, 1], [], []>} : vector<128x4xf32>, vector<4x256xf32>, vector<128x256xf32> -> vector<128x256xf32>
    %c0_96 = arith.constant 0 : index
    %c0_97 = arith.constant 0 : index
    %119 = vector.load %arg4[%c0_96, %c0_97] : memref<128x1xf32, #tpu.memory_space<vmem>>, vector<128x1xf32>
    %120 = vector.broadcast %119 : vector<128x1xf32> to vector<128x256xf32>
    %121 = arith.addf %118, %120 : vector<128x256xf32>
    %cst_98 = arith.constant 0.000000e+00 : f32
    %122 = vector.broadcast %cst_98 : f32 to vector<128x256xf32>
    %123 = arith.maximumf %121, %122 : vector<128x256xf32>
    %c7_99 = arith.constant 7 : index
    %c0_100 = arith.constant 0 : index
    %124 = vector.load %arg6[%c7_99, %c0_100] : memref<8x128xf32, #tpu.memory_space<vmem>>, vector<1x128xf32>
    %125 = vector.shape_cast %124 : vector<1x128xf32> to vector<128xf32>
    %cst_101 = arith.constant dense<0.000000e+00> : vector<128xf32>
    %126 = vector.multi_reduction <add>, %123, %cst_101 [1] : vector<128x256xf32> to vector<128xf32>
    %127 = arith.addf %125, %126 : vector<128xf32>
    %c7_102 = arith.constant 7 : index
    %c0_103 = arith.constant 0 : index
    %128 = vector.load %arg6[%c7_102, %c0_103] : memref<8x128xf32, #tpu.memory_space<vmem>>, vector<1x128xf32>
    %129 = vector.shape_cast %128 : vector<1x128xf32> to vector<128xf32>
    %130 = vector.shape_cast %127 : vector<128xf32> to vector<1x128xf32>
    tpu.vector_store %arg6[%c7_102, %c0_103], %130 {strides = array<i32>} : memref<8x128xf32, #tpu.memory_space<vmem>>, vector<1x128xf32>,
    %c0_i32_104 = arith.constant 0 : i32
    %131 = arith.cmpi eq, %arg1, %c0_i32_104 : i32
    %132 = arith.extui %131 : i1 to i32
    %c0_i32_105 = arith.constant 0 : i32
    %133 = arith.cmpi ne, %132, %c0_i32_105 : i32
    scf.if %133 {
      %c0_106 = arith.constant 0 : index
      %c0_107 = arith.constant 0 : index
      %134 = vector.load %arg6[%c0_106, %c0_107] : memref<8x128xf32, #tpu.memory_space<vmem>>, vector<8x128xf32>
      %cst_108 = arith.constant 3.906250e-03 : f32
      %135 = vector.broadcast %cst_108 : f32 to vector<8x128xf32>
      %136 = arith.mulf %134, %135 : vector<8x128xf32>
      %137 = arith.truncf %136 : vector<8x128xf32> to vector<8x128xbf16>
      %c0_109 = arith.constant 0 : index
      %c0_110 = arith.constant 0 : index
      %138 = vector.load %arg5[%c0_109, %c0_110] : memref<8x128xbf16, #tpu.memory_space<vmem>>, vector<8x128xbf16>
      tpu.vector_store %arg5[%c0_109, %c0_110], %137 {strides = array<i32>} : memref<8x128xbf16, #tpu.memory_space<vmem>>, vector<8x128xbf16>,
    } else {
    }
    return
  }
  func.func @transform_0(%arg0: i32, %arg1: i32) -> (i32, i32, i32) {
    %c0_i32 = arith.constant 0 : i32
    %c0_i32_0 = arith.constant 0 : i32
    %c0_i32_1 = arith.constant 0 : i32
    return %c0_i32, %c0_i32_0, %arg1 : i32, i32, i32
  }
  func.func @transform_1(%arg0: i32, %arg1: i32) -> (i32, i32) {
    %c0_i32 = arith.constant 0 : i32
    %c0_i32_0 = arith.constant 0 : i32
    return %arg0, %c0_i32 : i32, i32
  }
  func.func @transform_2(%arg0: i32, %arg1: i32) -> (i32, i32) {
    %c0_i32 = arith.constant 0 : i32
    %c0_i32_0 = arith.constant 0 : i32
    return %arg0, %c0_i32 : i32, i32
  }
  func.func @transform_3(%arg0: i32, %arg1: i32) -> (i32, i32) {
    %c0_i32 = arith.constant 0 : i32
    %c0_i32_0 = arith.constant 0 : i32
    return %c0_i32, %arg0 : i32, i32
  }
}

</mosaic_0001>

<llo_original>
// kernel: tpu_custom_call.1
$region0: #{tpu_custom_call.1}
  #allocation0 [shape = 'u32[]', space=smem, size = 0x4, offset = 0x4, fixed_abs, tag = 'smem constant byte address 0x4 - core index']
  #allocation1 [shape = 'u32[144,128]{1,0:T(1,128)}', space=vmem, size = 0x12000, scoped, tag = 'internal scratch']
  #allocation2 [shape = 'f32[8,128]{1,0:T(8,128)}', space=vmem, size = 0x1000, scoped, tag = 'scratch operand']
  %s0 = inlined_call_operand.vmem [shape: f32[8,4,256], index: 0, kind: input, shape index: {}]
  %s1 = inlined_call_operand.vmem [shape: f32[256,4], index: 1, kind: input, shape index: {}]
  %s2 = inlined_call_operand.vmem [shape: f32[256,1], index: 2, kind: input, shape index: {}]
  %s3 = inlined_call_operand.hbm [shape: bf16[8,256], index: 3, kind: output, shape index: {}]
  %s4 = sld [smem:[#allocation0]]
  $region53: #{tpu_custom_call.1} parent=0
    _
  %s6 = ssub.s32 1, %s4
  %s7 = scalar_select 0, %s6, %s4
  $region1: #{tpu_custom_call.1} parent=0
    #allocation3 [shape = 'u8[4096]{0}', space=vmem, size = 0x1000, scoped, tag = 'output window, operand 0']
    #allocation4 [shape = 's32[2]{0}', space=sflag, size = 0x8, scoped, tag = 'scoped memory for tpu_custom_call.1']
    %8 = vsyncpa [#allocation4], 0
    %s9 = scalar_lea.sflag [#allocation4], 1
    %10 = vsyncpa %s9, 0
    loop: start=0, step=1, limit=4
    $region2: #{tpu_custom_call.1} parent=1 // loop_pre_header
      _
    $region3: #{tpu_custom_call.1} parent=1 // loop_header
      %s12 = sphi 0, %s16
      %p13 = scmp.ge.s32.totalorder %s12, 4
      %s19 = sphi 0, %s31
      %s20 = sphi 0, %s27
      %s21 = sphi 0, %s19
      %s22 = sphi 0, %s20
      %s23 = sphi 0, %s21
      %s24 = sphi 0, %s22
      %s34 = sphi 0, %s36
      %s37 = sphi 0, %s34
      %s38 = sphi 0, %s37
      %s54 = sphi 0, %s38
      %s60 = sphi 0, %s62
      %s63 = sphi 0, %s60
      %s64 = sphi 0, %s63
      %s80 = sphi 0, %s64
      %s86 = sphi 0, %s88
      %s89 = sphi 0, %s86
      %s90 = sphi 0, %s89
      %s106 = sphi 0, %s90
      %s112 = sphi 0, %s114
      %s115 = sphi 0, %s112
      %s116 = sphi 0, %s115
      %s132 = sphi 0, %s116
    $region4: #{tpu_custom_call.1} parent=1 // loop_header_branch
      %15 = sbr.rel (%p13) target = $region8
    $region5: #{tpu_custom_call.1} parent=1 // loop_body
      %s17 = ssub.s32 %s12, 1
      %s18 = ssub.s32 %s12, 2
      %s25 = sadd.s32 1, %s20
      %p26 = scmp.ge.s32.totalorder %s25, 1
      %s27 = scalar_select %p26, 0, %s25
      %s28 = sadd.s32 1, %s19
      %s29 = scalar_select %p26, %s28, %s19
      %p30 = scmp.ge.s32.totalorder %s29, 2
      %s31 = scalar_select %p30, 0, %s29
      %s32 = ssub.s32 %s20, %s27
      %p33 = scmp.eq.s32.totalorder %s32, 0
      %s35 = sadd.s32 %s34, 1
      %s36 = scalar_select %p33, %s34, %s35
      %p39 = pneg %p33
      %p40 = scmp.eq.s32.totalorder %s12, 1
      %p41 = por %p39, %p40
      %p42 = scmp.ne.s32.totalorder %s34, %s37
      %p43 = scmp.eq.s32.totalorder %s12, 0
      %p44 = por %p42, %p43
      %p45 = scmp.ne.s32.totalorder %s34, %s37
      %p46 = scmp.eq.s32.totalorder %s17, 1
      %p47 = por %p45, %p46
      %p48 = scmp.ne.s32.totalorder %s37, %s38
      %p49 = scmp.eq.s32.totalorder %s17, 0
      %p50 = por %p48, %p49
      %p51 = scmp.ne.s32.totalorder %s37, %s38
      %p52 = scmp.eq.s32.totalorder %s18, 1
      %p53 = por %p51, %p52
      %p55 = scmp.ne.s32.totalorder %s38, %s54
      %p56 = scmp.eq.s32.totalorder %s18, 0
      %p57 = por %p55, %p56
      %s58 = ssub.s32 %s19, %s31
      %p59 = scmp.eq.s32.totalorder %s58, 0
      %s61 = sadd.s32 %s60, 1
      %s62 = scalar_select %p59, %s60, %s61
      %p65 = pneg %p59
      %p66 = scmp.eq.s32.totalorder %s12, 1
      %p67 = por %p65, %p66
      %p68 = scmp.ne.s32.totalorder %s60, %s63
      %p69 = scmp.eq.s32.totalorder %s12, 0
      %p70 = por %p68, %p69
      %p71 = scmp.ne.s32.totalorder %s60, %s63
      %p72 = scmp.eq.s32.totalorder %s17, 1
      %p73 = por %p71, %p72
      %p74 = scmp.ne.s32.totalorder %s63, %s64
      %p75 = scmp.eq.s32.totalorder %s17, 0
      %p76 = por %p74, %p75
      %p77 = scmp.ne.s32.totalorder %s63, %s64
      %p78 = scmp.eq.s32.totalorder %s18, 1
      %p79 = por %p77, %p78
      %p81 = scmp.ne.s32.totalorder %s64, %s80
      %p82 = scmp.eq.s32.totalorder %s18, 0
      %p83 = por %p81, %p82
      %s84 = ssub.s32 %s19, %s31
      %p85 = scmp.eq.s32.totalorder %s84, 0
      %s87 = sadd.s32 %s86, 1
      %s88 = scalar_select %p85, %s86, %s87
      %p91 = pneg %p85
      %p92 = scmp.eq.s32.totalorder %s12, 1
      %p93 = por %p91, %p92
      %p94 = scmp.ne.s32.totalorder %s86, %s89
      %p95 = scmp.eq.s32.totalorder %s12, 0
      %p96 = por %p94, %p95
      %p97 = scmp.ne.s32.totalorder %s86, %s89
      %p98 = scmp.eq.s32.totalorder %s17, 1
      %p99 = por %p97, %p98
      %p100 = scmp.ne.s32.totalorder %s89, %s90
      %p101 = scmp.eq.s32.totalorder %s17, 0
      %p102 = por %p100, %p101
      %p103 = scmp.ne.s32.totalorder %s89, %s90
      %p104 = scmp.eq.s32.totalorder %s18, 1
      %p105 = por %p103, %p104
      %p107 = scmp.ne.s32.totalorder %s90, %s106
      %p108 = scmp.eq.s32.totalorder %s18, 0
      %p109 = por %p107, %p108
      %s110 = ssub.s32 %s19, %s31
      %p111 = scmp.eq.s32.totalorder %s110, 0
      %s113 = sadd.s32 %s112, 1
      %s114 = scalar_select %p111, %s112, %s113
      %p117 = pneg %p111
      %p118 = scmp.eq.s32.totalorder %s12, 1
      %p119 = por %p117, %p118
      %p120 = scmp.ne.s32.totalorder %s112, %s115
      %p121 = scmp.eq.s32.totalorder %s12, 0
      %p122 = por %p120, %p121
      %p123 = scmp.ne.s32.totalorder %s112, %s115
      %p124 = scmp.eq.s32.totalorder %s17, 1
      %p125 = por %p123, %p124
      %p126 = scmp.ne.s32.totalorder %s115, %s116
      %p127 = scmp.eq.s32.totalorder %s17, 0
      %p128 = por %p126, %p127
      %p129 = scmp.ne.s32.totalorder %s115, %s116
      %p130 = scmp.eq.s32.totalorder %s18, 1
      %p131 = por %p129, %p130
      %p133 = scmp.ne.s32.totalorder %s116, %s132
      %p134 = scmp.eq.s32.totalorder %s18, 0
      %p135 = por %p133, %p134
      %p136 = scmp.le.s32.totalorder 1, %s12
      %p137 = scmp.lt.s32.totalorder %s12, 3
      %p138 = pnand %p136, %p137
      %p139 = pneg %p138
      // Predicated region
      $region9: #{tpu_custom_call.1} parent=5 // pred_check
        _
      $region10: #{tpu_custom_call.1} parent=5 // pred_check_branch
        %141 = sbr.rel (%p138) target = $region12
      $region11: #{tpu_custom_call.1} parent=5 // pred_region
        %s142 = ssub.s32 %s12, 1
        // Predicated region
        $region13: #{tpu_custom_call.1} parent=11 // pred_check
          %p143 = pneg %p50
        $region14: #{tpu_custom_call.1} parent=11 // pred_check_branch
          %145 = sbr.rel (%p143) target = $region16
        $region15: #{tpu_custom_call.1} parent=11 // pred_region
          %s146 = smul.u32 2, %s22
          %p147 = scmp.lt.s32.totalorder %s146, 1
          %s148 = scalar_select %p147, %s146, 1
          %s149 = smul.addr %s148, 4
          %s150 = scalar_lea.vmem %s0, %s149
          %s151 = smul.u32 2, %s22
        $region16: #{tpu_custom_call.1} parent=11 // pred_fallthru
          _
      $region12: #{tpu_custom_call.1} parent=5 // pred_fallthru
        _
      %p152 = scmp.lt.s32.totalorder %s12, 2
      // Predicated region
      $region17: #{tpu_custom_call.1} parent=5 // pred_check
        %p153 = pneg %p152
      $region18: #{tpu_custom_call.1} parent=5 // pred_check_branch
        %155 = sbr.rel (%p153) target = $region20
      $region19: #{tpu_custom_call.1} parent=5 // pred_region
        // Predicated region
        $region21: #{tpu_custom_call.1} parent=19 // pred_check
          %p156 = pneg %p70
        $region22: #{tpu_custom_call.1} parent=19 // pred_check_branch
          %158 = sbr.rel (%p156) target = $region24
        $region23: #{tpu_custom_call.1} parent=19 // pred_region
          %s159 = smul.u32 16, %s19
          %p160 = scmp.lt.s32.totalorder %s159, 31
          %s161 = scalar_select %p160, %s159, 31
          %s162 = smul.addr %s161, 8
          %s163 = scalar_lea.vmem %s1, %s162
          %s164 = smul.u32 16, %s19
        $region24: #{tpu_custom_call.1} parent=19 // pred_fallthru
          _
        // Predicated region
        $region25: #{tpu_custom_call.1} parent=19 // pred_check
          %p165 = pneg %p96
        $region26: #{tpu_custom_call.1} parent=19 // pred_check_branch
          %167 = sbr.rel (%p165) target = $region28
        $region27: #{tpu_custom_call.1} parent=19 // pred_region
          %s168 = smul.u32 16, %s19
          %p169 = scmp.lt.s32.totalorder %s168, 31
          %s170 = scalar_select %p169, %s168, 31
          %s171 = smul.addr %s170, 8
          %s172 = scalar_lea.vmem %s2, %s171
          %s173 = smul.u32 16, %s19
        $region28: #{tpu_custom_call.1} parent=19 // pred_fallthru
          _
      $region20: #{tpu_custom_call.1} parent=5 // pred_fallthru
        _
      %p174 = scmp.le.s32.totalorder 1, %s12
      %p175 = scmp.lt.s32.totalorder %s12, 3
      %p176 = pnand %p174, %p175
      %p177 = pneg %p176
      // Predicated region
      $region29: #{tpu_custom_call.1} parent=5 // pred_check
        _
      $region30: #{tpu_custom_call.1} parent=5 // pred_check_branch
        %179 = sbr.rel (%p176) target = $region32
      $region31: #{tpu_custom_call.1} parent=5 // pred_region
        %s180 = ssub.s32 %s12, 1
        %s181 = smul.u32 2, %s22
        %p182 = scmp.lt.s32.totalorder %s181, 1
        %s183 = scalar_select %p182, %s181, 1
        %s184 = smul.addr %s183, 4
        %s185 = scalar_lea.vmem %s0, %s184
        %p186 = pneg %p50
        %p187 = pneg %p47
        %s188 = smul.u32 16, %s21
        %p189 = scmp.lt.s32.totalorder %s188, 31
        %s190 = scalar_select %p189, %s188, 31
        %s191 = smul.addr %s190, 8
        %s192 = scalar_lea.vmem %s1, %s191
        %p193 = pneg %p76
        %p194 = pneg %p73
        %s195 = smul.u32 16, %s21
        %p196 = scmp.lt.s32.totalorder %s195, 31
        %s197 = scalar_select %p196, %s195, 31
        %s198 = smul.addr %s197, 8
        %s199 = scalar_lea.vmem %s2, %s198
        %p200 = pneg %p102
        %p201 = pneg %p99
        %p202 = pneg %p128
        %p203 = pneg %p125
        %s204 = sand.u32 %s115, 1
        %s205 = scalar_lea.sflag [#allocation4], %s204
        %s206 = sand.u32 %s115, 1
        %s207 = smul.addr %s206, 4
        %s208 = scalar_lea.vmem [#allocation3], %s207
        %s209 = smul.u32 2, %s22
        %p210 = scmp.lt.s32.totalorder %s209, 1
        %s211 = scalar_select %p210, %s209, 1
        %s212 = smul.addr %s211, 4
        %s213 = scalar_lea.vmem %s0, %s212
        %s214 = smul.u32 2, %s22
        %s215 = smul.u32 16, %s21
        %p216 = scmp.lt.s32.totalorder %s215, 31
        %s217 = scalar_select %p216, %s215, 31
        %s218 = smul.addr %s217, 8
        %s219 = scalar_lea.vmem %s1, %s218
        %s220 = smul.u32 16, %s21
        %s221 = smul.u32 16, %s21
        %p222 = scmp.lt.s32.totalorder %s221, 31
        %s223 = scalar_select %p222, %s221, 31
        %s224 = smul.addr %s223, 8
        %s225 = scalar_lea.vmem %s2, %s224
        %s226 = smul.u32 16, %s21
        %p227 = scmp.eq.s32.totalorder %s22, 0
        // Predicated region
        $region33: #{tpu_custom_call.1} parent=31 // pred_check
          %p228 = pneg %p227
        $region34: #{tpu_custom_call.1} parent=31 // pred_check_branch
          %230 = sbr.rel (%p228) target = $region36
        $region35: #{tpu_custom_call.1} parent=31 // pred_region
          %231 = vst [vmem:[#allocation2] sm:$0xff] 0.0
        $region36: #{tpu_custom_call.1} parent=31 // pred_fallthru
          _
        %v232 = vld [vmem:[%s219] sm:$0xff]
        %v233 = vld [vmem:[%s219 + $0x8] sm:$0xff]
        %v234 = vld [vmem:[%s219 + $0x10] sm:$0xff]
        %v235 = vld [vmem:[%s219 + $0x18] sm:$0xff]
        %v236 = vld [vmem:[%s219 + $0x20] sm:$0xff]
        %v237 = vld [vmem:[%s219 + $0x28] sm:$0xff]
        %v238 = vld [vmem:[%s219 + $0x30] sm:$0xff]
        %v239 = vld [vmem:[%s219 + $0x38] sm:$0xff]
        %v240 = vld [vmem:[%s219 + $0x40] sm:$0xff]
        %v241 = vld [vmem:[%s219 + $0x48] sm:$0xff]
        %v242 = vld [vmem:[%s219 + $0x50] sm:$0xff]
        %v243 = vld [vmem:[%s219 + $0x58] sm:$0xff]
        %v244 = vld [vmem:[%s219 + $0x60] sm:$0xff]
        %v245 = vld [vmem:[%s219 + $0x68] sm:$0xff]
        %v246 = vld [vmem:[%s219 + $0x70] sm:$0xff]
        %v247 = vld [vmem:[%s219 + $0x78] sm:$0xff]
        %v248 = vld [vmem:[%s213] sm:$0xff]
        %v249 = vld [vmem:[%s225] sm:$0xff]
        %v250 = vld [vmem:[%s225 + $0x8] sm:$0xff]
        %v251 = vld [vmem:[%s225 + $0x10] sm:$0xff]
        %v252 = vld [vmem:[%s225 + $0x18] sm:$0xff]
        %v253 = vld [vmem:[%s225 + $0x20] sm:$0xff]
        %v254 = vld [vmem:[%s225 + $0x28] sm:$0xff]
        %v255 = vld [vmem:[%s225 + $0x30] sm:$0xff]
        %v256 = vld [vmem:[%s225 + $0x38] sm:$0xff]
        %v257 = vld [vmem:[%s225 + $0x40] sm:$0xff]
        %v258 = vld [vmem:[%s225 + $0x48] sm:$0xff]
        %v259 = vld [vmem:[%s225 + $0x50] sm:$0xff]
        %v260 = vld [vmem:[%s225 + $0x58] sm:$0xff]
        %v261 = vld [vmem:[%s225 + $0x60] sm:$0xff]
        %v262 = vld [vmem:[%s225 + $0x68] sm:$0xff]
        %v263 = vld [vmem:[%s225 + $0x70] sm:$0xff]
        %v264 = vld [vmem:[%s225 + $0x78] sm:$0xff]
        %266 = vset.pattern.permute.xlu0 0
        %267 = vperm.xlu0 %266, %v249
        %v268 = vpop.permute.xlu0 %267
        %271 = vset.pattern.permute.xlu0 0
        %272 = vperm.xlu0 %271, %v250
        %v273 = vpop.permute.xlu0 %272
        %276 = vset.pattern.permute.xlu0 0
        %277 = vperm.xlu0 %276, %v251
        %v278 = vpop.permute.xlu0 %277
        %281 = vset.pattern.permute.xlu0 0
        %282 = vperm.xlu0 %281, %v252
        %v283 = vpop.permute.xlu0 %282
        %286 = vset.pattern.permute.xlu0 0
        %287 = vperm.xlu0 %286, %v253
        %v288 = vpop.permute.xlu0 %287
        %291 = vset.pattern.permute.xlu0 0
        %292 = vperm.xlu0 %291, %v254
        %v293 = vpop.permute.xlu0 %292
        %296 = vset.pattern.permute.xlu0 0
        %297 = vperm.xlu0 %296, %v255
        %v298 = vpop.permute.xlu0 %297
        %301 = vset.pattern.permute.xlu0 0
        %302 = vperm.xlu0 %301, %v256
        %v303 = vpop.permute.xlu0 %302
        %306 = vset.pattern.permute.xlu0 0
        %307 = vperm.xlu0 %306, %v257
        %v308 = vpop.permute.xlu0 %307
        %311 = vset.pattern.permute.xlu0 0
        %312 = vperm.xlu0 %311, %v258
        %v313 = vpop.permute.xlu0 %312
        %316 = vset.pattern.permute.xlu0 0
        %317 = vperm.xlu0 %316, %v259
        %v318 = vpop.permute.xlu0 %317
        %321 = vset.pattern.permute.xlu0 0
        %322 = vperm.xlu0 %321, %v260
        %v323 = vpop.permute.xlu0 %322
        %326 = vset.pattern.permute.xlu0 0
        %327 = vperm.xlu0 %326, %v261
        %v328 = vpop.permute.xlu0 %327
        %331 = vset.pattern.permute.xlu0 0
        %332 = vperm.xlu0 %331, %v262
        %v333 = vpop.permute.xlu0 %332
        %336 = vset.pattern.permute.xlu0 0
        %337 = vperm.xlu0 %336, %v263
        %v338 = vpop.permute.xlu0 %337
        %341 = vset.pattern.permute.xlu0 0
        %342 = vperm.xlu0 %341, %v264
        %v343 = vpop.permute.xlu0 %342
        %v346 = vcombine.high %v248, %v248
        %vm347 = vcmask 31744
        %v349 = vsel %vm347, %v232, 0
        %v352 = vsel %vm347, %v233, 0
        %v355 = vsel %vm347, %v234, 0
        %v358 = vsel %vm347, %v235, 0
        %v361 = vsel %vm347, %v236, 0
        %v364 = vsel %vm347, %v237, 0
        %v367 = vsel %vm347, %v238, 0
        %v370 = vsel %vm347, %v239, 0
        %v373 = vsel %vm347, %v240, 0
        %v376 = vsel %vm347, %v241, 0
        %v379 = vsel %vm347, %v242, 0
        %v382 = vsel %vm347, %v243, 0
        %v385 = vsel %vm347, %v244, 0
        %v388 = vsel %vm347, %v245, 0
        %v391 = vsel %vm347, %v246, 0
        %v394 = vsel %vm347, %v247, 0
        %vm396 = vcmask 1043456
        %v397 = vsel %vm396, %v248, 0
        %v399 = vsel %vm396, %v346, 0
        %401 = vmatprep.subr.mxu0 0.0
        %402 = vmatpush1.msra.mxu0 0.0
        %403 = vmatprep.subr.mxu0 0.0
        %404 = vmatpush1.msra.mxu0 0.0
        %405 = vmatprep.subr.mxu0 0.0
        %406 = vmatpush1.msra.mxu0 0.0
        %407 = vmatprep.subr.mxu0 0.0
        %408 = vmatpush1.msra.mxu0 0.0
        %409 = vmatprep.subr.mxu0 0.0
        %410 = vmatpush1.msra.mxu0 0.0
        %411 = vmatprep.subr.mxu0 0.0
        %412 = vmatpush1.msra.mxu0 0.0
        %413 = vmatprep.subr.mxu0 0.0
        %414 = vmatpush1.msra.mxu0 0.0
        %415 = vmatprep.subr.mxu0 0.0
        %416 = vmatpush1.msra.mxu0 0.0
        %417 = vmatprep.subr.mxu0 0.0
        %418 = vmatpush1.msra.mxu0 0.0
        %419 = vmatprep.subr.mxu0 0.0
        %420 = vmatpush1.msra.mxu0 0.0
        %421 = vmatprep.subr.mxu0 0.0
        %422 = vmatpush1.msra.mxu0 0.0
        %423 = vmatprep.subr.mxu0 0.0
        %424 = vmatpush1.msra.mxu0 0.0
        %425 = vmatprep.subr.mxu0 0.0
        %426 = vmatpush1.msra.mxu0 0.0
        %427 = vmatprep.subr.mxu0 0.0
        %428 = vmatpush1.msra.mxu0 0.0
        %429 = vmatprep.subr.mxu0 0.0
        %430 = vmatpush1.msra.mxu0 0.0
        %431 = vmatprep.subr.mxu0 %v399
        %432 = vmatpush1.msra.mxu0 %v397
        %433 = vmatprep.subr.mxu0 0.0
        %434 = vmatpush2.msra.mxu0 0.0
        %435 = vmatprep.subr.mxu0 0.0
        %436 = vmatpush2.msra.mxu0 0.0
        %437 = vmatprep.subr.mxu0 0.0
        %438 = vmatpush2.msra.mxu0 0.0
        %439 = vmatprep.subr.mxu0 0.0
        %440 = vmatpush2.msra.mxu0 0.0
        %441 = vmatprep.subr.mxu0 0.0
        %442 = vmatpush2.msra.mxu0 0.0
        %443 = vmatprep.subr.mxu0 0.0
        %444 = vmatpush2.msra.mxu0 0.0
        %445 = vmatprep.subr.mxu0 0.0
        %446 = vmatpush2.msra.mxu0 0.0
        %447 = vmatprep.subr.mxu0 0.0
        %448 = vmatpush2.msra.mxu0 0.0
        %449 = vmatprep.subr.mxu0 0.0
        %450 = vmatpush2.msra.mxu0 0.0
        %451 = vmatprep.subr.mxu0 0.0
        %452 = vmatpush2.msra.mxu0 0.0
        %453 = vmatprep.subr.mxu0 0.0
        %454 = vmatpush2.msra.mxu0 0.0
        %455 = vmatprep.subr.mxu0 0.0
        %456 = vmatpush2.msra.mxu0 0.0
        %457 = vmatprep.subr.mxu0 0.0
        %458 = vmatpush2.msra.mxu0 0.0
        %459 = vmatprep.subr.mxu0 0.0
        %460 = vmatpush2.msra.mxu0 0.0
        %461 = vmatprep.subr.mxu0 0.0
        %462 = vmatpush2.msra.mxu0 0.0
        %463 = vmatprep.subr.mxu0 0.0
        %464 = vmatpush2.msra.mxu0 0.0
        %465 = vmatprep.mubr.f32.mxu0 0.0
        %466 = vmatmul.mubr.f32.gmra.mxu0 %v349
        %v467 = vpop.f32.mrf.mxu0
        %v468 = vadd.f32 %v268, %v467
        %v469 = vpop.f32.mrf.mxu0
        %v470 = vadd.f32 %v268, %v469
        %471 = vmatprep.mubr.f32.mxu0 0.0
        %472 = vmatmul.mubr.f32.gmra.mxu0 %v352
        %v473 = vpop.f32.mrf.mxu0
        %v474 = vadd.f32 %v273, %v473
        %v475 = vpop.f32.mrf.mxu0
        %v476 = vadd.f32 %v273, %v475
        %477 = vmatprep.mubr.f32.mxu0 0.0
        %478 = vmatmul.mubr.f32.gmra.mxu0 %v355
        %v479 = vpop.f32.mrf.mxu0
        %v480 = vadd.f32 %v278, %v479
        %v481 = vpop.f32.mrf.mxu0
        %v482 = vadd.f32 %v278, %v481
        %483 = vmatprep.mubr.f32.mxu0 0.0
        %484 = vmatmul.mubr.f32.gmra.mxu0 %v358
        %v485 = vpop.f32.mrf.mxu0
        %v486 = vadd.f32 %v283, %v485
        %v487 = vpop.f32.mrf.mxu0
        %v488 = vadd.f32 %v283, %v487
        %489 = vmatprep.mubr.f32.mxu0 0.0
        %490 = vmatmul.mubr.f32.gmra.mxu0 %v361
        %v491 = vpop.f32.mrf.mxu0
        %v492 = vadd.f32 %v288, %v491
        %v493 = vpop.f32.mrf.mxu0
        %v494 = vadd.f32 %v288, %v493
        %495 = vmatprep.mubr.f32.mxu0 0.0
        %496 = vmatmul.mubr.f32.gmra.mxu0 %v364
        %v497 = vpop.f32.mrf.mxu0
        %v498 = vadd.f32 %v293, %v497
        %v499 = vpop.f32.mrf.mxu0
        %v500 = vadd.f32 %v293, %v499
        %501 = vmatprep.mubr.f32.mxu0 0.0
        %502 = vmatmul.mubr.f32.gmra.mxu0 %v367
        %v503 = vpop.f32.mrf.mxu0
        %v504 = vadd.f32 %v298, %v503
        %v505 = vpop.f32.mrf.mxu0
        %v506 = vadd.f32 %v298, %v505
        %507 = vmatprep.mubr.f32.mxu0 0.0
        %508 = vmatmul.mubr.f32.gmra.mxu0 %v370
        %v509 = vpop.f32.mrf.mxu0
        %v510 = vadd.f32 %v303, %v509
        %v511 = vpop.f32.mrf.mxu0
        %v512 = vadd.f32 %v303, %v511
        %513 = vmatprep.mubr.f32.mxu0 0.0
        %514 = vmatmul.mubr.f32.gmra.mxu0 %v373
        %v515 = vpop.f32.mrf.mxu0
        %v516 = vadd.f32 %v308, %v515
        %v517 = vpop.f32.mrf.mxu0
        %v518 = vadd.f32 %v308, %v517
        %519 = vmatprep.mubr.f32.mxu0 0.0
        %520 = vmatmul.mubr.f32.gmra.mxu0 %v376
        %v521 = vpop.f32.mrf.mxu0
        %v522 = vadd.f32 %v313, %v521
        %v523 = vpop.f32.mrf.mxu0
        %v524 = vadd.f32 %v313, %v523
        %525 = vmatprep.mubr.f32.mxu0 0.0
        %526 = vmatmul.mubr.f32.gmra.mxu0 %v379
        %v527 = vpop.f32.mrf.mxu0
        %v528 = vadd.f32 %v318, %v527
        %v529 = vpop.f32.mrf.mxu0
        %v530 = vadd.f32 %v318, %v529
        %531 = vmatprep.mubr.f32.mxu0 0.0
        %532 = vmatmul.mubr.f32.gmra.mxu0 %v382
        %v533 = vpop.f32.mrf.mxu0
        %v534 = vadd.f32 %v323, %v533
        %v535 = vpop.f32.mrf.mxu0
        %v536 = vadd.f32 %v323, %v535
        %537 = vmatprep.mubr.f32.mxu0 0.0
        %538 = vmatmul.mubr.f32.gmra.mxu0 %v385
        %v539 = vpop.f32.mrf.mxu0
        %v540 = vadd.f32 %v328, %v539
        %v541 = vpop.f32.mrf.mxu0
        %v542 = vadd.f32 %v328, %v541
        %543 = vmatprep.mubr.f32.mxu0 0.0
        %544 = vmatmul.mubr.f32.gmra.mxu0 %v388
        %v545 = vpop.f32.mrf.mxu0
        %v546 = vadd.f32 %v333, %v545
        %v547 = vpop.f32.mrf.mxu0
        %v548 = vadd.f32 %v333, %v547
        %549 = vmatprep.mubr.f32.mxu0 0.0
        %550 = vmatmul.mubr.f32.gmra.mxu0 %v391
        %v551 = vpop.f32.mrf.mxu0
        %v552 = vadd.f32 %v338, %v551
        %v553 = vpop.f32.mrf.mxu0
        %v554 = vadd.f32 %v338, %v553
        %555 = vmatprep.mubr.f32.mxu0 0.0
        %556 = vmatmul.mubr.f32.gmra.mxu0 %v394
        %v557 = vpop.f32.mrf.mxu0
        %v558 = vadd.f32 %v343, %v557
        %v559 = vpop.f32.mrf.mxu0
        %v560 = vadd.f32 %v343, %v559
        %561 = vdwg.mxu0
        %v562 = vmax.f32 %v468, 0.0
        %v563 = vmax.f32 %v470, 0.0
        %v564 = vmax.f32 %v474, 0.0
        %v565 = vmax.f32 %v476, 0.0
        %v566 = vmax.f32 %v480, 0.0
        %v567 = vmax.f32 %v482, 0.0
        %v568 = vmax.f32 %v486, 0.0
        %v569 = vmax.f32 %v488, 0.0
        %v570 = vmax.f32 %v492, 0.0
        %v571 = vmax.f32 %v494, 0.0
        %v572 = vmax.f32 %v498, 0.0
        %v573 = vmax.f32 %v500, 0.0
        %v574 = vmax.f32 %v504, 0.0
        %v575 = vmax.f32 %v506, 0.0
        %v576 = vmax.f32 %v510, 0.0
        %v577 = vmax.f32 %v512, 0.0
        %v578 = vmax.f32 %v516, 0.0
        %v579 = vmax.f32 %v518, 0.0
        %v580 = vmax.f32 %v522, 0.0
        %v581 = vmax.f32 %v524, 0.0
        %v582 = vmax.f32 %v528, 0.0
        %v583 = vmax.f32 %v530, 0.0
        %v584 = vmax.f32 %v534, 0.0
        %v585 = vmax.f32 %v536, 0.0
        %v586 = vmax.f32 %v540, 0.0
        %v587 = vmax.f32 %v542, 0.0
        %v588 = vmax.f32 %v546, 0.0
        %v589 = vmax.f32 %v548, 0.0
        %v590 = vmax.f32 %v552, 0.0
        %v591 = vmax.f32 %v554, 0.0
        %v592 = vmax.f32 %v558, 0.0
        %v593 = vmax.f32 %v560, 0.0
        %v594 = vld [vmem:[#allocation2] sm:$0x1]
        %v595 = vadd.f32 %v562, %v563
        %596 = vadd.xlane.f32.xlu0 %v595
        %v597 = vpop.xlane.xlu0 %596
        %v598 = vadd.f32 %v564, %v565
        %599 = vadd.xlane.f32.xlu0 %v598
        %v600 = vpop.xlane.xlu0 %599
        %v601 = vadd.f32 %v566, %v567
        %602 = vadd.xlane.f32.xlu0 %v601
        %v603 = vpop.xlane.xlu0 %602
        %v604 = vadd.f32 %v568, %v569
        %605 = vadd.xlane.f32.xlu0 %v604
        %v606 = vpop.xlane.xlu0 %605
        %v607 = vadd.f32 %v570, %v571
        %608 = vadd.xlane.f32.xlu0 %v607
        %v609 = vpop.xlane.xlu0 %608
        %v610 = vadd.f32 %v572, %v573
        %611 = vadd.xlane.f32.xlu0 %v610
        %v612 = vpop.xlane.xlu0 %611
        %v613 = vadd.f32 %v574, %v575
        %614 = vadd.xlane.f32.xlu0 %v613
        %v615 = vpop.xlane.xlu0 %614
        %v616 = vadd.f32 %v576, %v577
        %617 = vadd.xlane.f32.xlu0 %v616
        %v618 = vpop.xlane.xlu0 %617
        %v619 = vadd.f32 %v578, %v579
        %620 = vadd.xlane.f32.xlu0 %v619
        %v621 = vpop.xlane.xlu0 %620
        %v622 = vadd.f32 %v580, %v581
        %623 = vadd.xlane.f32.xlu0 %v622
        %v624 = vpop.xlane.xlu0 %623
        %v625 = vadd.f32 %v582, %v583
        %626 = vadd.xlane.f32.xlu0 %v625
        %v627 = vpop.xlane.xlu0 %626
        %v628 = vadd.f32 %v584, %v585
        %629 = vadd.xlane.f32.xlu0 %v628
        %v630 = vpop.xlane.xlu0 %629
        %v631 = vadd.f32 %v586, %v587
        %632 = vadd.xlane.f32.xlu0 %v631
        %v633 = vpop.xlane.xlu0 %632
        %v634 = vadd.f32 %v588, %v589
        %635 = vadd.xlane.f32.xlu0 %v634
        %v636 = vpop.xlane.xlu0 %635
        %v637 = vadd.f32 %v590, %v591
        %638 = vadd.xlane.f32.xlu0 %v637
        %v639 = vpop.xlane.xlu0 %638
        %v640 = vadd.f32 %v592, %v593
        %641 = vadd.xlane.f32.xlu0 %v640
        %v642 = vpop.xlane.xlu0 %641
        %v659 = vlaneseq
        %v660 = vand.u32 %v659, 127
        %v661 = vlaneseq
        %v662 = vshrl.u32 %v661, 7
        %v663 = vsub.s32 %v660, %v662
        %v664 = vrot.slane %v597, %v663
        %v665 = vadd.s32 %v660, 4294967288
        %v666 = vlaneseq
        %v667 = vshrl.u32 %v666, 7
        %v668 = vsub.s32 %v665, %v667
        %v669 = vrot.slane %v600, %v668
        %vm670 = vcmask 130112
        %v671 = vsel %vm670, %v669, %v664
        %v672 = vadd.s32 %v660, 4294967280
        %v673 = vlaneseq
        %v674 = vshrl.u32 %v673, 7
        %v675 = vsub.s32 %v672, %v674
        %v676 = vrot.slane %v603, %v675
        %vm677 = vcmask 195712
        %v678 = vsel %vm677, %v676, %v671
        %v679 = vadd.s32 %v660, 4294967272
        %v680 = vlaneseq
        %v681 = vshrl.u32 %v680, 7
        %v682 = vsub.s32 %v679, %v681
        %v683 = vrot.slane %v606, %v682
        %vm684 = vcmask 261312
        %v685 = vsel %vm684, %v683, %v678
        %v686 = vadd.s32 %v660, 4294967264
        %v687 = vlaneseq
        %v688 = vshrl.u32 %v687, 7
        %v689 = vsub.s32 %v686, %v688
        %v690 = vrot.slane %v609, %v689
        %vm691 = vcmask 326912
        %v692 = vsel %vm691, %v690, %v685
        %v693 = vadd.s32 %v660, 4294967256
        %v694 = vlaneseq
        %v695 = vshrl.u32 %v694, 7
        %v696 = vsub.s32 %v693, %v695
        %v697 = vrot.slane %v612, %v696
        %vm698 = vcmask 392512
        %v699 = vsel %vm698, %v697, %v692
        %v700 = vadd.s32 %v660, 4294967248
        %v701 = vlaneseq
        %v702 = vshrl.u32 %v701, 7
        %v703 = vsub.s32 %v700, %v702
        %v704 = vrot.slane %v615, %v703
        %vm705 = vcmask 458112
        %v706 = vsel %vm705, %v704, %v699
        %v707 = vadd.s32 %v660, 4294967240
        %v708 = vlaneseq
        %v709 = vshrl.u32 %v708, 7
        %v710 = vsub.s32 %v707, %v709
        %v711 = vrot.slane %v618, %v710
        %vm712 = vcmask 523712
        %v713 = vsel %vm712, %v711, %v706
        %v714 = vadd.s32 %v660, 4294967232
        %v715 = vlaneseq
        %v716 = vshrl.u32 %v715, 7
        %v717 = vsub.s32 %v714, %v716
        %v718 = vrot.slane %v621, %v717
        %vm719 = vcmask 589312
        %v720 = vsel %vm719, %v718, %v713
        %v721 = vadd.s32 %v660, 4294967224
        %v722 = vlaneseq
        %v723 = vshrl.u32 %v722, 7
        %v724 = vsub.s32 %v721, %v723
        %v725 = vrot.slane %v624, %v724
        %vm726 = vcmask 654912
        %v727 = vsel %vm726, %v725, %v720
        %v728 = vadd.s32 %v660, 4294967216
        %v729 = vlaneseq
        %v730 = vshrl.u32 %v729, 7
        %v731 = vsub.s32 %v728, %v730
        %v732 = vrot.slane %v627, %v731
        %vm733 = vcmask 720512
        %v734 = vsel %vm733, %v732, %v727
        %v735 = vadd.s32 %v660, 4294967208
        %v736 = vlaneseq
        %v737 = vshrl.u32 %v736, 7
        %v738 = vsub.s32 %v735, %v737
        %v739 = vrot.slane %v630, %v738
        %vm740 = vcmask 786112
        %v741 = vsel %vm740, %v739, %v734
        %v742 = vadd.s32 %v660, 4294967200
        %v743 = vlaneseq
        %v744 = vshrl.u32 %v743, 7
        %v745 = vsub.s32 %v742, %v744
        %v746 = vrot.slane %v633, %v745
        %vm747 = vcmask 851712
        %v748 = vsel %vm747, %v746, %v741
        %v749 = vadd.s32 %v660, 4294967192
        %v750 = vlaneseq
        %v751 = vshrl.u32 %v750, 7
        %v752 = vsub.s32 %v749, %v751
        %v753 = vrot.slane %v636, %v752
        %vm754 = vcmask 917312
        %v755 = vsel %vm754, %v753, %v748
        %v756 = vadd.s32 %v660, 4294967184
        %v757 = vlaneseq
        %v758 = vshrl.u32 %v757, 7
        %v759 = vsub.s32 %v756, %v758
        %v760 = vrot.slane %v639, %v759
        %vm761 = vcmask 982912
        %v762 = vsel %vm761, %v760, %v755
        %v763 = vadd.s32 %v660, 4294967176
        %v764 = vlaneseq
        %v765 = vshrl.u32 %v764, 7
        %v766 = vsub.s32 %v763, %v765
        %v767 = vrot.slane %v642, %v766
        %vm768 = vcmask 1048512
        %v769 = vsel %vm768, %v767, %v762
        %v771 = vadd.f32 %v594, %v769
        %772 = vst [vmem:[#allocation2] sm:$0x1] %v771
        %v773 = vld [vmem:[%s219] sm:$0xff]
        %v774 = vld [vmem:[%s219 + $0x8] sm:$0xff]
        %v775 = vld [vmem:[%s219 + $0x10] sm:$0xff]
        %v776 = vld [vmem:[%s219 + $0x18] sm:$0xff]
        %v777 = vld [vmem:[%s219 + $0x20] sm:$0xff]
        %v778 = vld [vmem:[%s219 + $0x28] sm:$0xff]
        %v779 = vld [vmem:[%s219 + $0x30] sm:$0xff]
        %v780 = vld [vmem:[%s219 + $0x38] sm:$0xff]
        %v781 = vld [vmem:[%s219 + $0x40] sm:$0xff]
        %v782 = vld [vmem:[%s219 + $0x48] sm:$0xff]
        %v783 = vld [vmem:[%s219 + $0x50] sm:$0xff]
        %v784 = vld [vmem:[%s219 + $0x58] sm:$0xff]
        %v785 = vld [vmem:[%s219 + $0x60] sm:$0xff]
        %v786 = vld [vmem:[%s219 + $0x68] sm:$0xff]
        %v787 = vld [vmem:[%s219 + $0x70] sm:$0xff]
        %v788 = vld [vmem:[%s219 + $0x78] sm:$0xff]
        %s789 = scalar_lea.vmem %s213, 8
        %v790 = vld [vmem:[%s789] sm:$0xff]
        %v791 = vld [vmem:[%s225] sm:$0xff]
        %v792 = vld [vmem:[%s225 + $0x8] sm:$0xff]
        %v793 = vld [vmem:[%s225 + $0x10] sm:$0xff]
        %v794 = vld [vmem:[%s225 + $0x18] sm:$0xff]
        %v795 = vld [vmem:[%s225 + $0x20] sm:$0xff]
        %v796 = vld [vmem:[%s225 + $0x28] sm:$0xff]
        %v797 = vld [vmem:[%s225 + $0x30] sm:$0xff]
        %v798 = vld [vmem:[%s225 + $0x38] sm:$0xff]
        %v799 = vld [vmem:[%s225 + $0x40] sm:$0xff]
        %v800 = vld [vmem:[%s225 + $0x48] sm:$0xff]
        %v801 = vld [vmem:[%s225 + $0x50] sm:$0xff]
        %v802 = vld [vmem:[%s225 + $0x58] sm:$0xff]
        %v803 = vld [vmem:[%s225 + $0x60] sm:$0xff]
        %v804 = vld [vmem:[%s225 + $0x68] sm:$0xff]
        %v805 = vld [vmem:[%s225 + $0x70] sm:$0xff]
        %v806 = vld [vmem:[%s225 + $0x78] sm:$0xff]
        %808 = vset.pattern.permute.xlu0 0
        %809 = vperm.xlu0 %808, %v791
        %v810 = vpop.permute.xlu0 %809
        %813 = vset.pattern.permute.xlu0 0
        %814 = vperm.xlu0 %813, %v792
        %v815 = vpop.permute.xlu0 %814
        %818 = vset.pattern.permute.xlu0 0
        %819 = vperm.xlu0 %818, %v793
        %v820 = vpop.permute.xlu0 %819
        %823 = vset.pattern.permute.xlu0 0
        %824 = vperm.xlu0 %823, %v794
        %v825 = vpop.permute.xlu0 %824
        %828 = vset.pattern.permute.xlu0 0
        %829 = vperm.xlu0 %828, %v795
        %v830 = vpop.permute.xlu0 %829
        %833 = vset.pattern.permute.xlu0 0
        %834 = vperm.xlu0 %833, %v796
        %v835 = vpop.permute.xlu0 %834
        %838 = vset.pattern.permute.xlu0 0
        %839 = vperm.xlu0 %838, %v797
        %v840 = vpop.permute.xlu0 %839
        %843 = vset.pattern.permute.xlu0 0
        %844 = vperm.xlu0 %843, %v798
        %v845 = vpop.permute.xlu0 %844
        %848 = vset.pattern.permute.xlu0 0
        %849 = vperm.xlu0 %848, %v799
        %v850 = vpop.permute.xlu0 %849
        %853 = vset.pattern.permute.xlu0 0
        %854 = vperm.xlu0 %853, %v800
        %v855 = vpop.permute.xlu0 %854
        %858 = vset.pattern.permute.xlu0 0
        %859 = vperm.xlu0 %858, %v801
        %v860 = vpop.permute.xlu0 %859
        %863 = vset.pattern.permute.xlu0 0
        %864 = vperm.xlu0 %863, %v802
        %v865 = vpop.permute.xlu0 %864
        %868 = vset.pattern.permute.xlu0 0
        %869 = vperm.xlu0 %868, %v803
        %v870 = vpop.permute.xlu0 %869
        %873 = vset.pattern.permute.xlu0 0
        %874 = vperm.xlu0 %873, %v804
        %v875 = vpop.permute.xlu0 %874
        %878 = vset.pattern.permute.xlu0 0
        %879 = vperm.xlu0 %878, %v805
        %v880 = vpop.permute.xlu0 %879
        %883 = vset.pattern.permute.xlu0 0
        %884 = vperm.xlu0 %883, %v806
        %v885 = vpop.permute.xlu0 %884
        %v888 = vcombine.high %v790, %v790
        %v890 = vsel %vm347, %v773, 0
        %v893 = vsel %vm347, %v774, 0
        %v896 = vsel %vm347, %v775, 0
        %v899 = vsel %vm347, %v776, 0
        %v902 = vsel %vm347, %v777, 0
        %v905 = vsel %vm347, %v778, 0
        %v908 = vsel %vm347, %v779, 0
        %v911 = vsel %vm347, %v780, 0
        %v914 = vsel %vm347, %v781, 0
        %v917 = vsel %vm347, %v782, 0
        %v920 = vsel %vm347, %v783, 0
        %v923 = vsel %vm347, %v784, 0
        %v926 = vsel %vm347, %v785, 0
        %v929 = vsel %vm347, %v786, 0
        %v932 = vsel %vm347, %v787, 0
        %v935 = vsel %vm347, %v788, 0
        %v937 = vsel %vm396, %v790, 0
        %v939 = vsel %vm396, %v888, 0
        %941 = vmatprep.subr.mxu0 0.0
        %942 = vmatpush1.msra.mxu0 0.0
        %943 = vmatprep.subr.mxu0 0.0
        %944 = vmatpush1.msra.mxu0 0.0
        %945 = vmatprep.subr.mxu0 0.0
        %946 = vmatpush1.msra.mxu0 0.0
        %947 = vmatprep.subr.mxu0 0.0
        %948 = vmatpush1.msra.mxu0 0.0
        %949 = vmatprep.subr.mxu0 0.0
        %950 = vmatpush1.msra.mxu0 0.0
        %951 = vmatprep.subr.mxu0 0.0
        %952 = vmatpush1.msra.mxu0 0.0
        %953 = vmatprep.subr.mxu0 0.0
        %954 = vmatpush1.msra.mxu0 0.0
        %955 = vmatprep.subr.mxu0 0.0
        %956 = vmatpush1.msra.mxu0 0.0
        %957 = vmatprep.subr.mxu0 0.0
        %958 = vmatpush1.msra.mxu0 0.0
        %959 = vmatprep.subr.mxu0 0.0
        %960 = vmatpush1.msra.mxu0 0.0
        %961 = vmatprep.subr.mxu0 0.0
        %962 = vmatpush1.msra.mxu0 0.0
        %963 = vmatprep.subr.mxu0 0.0
        %964 = vmatpush1.msra.mxu0 0.0
        %965 = vmatprep.subr.mxu0 0.0
        %966 = vmatpush1.msra.mxu0 0.0
        %967 = vmatprep.subr.mxu0 0.0
        %968 = vmatpush1.msra.mxu0 0.0
        %969 = vmatprep.subr.mxu0 0.0
        %970 = vmatpush1.msra.mxu0 0.0
        %971 = vmatprep.subr.mxu0 %v939
        %972 = vmatpush1.msra.mxu0 %v937
        %973 = vmatprep.subr.mxu0 0.0
        %974 = vmatpush2.msra.mxu0 0.0
        %975 = vmatprep.subr.mxu0 0.0
        %976 = vmatpush2.msra.mxu0 0.0
        %977 = vmatprep.subr.mxu0 0.0
        %978 = vmatpush2.msra.mxu0 0.0
        %979 = vmatprep.subr.mxu0 0.0
        %980 = vmatpush2.msra.mxu0 0.0
        %981 = vmatprep.subr.mxu0 0.0
        %982 = vmatpush2.msra.mxu0 0.0
        %983 = vmatprep.subr.mxu0 0.0
        %984 = vmatpush2.msra.mxu0 0.0
        %985 = vmatprep.subr.mxu0 0.0
        %986 = vmatpush2.msra.mxu0 0.0
        %987 = vmatprep.subr.mxu0 0.0
        %988 = vmatpush2.msra.mxu0 0.0
        %989 = vmatprep.subr.mxu0 0.0
        %990 = vmatpush2.msra.mxu0 0.0
        %991 = vmatprep.subr.mxu0 0.0
        %992 = vmatpush2.msra.mxu0 0.0
        %993 = vmatprep.subr.mxu0 0.0
        %994 = vmatpush2.msra.mxu0 0.0
        %995 = vmatprep.subr.mxu0 0.0
        %996 = vmatpush2.msra.mxu0 0.0
        %997 = vmatprep.subr.mxu0 0.0
        %998 = vmatpush2.msra.mxu0 0.0
        %999 = vmatprep.subr.mxu0 0.0
        %1000 = vmatpush2.msra.mxu0 0.0
        %1001 = vmatprep.subr.mxu0 0.0
        %1002 = vmatpush2.msra.mxu0 0.0
        %1003 = vmatprep.subr.mxu0 0.0
        %1004 = vmatpush2.msra.mxu0 0.0
        %1005 = vmatprep.mubr.f32.mxu0 0.0
        %1006 = vmatmul.mubr.f32.gmra.mxu0 %v890
        %v1007 = vpop.f32.mrf.mxu0
        %v1008 = vadd.f32 %v810, %v1007
        %v1009 = vpop.f32.mrf.mxu0
        %v1010 = vadd.f32 %v810, %v1009
        %1011 = vmatprep.mubr.f32.mxu0 0.0
        %1012 = vmatmul.mubr.f32.gmra.mxu0 %v893
        %v1013 = vpop.f32.mrf.mxu0
        %v1014 = vadd.f32 %v815, %v1013
        %v1015 = vpop.f32.mrf.mxu0
        %v1016 = vadd.f32 %v815, %v1015
        %1017 = vmatprep.mubr.f32.mxu0 0.0
        %1018 = vmatmul.mubr.f32.gmra.mxu0 %v896
        %v1019 = vpop.f32.mrf.mxu0
        %v1020 = vadd.f32 %v820, %v1019
        %v1021 = vpop.f32.mrf.mxu0
        %v1022 = vadd.f32 %v820, %v1021
        %1023 = vmatprep.mubr.f32.mxu0 0.0
        %1024 = vmatmul.mubr.f32.gmra.mxu0 %v899
        %v1025 = vpop.f32.mrf.mxu0
        %v1026 = vadd.f32 %v825, %v1025
        %v1027 = vpop.f32.mrf.mxu0
        %v1028 = vadd.f32 %v825, %v1027
        %1029 = vmatprep.mubr.f32.mxu0 0.0
        %1030 = vmatmul.mubr.f32.gmra.mxu0 %v902
        %v1031 = vpop.f32.mrf.mxu0
        %v1032 = vadd.f32 %v830, %v1031
        %v1033 = vpop.f32.mrf.mxu0
        %v1034 = vadd.f32 %v830, %v1033
        %1035 = vmatprep.mubr.f32.mxu0 0.0
        %1036 = vmatmul.mubr.f32.gmra.mxu0 %v905
        %v1037 = vpop.f32.mrf.mxu0
        %v1038 = vadd.f32 %v835, %v1037
        %v1039 = vpop.f32.mrf.mxu0
        %v1040 = vadd.f32 %v835, %v1039
        %1041 = vmatprep.mubr.f32.mxu0 0.0
        %1042 = vmatmul.mubr.f32.gmra.mxu0 %v908
        %v1043 = vpop.f32.mrf.mxu0
        %v1044 = vadd.f32 %v840, %v1043
        %v1045 = vpop.f32.mrf.mxu0
        %v1046 = vadd.f32 %v840, %v1045
        %1047 = vmatprep.mubr.f32.mxu0 0.0
        %1048 = vmatmul.mubr.f32.gmra.mxu0 %v911
        %v1049 = vpop.f32.mrf.mxu0
        %v1050 = vadd.f32 %v845, %v1049
        %v1051 = vpop.f32.mrf.mxu0
        %v1052 = vadd.f32 %v845, %v1051
        %1053 = vmatprep.mubr.f32.mxu0 0.0
        %1054 = vmatmul.mubr.f32.gmra.mxu0 %v914
        %v1055 = vpop.f32.mrf.mxu0
        %v1056 = vadd.f32 %v850, %v1055
        %v1057 = vpop.f32.mrf.mxu0
        %v1058 = vadd.f32 %v850, %v1057
        %1059 = vmatprep.mubr.f32.mxu0 0.0
        %1060 = vmatmul.mubr.f32.gmra.mxu0 %v917
        %v1061 = vpop.f32.mrf.mxu0
        %v1062 = vadd.f32 %v855, %v1061
        %v1063 = vpop.f32.mrf.mxu0
        %v1064 = vadd.f32 %v855, %v1063
        %1065 = vmatprep.mubr.f32.mxu0 0.0
        %1066 = vmatmul.mubr.f32.gmra.mxu0 %v920
        %v1067 = vpop.f32.mrf.mxu0
        %v1068 = vadd.f32 %v860, %v1067
        %v1069 = vpop.f32.mrf.mxu0
        %v1070 = vadd.f32 %v860, %v1069
        %1071 = vmatprep.mubr.f32.mxu0 0.0
        %1072 = vmatmul.mubr.f32.gmra.mxu0 %v923
        %v1073 = vpop.f32.mrf.mxu0
        %v1074 = vadd.f32 %v865, %v1073
        %v1075 = vpop.f32.mrf.mxu0
        %v1076 = vadd.f32 %v865, %v1075
        %1077 = vmatprep.mubr.f32.mxu0 0.0
        %1078 = vmatmul.mubr.f32.gmra.mxu0 %v926
        %v1079 = vpop.f32.mrf.mxu0
        %v1080 = vadd.f32 %v870, %v1079
        %v1081 = vpop.f32.mrf.mxu0
        %v1082 = vadd.f32 %v870, %v1081
        %1083 = vmatprep.mubr.f32.mxu0 0.0
        %1084 = vmatmul.mubr.f32.gmra.mxu0 %v929
        %v1085 = vpop.f32.mrf.mxu0
        %v1086 = vadd.f32 %v875, %v1085
        %v1087 = vpop.f32.mrf.mxu0
        %v1088 = vadd.f32 %v875, %v1087
        %1089 = vmatprep.mubr.f32.mxu0 0.0
        %1090 = vmatmul.mubr.f32.gmra.mxu0 %v932
        %v1091 = vpop.f32.mrf.mxu0
        %v1092 = vadd.f32 %v880, %v1091
        %v1093 = vpop.f32.mrf.mxu0
        %v1094 = vadd.f32 %v880, %v1093
        %1095 = vmatprep.mubr.f32.mxu0 0.0
        %1096 = vmatmul.mubr.f32.gmra.mxu0 %v935
        %v1097 = vpop.f32.mrf.mxu0
        %v1098 = vadd.f32 %v885, %v1097
        %v1099 = vpop.f32.mrf.mxu0
        %v1100 = vadd.f32 %v885, %v1099
        %1101 = vdwg.mxu0
        %v1102 = vmax.f32 %v1008, 0.0
        %v1103 = vmax.f32 %v1010, 0.0
        %v1104 = vmax.f32 %v1014, 0.0
        %v1105 = vmax.f32 %v1016, 0.0
        %v1106 = vmax.f32 %v1020, 0.0
        %v1107 = vmax.f32 %v1022, 0.0
        %v1108 = vmax.f32 %v1026, 0.0
        %v1109 = vmax.f32 %v1028, 0.0
        %v1110 = vmax.f32 %v1032, 0.0
        %v1111 = vmax.f32 %v1034, 0.0
        %v1112 = vmax.f32 %v1038, 0.0
        %v1113 = vmax.f32 %v1040, 0.0
        %v1114 = vmax.f32 %v1044, 0.0
        %v1115 = vmax.f32 %v1046, 0.0
        %v1116 = vmax.f32 %v1050, 0.0
        %v1117 = vmax.f32 %v1052, 0.0
        %v1118 = vmax.f32 %v1056, 0.0
        %v1119 = vmax.f32 %v1058, 0.0
        %v1120 = vmax.f32 %v1062, 0.0
        %v1121 = vmax.f32 %v1064, 0.0
        %v1122 = vmax.f32 %v1068, 0.0
        %v1123 = vmax.f32 %v1070, 0.0
        %v1124 = vmax.f32 %v1074, 0.0
        %v1125 = vmax.f32 %v1076, 0.0
        %v1126 = vmax.f32 %v1080, 0.0
        %v1127 = vmax.f32 %v1082, 0.0
        %v1128 = vmax.f32 %v1086, 0.0
        %v1129 = vmax.f32 %v1088, 0.0
        %v1130 = vmax.f32 %v1092, 0.0
        %v1131 = vmax.f32 %v1094, 0.0
        %v1132 = vmax.f32 %v1098, 0.0
        %v1133 = vmax.f32 %v1100, 0.0
        %v1134 = vld [vmem:[#allocation2 + $0x1] sm:$0x1]
        %v1135 = vadd.f32 %v1102, %v1103
        %1136 = vadd.xlane.f32.xlu0 %v1135
        %v1137 = vpop.xlane.xlu0 %1136
        %v1138 = vadd.f32 %v1104, %v1105
        %1139 = vadd.xlane.f32.xlu0 %v1138
        %v1140 = vpop.xlane.xlu0 %1139
        %v1141 = vadd.f32 %v1106, %v1107
        %1142 = vadd.xlane.f32.xlu0 %v1141
        %v1143 = vpop.xlane.xlu0 %1142
        %v1144 = vadd.f32 %v1108, %v1109
        %1145 = vadd.xlane.f32.xlu0 %v1144
        %v1146 = vpop.xlane.xlu0 %1145
        %v1147 = vadd.f32 %v1110, %v1111
        %1148 = vadd.xlane.f32.xlu0 %v1147
        %v1149 = vpop.xlane.xlu0 %1148
        %v1150 = vadd.f32 %v1112, %v1113
        %1151 = vadd.xlane.f32.xlu0 %v1150
        %v1152 = vpop.xlane.xlu0 %1151
        %v1153 = vadd.f32 %v1114, %v1115
        %1154 = vadd.xlane.f32.xlu0 %v1153
        %v1155 = vpop.xlane.xlu0 %1154
        %v1156 = vadd.f32 %v1116, %v1117
        %1157 = vadd.xlane.f32.xlu0 %v1156
        %v1158 = vpop.xlane.xlu0 %1157
        %v1159 = vadd.f32 %v1118, %v1119
        %1160 = vadd.xlane.f32.xlu0 %v1159
        %v1161 = vpop.xlane.xlu0 %1160
        %v1162 = vadd.f32 %v1120, %v1121
        %1163 = vadd.xlane.f32.xlu0 %v1162
        %v1164 = vpop.xlane.xlu0 %1163
        %v1165 = vadd.f32 %v1122, %v1123
        %1166 = vadd.xlane.f32.xlu0 %v1165
        %v1167 = vpop.xlane.xlu0 %1166
        %v1168 = vadd.f32 %v1124, %v1125
        %1169 = vadd.xlane.f32.xlu0 %v1168
        %v1170 = vpop.xlane.xlu0 %1169
        %v1171 = vadd.f32 %v1126, %v1127
        %1172 = vadd.xlane.f32.xlu0 %v1171
        %v1173 = vpop.xlane.xlu0 %1172
        %v1174 = vadd.f32 %v1128, %v1129
        %1175 = vadd.xlane.f32.xlu0 %v1174
        %v1176 = vpop.xlane.xlu0 %1175
        %v1177 = vadd.f32 %v1130, %v1131
        %1178 = vadd.xlane.f32.xlu0 %v1177
        %v1179 = vpop.xlane.xlu0 %1178
        %v1180 = vadd.f32 %v1132, %v1133
        %1181 = vadd.xlane.f32.xlu0 %v1180
        %v1182 = vpop.xlane.xlu0 %1181
        %v1199 = vlaneseq
        %v1200 = vshrl.u32 %v1199, 7
        %v1201 = vsub.s32 %v660, %v1200
        %v1202 = vrot.slane %v1137, %v1201
        %v1203 = vlaneseq
        %v1204 = vshrl.u32 %v1203, 7
        %v1205 = vsub.s32 %v665, %v1204
        %v1206 = vrot.slane %v1140, %v1205
        %v1207 = vsel %vm670, %v1206, %v1202
        %v1208 = vlaneseq
        %v1209 = vshrl.u32 %v1208, 7
        %v1210 = vsub.s32 %v672, %v1209
        %v1211 = vrot.slane %v1143, %v1210
        %v1212 = vsel %vm677, %v1211, %v1207
        %v1213 = vlaneseq
        %v1214 = vshrl.u32 %v1213, 7
        %v1215 = vsub.s32 %v679, %v1214
        %v1216 = vrot.slane %v1146, %v1215
        %v1217 = vsel %vm684, %v1216, %v1212
        %v1218 = vlaneseq
        %v1219 = vshrl.u32 %v1218, 7
        %v1220 = vsub.s32 %v686, %v1219
        %v1221 = vrot.slane %v1149, %v1220
        %v1222 = vsel %vm691, %v1221, %v1217
        %v1223 = vlaneseq
        %v1224 = vshrl.u32 %v1223, 7
        %v1225 = vsub.s32 %v693, %v1224
        %v1226 = vrot.slane %v1152, %v1225
        %v1227 = vsel %vm698, %v1226, %v1222
        %v1228 = vlaneseq
        %v1229 = vshrl.u32 %v1228, 7
        %v1230 = vsub.s32 %v700, %v1229
        %v1231 = vrot.slane %v1155, %v1230
        %v1232 = vsel %vm705, %v1231, %v1227
        %v1233 = vlaneseq
        %v1234 = vshrl.u32 %v1233, 7
        %v1235 = vsub.s32 %v707, %v1234
        %v1236 = vrot.slane %v1158, %v1235
        %v1237 = vsel %vm712, %v1236, %v1232
        %v1238 = vlaneseq
        %v1239 = vshrl.u32 %v1238, 7
        %v1240 = vsub.s32 %v714, %v1239
        %v1241 = vrot.slane %v1161, %v1240
        %v1242 = vsel %vm719, %v1241, %v1237
        %v1243 = vlaneseq
        %v1244 = vshrl.u32 %v1243, 7
        %v1245 = vsub.s32 %v721, %v1244
        %v1246 = vrot.slane %v1164, %v1245
        %v1247 = vsel %vm726, %v1246, %v1242
        %v1248 = vlaneseq
        %v1249 = vshrl.u32 %v1248, 7
        %v1250 = vsub.s32 %v728, %v1249
        %v1251 = vrot.slane %v1167, %v1250
        %v1252 = vsel %vm733, %v1251, %v1247
        %v1253 = vlaneseq
        %v1254 = vshrl.u32 %v1253, 7
        %v1255 = vsub.s32 %v735, %v1254
        %v1256 = vrot.slane %v1170, %v1255
        %v1257 = vsel %vm740, %v1256, %v1252
        %v1258 = vlaneseq
        %v1259 = vshrl.u32 %v1258, 7
        %v1260 = vsub.s32 %v742, %v1259
        %v1261 = vrot.slane %v1173, %v1260
        %v1262 = vsel %vm747, %v1261, %v1257
        %v1263 = vlaneseq
        %v1264 = vshrl.u32 %v1263, 7
        %v1265 = vsub.s32 %v749, %v1264
        %v1266 = vrot.slane %v1176, %v1265
        %v1267 = vsel %vm754, %v1266, %v1262
        %v1268 = vlaneseq
        %v1269 = vshrl.u32 %v1268, 7
        %v1270 = vsub.s32 %v756, %v1269
        %v1271 = vrot.slane %v1179, %v1270
        %v1272 = vsel %vm761, %v1271, %v1267
        %v1273 = vlaneseq
        %v1274 = vshrl.u32 %v1273, 7
        %v1275 = vsub.s32 %v763, %v1274
        %v1276 = vrot.slane %v1182, %v1275
        %v1277 = vsel %vm768, %v1276, %v1272
        %v1279 = vadd.f32 %v1134, %v1277
        %1280 = vst [vmem:[#allocation2 + $0x1] sm:$0x1] %v1279
        %v1281 = vld [vmem:[%s219] sm:$0xff]
        %v1282 = vld [vmem:[%s219 + $0x8] sm:$0xff]
        %v1283 = vld [vmem:[%s219 + $0x10] sm:$0xff]
        %v1284 = vld [vmem:[%s219 + $0x18] sm:$0xff]
        %v1285 = vld [vmem:[%s219 + $0x20] sm:$0xff]
        %v1286 = vld [vmem:[%s219 + $0x28] sm:$0xff]
        %v1287 = vld [vmem:[%s219 + $0x30] sm:$0xff]
        %v1288 = vld [vmem:[%s219 + $0x38] sm:$0xff]
        %v1289 = vld [vmem:[%s219 + $0x40] sm:$0xff]
        %v1290 = vld [vmem:[%s219 + $0x48] sm:$0xff]
        %v1291 = vld [vmem:[%s219 + $0x50] sm:$0xff]
        %v1292 = vld [vmem:[%s219 + $0x58] sm:$0xff]
        %v1293 = vld [vmem:[%s219 + $0x60] sm:$0xff]
        %v1294 = vld [vmem:[%s219 + $0x68] sm:$0xff]
        %v1295 = vld [vmem:[%s219 + $0x70] sm:$0xff]
        %v1296 = vld [vmem:[%s219 + $0x78] sm:$0xff]
        %s1297 = scalar_lea.vmem %s213, 16
        %v1298 = vld [vmem:[%s1297] sm:$0xff]
        %v1299 = vld [vmem:[%s225] sm:$0xff]
        %v1300 = vld [vmem:[%s225 + $0x8] sm:$0xff]
        %v1301 = vld [vmem:[%s225 + $0x10] sm:$0xff]
        %v1302 = vld [vmem:[%s225 + $0x18] sm:$0xff]
        %v1303 = vld [vmem:[%s225 + $0x20] sm:$0xff]
        %v1304 = vld [vmem:[%s225 + $0x28] sm:$0xff]
        %v1305 = vld [vmem:[%s225 + $0x30] sm:$0xff]
        %v1306 = vld [vmem:[%s225 + $0x38] sm:$0xff]
        %v1307 = vld [vmem:[%s225 + $0x40] sm:$0xff]
        %v1308 = vld [vmem:[%s225 + $0x48] sm:$0xff]
        %v1309 = vld [vmem:[%s225 + $0x50] sm:$0xff]
        %v1310 = vld [vmem:[%s225 + $0x58] sm:$0xff]
        %v1311 = vld [vmem:[%s225 + $0x60] sm:$0xff]
        %v1312 = vld [vmem:[%s225 + $0x68] sm:$0xff]
        %v1313 = vld [vmem:[%s225 + $0x70] sm:$0xff]
        %v1314 = vld [vmem:[%s225 + $0x78] sm:$0xff]
        %1316 = vset.pattern.permute.xlu0 0
        %1317 = vperm.xlu0 %1316, %v1299
        %v1318 = vpop.permute.xlu0 %1317
        %1321 = vset.pattern.permute.xlu0 0
        %1322 = vperm.xlu0 %1321, %v1300
        %v1323 = vpop.permute.xlu0 %1322
        %1326 = vset.pattern.permute.xlu0 0
        %1327 = vperm.xlu0 %1326, %v1301
        %v1328 = vpop.permute.xlu0 %1327
        %1331 = vset.pattern.permute.xlu0 0
        %1332 = vperm.xlu0 %1331, %v1302
        %v1333 = vpop.permute.xlu0 %1332
        %1336 = vset.pattern.permute.xlu0 0
        %1337 = vperm.xlu0 %1336, %v1303
        %v1338 = vpop.permute.xlu0 %1337
        %1341 = vset.pattern.permute.xlu0 0
        %1342 = vperm.xlu0 %1341, %v1304
        %v1343 = vpop.permute.xlu0 %1342
        %1346 = vset.pattern.permute.xlu0 0
        %1347 = vperm.xlu0 %1346, %v1305
        %v1348 = vpop.permute.xlu0 %1347
        %1351 = vset.pattern.permute.xlu0 0
        %1352 = vperm.xlu0 %1351, %v1306
        %v1353 = vpop.permute.xlu0 %1352
        %1356 = vset.pattern.permute.xlu0 0
        %1357 = vperm.xlu0 %1356, %v1307
        %v1358 = vpop.permute.xlu0 %1357
        %1361 = vset.pattern.permute.xlu0 0
        %1362 = vperm.xlu0 %1361, %v1308
        %v1363 = vpop.permute.xlu0 %1362
        %1366 = vset.pattern.permute.xlu0 0
        %1367 = vperm.xlu0 %1366, %v1309
        %v1368 = vpop.permute.xlu0 %1367
        %1371 = vset.pattern.permute.xlu0 0
        %1372 = vperm.xlu0 %1371, %v1310
        %v1373 = vpop.permute.xlu0 %1372
        %1376 = vset.pattern.permute.xlu0 0
        %1377 = vperm.xlu0 %1376, %v1311
        %v1378 = vpop.permute.xlu0 %1377
        %1381 = vset.pattern.permute.xlu0 0
        %1382 = vperm.xlu0 %1381, %v1312
        %v1383 = vpop.permute.xlu0 %1382
        %1386 = vset.pattern.permute.xlu0 0
        %1387 = vperm.xlu0 %1386, %v1313
        %v1388 = vpop.permute.xlu0 %1387
        %1391 = vset.pattern.permute.xlu0 0
        %1392 = vperm.xlu0 %1391, %v1314
        %v1393 = vpop.permute.xlu0 %1392
        %v1396 = vcombine.high %v1298, %v1298
        %v1398 = vsel %vm347, %v1281, 0
        %v1401 = vsel %vm347, %v1282, 0
        %v1404 = vsel %vm347, %v1283, 0
        %v1407 = vsel %vm347, %v1284, 0
        %v1410 = vsel %vm347, %v1285, 0
        %v1413 = vsel %vm347, %v1286, 0
        %v1416 = vsel %vm347, %v1287, 0
        %v1419 = vsel %vm347, %v1288, 0
        %v1422 = vsel %vm347, %v1289, 0
        %v1425 = vsel %vm347, %v1290, 0
        %v1428 = vsel %vm347, %v1291, 0
        %v1431 = vsel %vm347, %v1292, 0
        %v1434 = vsel %vm347, %v1293, 0
        %v1437 = vsel %vm347, %v1294, 0
        %v1440 = vsel %vm347, %v1295, 0
        %v1443 = vsel %vm347, %v1296, 0
        %v1445 = vsel %vm396, %v1298, 0
        %v1447 = vsel %vm396, %v1396, 0
        %1449 = vmatprep.subr.mxu0 0.0
        %1450 = vmatpush1.msra.mxu0 0.0
        %1451 = vmatprep.subr.mxu0 0.0
        %1452 = vmatpush1.msra.mxu0 0.0
        %1453 = vmatprep.subr.mxu0 0.0
        %1454 = vmatpush1.msra.mxu0 0.0
        %1455 = vmatprep.subr.mxu0 0.0
        %1456 = vmatpush1.msra.mxu0 0.0
        %1457 = vmatprep.subr.mxu0 0.0
        %1458 = vmatpush1.msra.mxu0 0.0
        %1459 = vmatprep.subr.mxu0 0.0
        %1460 = vmatpush1.msra.mxu0 0.0
        %1461 = vmatprep.subr.mxu0 0.0
        %1462 = vmatpush1.msra.mxu0 0.0
        %1463 = vmatprep.subr.mxu0 0.0
        %1464 = vmatpush1.msra.mxu0 0.0
        %1465 = vmatprep.subr.mxu0 0.0
        %1466 = vmatpush1.msra.mxu0 0.0
        %1467 = vmatprep.subr.mxu0 0.0
        %1468 = vmatpush1.msra.mxu0 0.0
        %1469 = vmatprep.subr.mxu0 0.0
        %1470 = vmatpush1.msra.mxu0 0.0
        %1471 = vmatprep.subr.mxu0 0.0
        %1472 = vmatpush1.msra.mxu0 0.0
        %1473 = vmatprep.subr.mxu0 0.0
        %1474 = vmatpush1.msra.mxu0 0.0
        %1475 = vmatprep.subr.mxu0 0.0
        %1476 = vmatpush1.msra.mxu0 0.0
        %1477 = vmatprep.subr.mxu0 0.0
        %1478 = vmatpush1.msra.mxu0 0.0
        %1479 = vmatprep.subr.mxu0 %v1447
        %1480 = vmatpush1.msra.mxu0 %v1445
        %1481 = vmatprep.subr.mxu0 0.0
        %1482 = vmatpush2.msra.mxu0 0.0
        %1483 = vmatprep.subr.mxu0 0.0
        %1484 = vmatpush2.msra.mxu0 0.0
        %1485 = vmatprep.subr.mxu0 0.0
        %1486 = vmatpush2.msra.mxu0 0.0
        %1487 = vmatprep.subr.mxu0 0.0
        %1488 = vmatpush2.msra.mxu0 0.0
        %1489 = vmatprep.subr.mxu0 0.0
        %1490 = vmatpush2.msra.mxu0 0.0
        %1491 = vmatprep.subr.mxu0 0.0
        %1492 = vmatpush2.msra.mxu0 0.0
        %1493 = vmatprep.subr.mxu0 0.0
        %1494 = vmatpush2.msra.mxu0 0.0
        %1495 = vmatprep.subr.mxu0 0.0
        %1496 = vmatpush2.msra.mxu0 0.0
        %1497 = vmatprep.subr.mxu0 0.0
        %1498 = vmatpush2.msra.mxu0 0.0
        %1499 = vmatprep.subr.mxu0 0.0
        %1500 = vmatpush2.msra.mxu0 0.0
        %1501 = vmatprep.subr.mxu0 0.0
        %1502 = vmatpush2.msra.mxu0 0.0
        %1503 = vmatprep.subr.mxu0 0.0
        %1504 = vmatpush2.msra.mxu0 0.0
        %1505 = vmatprep.subr.mxu0 0.0
        %1506 = vmatpush2.msra.mxu0 0.0
        %1507 = vmatprep.subr.mxu0 0.0
        %1508 = vmatpush2.msra.mxu0 0.0
        %1509 = vmatprep.subr.mxu0 0.0
        %1510 = vmatpush2.msra.mxu0 0.0
        %1511 = vmatprep.subr.mxu0 0.0
        %1512 = vmatpush2.msra.mxu0 0.0
        %1513 = vmatprep.mubr.f32.mxu0 0.0
        %1514 = vmatmul.mubr.f32.gmra.mxu0 %v1398
        %v1515 = vpop.f32.mrf.mxu0
        %v1516 = vadd.f32 %v1318, %v1515
        %v1517 = vpop.f32.mrf.mxu0
        %v1518 = vadd.f32 %v1318, %v1517
        %1519 = vmatprep.mubr.f32.mxu0 0.0
        %1520 = vmatmul.mubr.f32.gmra.mxu0 %v1401
        %v1521 = vpop.f32.mrf.mxu0
        %v1522 = vadd.f32 %v1323, %v1521
        %v1523 = vpop.f32.mrf.mxu0
        %v1524 = vadd.f32 %v1323, %v1523
        %1525 = vmatprep.mubr.f32.mxu0 0.0
        %1526 = vmatmul.mubr.f32.gmra.mxu0 %v1404
        %v1527 = vpop.f32.mrf.mxu0
        %v1528 = vadd.f32 %v1328, %v1527
        %v1529 = vpop.f32.mrf.mxu0
        %v1530 = vadd.f32 %v1328, %v1529
        %1531 = vmatprep.mubr.f32.mxu0 0.0
        %1532 = vmatmul.mubr.f32.gmra.mxu0 %v1407
        %v1533 = vpop.f32.mrf.mxu0
        %v1534 = vadd.f32 %v1333, %v1533
        %v1535 = vpop.f32.mrf.mxu0
        %v1536 = vadd.f32 %v1333, %v1535
        %1537 = vmatprep.mubr.f32.mxu0 0.0
        %1538 = vmatmul.mubr.f32.gmra.mxu0 %v1410
        %v1539 = vpop.f32.mrf.mxu0
        %v1540 = vadd.f32 %v1338, %v1539
        %v1541 = vpop.f32.mrf.mxu0
        %v1542 = vadd.f32 %v1338, %v1541
        %1543 = vmatprep.mubr.f32.mxu0 0.0
        %1544 = vmatmul.mubr.f32.gmra.mxu0 %v1413
        %v1545 = vpop.f32.mrf.mxu0
        %v1546 = vadd.f32 %v1343, %v1545
        %v1547 = vpop.f32.mrf.mxu0
        %v1548 = vadd.f32 %v1343, %v1547
        %1549 = vmatprep.mubr.f32.mxu0 0.0
        %1550 = vmatmul.mubr.f32.gmra.mxu0 %v1416
        %v1551 = vpop.f32.mrf.mxu0
        %v1552 = vadd.f32 %v1348, %v1551
        %v1553 = vpop.f32.mrf.mxu0
        %v1554 = vadd.f32 %v1348, %v1553
        %1555 = vmatprep.mubr.f32.mxu0 0.0
        %1556 = vmatmul.mubr.f32.gmra.mxu0 %v1419
        %v1557 = vpop.f32.mrf.mxu0
        %v1558 = vadd.f32 %v1353, %v1557
        %v1559 = vpop.f32.mrf.mxu0
        %v1560 = vadd.f32 %v1353, %v1559
        %1561 = vmatprep.mubr.f32.mxu0 0.0
        %1562 = vmatmul.mubr.f32.gmra.mxu0 %v1422
        %v1563 = vpop.f32.mrf.mxu0
        %v1564 = vadd.f32 %v1358, %v1563
        %v1565 = vpop.f32.mrf.mxu0
        %v1566 = vadd.f32 %v1358, %v1565
        %1567 = vmatprep.mubr.f32.mxu0 0.0
        %1568 = vmatmul.mubr.f32.gmra.mxu0 %v1425
        %v1569 = vpop.f32.mrf.mxu0
        %v1570 = vadd.f32 %v1363, %v1569
        %v1571 = vpop.f32.mrf.mxu0
        %v1572 = vadd.f32 %v1363, %v1571
        %1573 = vmatprep.mubr.f32.mxu0 0.0
        %1574 = vmatmul.mubr.f32.gmra.mxu0 %v1428
        %v1575 = vpop.f32.mrf.mxu0
        %v1576 = vadd.f32 %v1368, %v1575
        %v1577 = vpop.f32.mrf.mxu0
        %v1578 = vadd.f32 %v1368, %v1577
        %1579 = vmatprep.mubr.f32.mxu0 0.0
        %1580 = vmatmul.mubr.f32.gmra.mxu0 %v1431
        %v1581 = vpop.f32.mrf.mxu0
        %v1582 = vadd.f32 %v1373, %v1581
        %v1583 = vpop.f32.mrf.mxu0
        %v1584 = vadd.f32 %v1373, %v1583
        %1585 = vmatprep.mubr.f32.mxu0 0.0
        %1586 = vmatmul.mubr.f32.gmra.mxu0 %v1434
        %v1587 = vpop.f32.mrf.mxu0
        %v1588 = vadd.f32 %v1378, %v1587
        %v1589 = vpop.f32.mrf.mxu0
        %v1590 = vadd.f32 %v1378, %v1589
        %1591 = vmatprep.mubr.f32.mxu0 0.0
        %1592 = vmatmul.mubr.f32.gmra.mxu0 %v1437
        %v1593 = vpop.f32.mrf.mxu0
        %v1594 = vadd.f32 %v1383, %v1593
        %v1595 = vpop.f32.mrf.mxu0
        %v1596 = vadd.f32 %v1383, %v1595
        %1597 = vmatprep.mubr.f32.mxu0 0.0
        %1598 = vmatmul.mubr.f32.gmra.mxu0 %v1440
        %v1599 = vpop.f32.mrf.mxu0
        %v1600 = vadd.f32 %v1388, %v1599
        %v1601 = vpop.f32.mrf.mxu0
        %v1602 = vadd.f32 %v1388, %v1601
        %1603 = vmatprep.mubr.f32.mxu0 0.0
        %1604 = vmatmul.mubr.f32.gmra.mxu0 %v1443
        %v1605 = vpop.f32.mrf.mxu0
        %v1606 = vadd.f32 %v1393, %v1605
        %v1607 = vpop.f32.mrf.mxu0
        %v1608 = vadd.f32 %v1393, %v1607
        %1609 = vdwg.mxu0
        %v1610 = vmax.f32 %v1516, 0.0
        %v1611 = vmax.f32 %v1518, 0.0
        %v1612 = vmax.f32 %v1522, 0.0
        %v1613 = vmax.f32 %v1524, 0.0
        %v1614 = vmax.f32 %v1528, 0.0
        %v1615 = vmax.f32 %v1530, 0.0
        %v1616 = vmax.f32 %v1534, 0.0
        %v1617 = vmax.f32 %v1536, 0.0
        %v1618 = vmax.f32 %v1540, 0.0
        %v1619 = vmax.f32 %v1542, 0.0
        %v1620 = vmax.f32 %v1546, 0.0
        %v1621 = vmax.f32 %v1548, 0.0
        %v1622 = vmax.f32 %v1552, 0.0
        %v1623 = vmax.f32 %v1554, 0.0
        %v1624 = vmax.f32 %v1558, 0.0
        %v1625 = vmax.f32 %v1560, 0.0
        %v1626 = vmax.f32 %v1564, 0.0
        %v1627 = vmax.f32 %v1566, 0.0
        %v1628 = vmax.f32 %v1570, 0.0
        %v1629 = vmax.f32 %v1572, 0.0
        %v1630 = vmax.f32 %v1576, 0.0
        %v1631 = vmax.f32 %v1578, 0.0
        %v1632 = vmax.f32 %v1582, 0.0
        %v1633 = vmax.f32 %v1584, 0.0
        %v1634 = vmax.f32 %v1588, 0.0
        %v1635 = vmax.f32 %v1590, 0.0
        %v1636 = vmax.f32 %v1594, 0.0
        %v1637 = vmax.f32 %v1596, 0.0
        %v1638 = vmax.f32 %v1600, 0.0
        %v1639 = vmax.f32 %v1602, 0.0
        %v1640 = vmax.f32 %v1606, 0.0
        %v1641 = vmax.f32 %v1608, 0.0
        %v1642 = vld [vmem:[#allocation2 + $0x2] sm:$0x1]
        %v1643 = vadd.f32 %v1610, %v1611
        %1644 = vadd.xlane.f32.xlu0 %v1643
        %v1645 = vpop.xlane.xlu0 %1644
        %v1646 = vadd.f32 %v1612, %v1613
        %1647 = vadd.xlane.f32.xlu0 %v1646
        %v1648 = vpop.xlane.xlu0 %1647
        %v1649 = vadd.f32 %v1614, %v1615
        %1650 = vadd.xlane.f32.xlu0 %v1649
        %v1651 = vpop.xlane.xlu0 %1650
        %v1652 = vadd.f32 %v1616, %v1617
        %1653 = vadd.xlane.f32.xlu0 %v1652
        %v1654 = vpop.xlane.xlu0 %1653
        %v1655 = vadd.f32 %v1618, %v1619
        %1656 = vadd.xlane.f32.xlu0 %v1655
        %v1657 = vpop.xlane.xlu0 %1656
        %v1658 = vadd.f32 %v1620, %v1621
        %1659 = vadd.xlane.f32.xlu0 %v1658
        %v1660 = vpop.xlane.xlu0 %1659
        %v1661 = vadd.f32 %v1622, %v1623
        %1662 = vadd.xlane.f32.xlu0 %v1661
        %v1663 = vpop.xlane.xlu0 %1662
        %v1664 = vadd.f32 %v1624, %v1625
        %1665 = vadd.xlane.f32.xlu0 %v1664
        %v1666 = vpop.xlane.xlu0 %1665
        %v1667 = vadd.f32 %v1626, %v1627
        %1668 = vadd.xlane.f32.xlu0 %v1667
        %v1669 = vpop.xlane.xlu0 %1668
        %v1670 = vadd.f32 %v1628, %v1629
        %1671 = vadd.xlane.f32.xlu0 %v1670
        %v1672 = vpop.xlane.xlu0 %1671
        %v1673 = vadd.f32 %v1630, %v1631
        %1674 = vadd.xlane.f32.xlu0 %v1673
        %v1675 = vpop.xlane.xlu0 %1674
        %v1676 = vadd.f32 %v1632, %v1633
        %1677 = vadd.xlane.f32.xlu0 %v1676
        %v1678 = vpop.xlane.xlu0 %1677
        %v1679 = vadd.f32 %v1634, %v1635
        %1680 = vadd.xlane.f32.xlu0 %v1679
        %v1681 = vpop.xlane.xlu0 %1680
        %v1682 = vadd.f32 %v1636, %v1637
        %1683 = vadd.xlane.f32.xlu0 %v1682
        %v1684 = vpop.xlane.xlu0 %1683
        %v1685 = vadd.f32 %v1638, %v1639
        %1686 = vadd.xlane.f32.xlu0 %v1685
        %v1687 = vpop.xlane.xlu0 %1686
        %v1688 = vadd.f32 %v1640, %v1641
        %1689 = vadd.xlane.f32.xlu0 %v1688
        %v1690 = vpop.xlane.xlu0 %1689
        %v1707 = vlaneseq
        %v1708 = vshrl.u32 %v1707, 7
        %v1709 = vsub.s32 %v660, %v1708
        %v1710 = vrot.slane %v1645, %v1709
        %v1711 = vlaneseq
        %v1712 = vshrl.u32 %v1711, 7
        %v1713 = vsub.s32 %v665, %v1712
        %v1714 = vrot.slane %v1648, %v1713
        %v1715 = vsel %vm670, %v1714, %v1710
        %v1716 = vlaneseq
        %v1717 = vshrl.u32 %v1716, 7
        %v1718 = vsub.s32 %v672, %v1717
        %v1719 = vrot.slane %v1651, %v1718
        %v1720 = vsel %vm677, %v1719, %v1715
        %v1721 = vlaneseq
        %v1722 = vshrl.u32 %v1721, 7
        %v1723 = vsub.s32 %v679, %v1722
        %v1724 = vrot.slane %v1654, %v1723
        %v1725 = vsel %vm684, %v1724, %v1720
        %v1726 = vlaneseq
        %v1727 = vshrl.u32 %v1726, 7
        %v1728 = vsub.s32 %v686, %v1727
        %v1729 = vrot.slane %v1657, %v1728
        %v1730 = vsel %vm691, %v1729, %v1725
        %v1731 = vlaneseq
        %v1732 = vshrl.u32 %v1731, 7
        %v1733 = vsub.s32 %v693, %v1732
        %v1734 = vrot.slane %v1660, %v1733
        %v1735 = vsel %vm698, %v1734, %v1730
        %v1736 = vlaneseq
        %v1737 = vshrl.u32 %v1736, 7
        %v1738 = vsub.s32 %v700, %v1737
        %v1739 = vrot.slane %v1663, %v1738
        %v1740 = vsel %vm705, %v1739, %v1735
        %v1741 = vlaneseq
        %v1742 = vshrl.u32 %v1741, 7
        %v1743 = vsub.s32 %v707, %v1742
        %v1744 = vrot.slane %v1666, %v1743
        %v1745 = vsel %vm712, %v1744, %v1740
        %v1746 = vlaneseq
        %v1747 = vshrl.u32 %v1746, 7
        %v1748 = vsub.s32 %v714, %v1747
        %v1749 = vrot.slane %v1669, %v1748
        %v1750 = vsel %vm719, %v1749, %v1745
        %v1751 = vlaneseq
        %v1752 = vshrl.u32 %v1751, 7
        %v1753 = vsub.s32 %v721, %v1752
        %v1754 = vrot.slane %v1672, %v1753
        %v1755 = vsel %vm726, %v1754, %v1750
        %v1756 = vlaneseq
        %v1757 = vshrl.u32 %v1756, 7
        %v1758 = vsub.s32 %v728, %v1757
        %v1759 = vrot.slane %v1675, %v1758
        %v1760 = vsel %vm733, %v1759, %v1755
        %v1761 = vlaneseq
        %v1762 = vshrl.u32 %v1761, 7
        %v1763 = vsub.s32 %v735, %v1762
        %v1764 = vrot.slane %v1678, %v1763
        %v1765 = vsel %vm740, %v1764, %v1760
        %v1766 = vlaneseq
        %v1767 = vshrl.u32 %v1766, 7
        %v1768 = vsub.s32 %v742, %v1767
        %v1769 = vrot.slane %v1681, %v1768
        %v1770 = vsel %vm747, %v1769, %v1765
        %v1771 = vlaneseq
        %v1772 = vshrl.u32 %v1771, 7
        %v1773 = vsub.s32 %v749, %v1772
        %v1774 = vrot.slane %v1684, %v1773
        %v1775 = vsel %vm754, %v1774, %v1770
        %v1776 = vlaneseq
        %v1777 = vshrl.u32 %v1776, 7
        %v1778 = vsub.s32 %v756, %v1777
        %v1779 = vrot.slane %v1687, %v1778
        %v1780 = vsel %vm761, %v1779, %v1775
        %v1781 = vlaneseq
        %v1782 = vshrl.u32 %v1781, 7
        %v1783 = vsub.s32 %v763, %v1782
        %v1784 = vrot.slane %v1690, %v1783
        %v1785 = vsel %vm768, %v1784, %v1780
        %v1787 = vadd.f32 %v1642, %v1785
        %1788 = vst [vmem:[#allocation2 + $0x2] sm:$0x1] %v1787
        %v1789 = vld [vmem:[%s219] sm:$0xff]
        %v1790 = vld [vmem:[%s219 + $0x8] sm:$0xff]
        %v1791 = vld [vmem:[%s219 + $0x10] sm:$0xff]
        %v1792 = vld [vmem:[%s219 + $0x18] sm:$0xff]
        %v1793 = vld [vmem:[%s219 + $0x20] sm:$0xff]
        %v1794 = vld [vmem:[%s219 + $0x28] sm:$0xff]
        %v1795 = vld [vmem:[%s219 + $0x30] sm:$0xff]
        %v1796 = vld [vmem:[%s219 + $0x38] sm:$0xff]
        %v1797 = vld [vmem:[%s219 + $0x40] sm:$0xff]
        %v1798 = vld [vmem:[%s219 + $0x48] sm:$0xff]
        %v1799 = vld [vmem:[%s219 + $0x50] sm:$0xff]
        %v1800 = vld [vmem:[%s219 + $0x58] sm:$0xff]
        %v1801 = vld [vmem:[%s219 + $0x60] sm:$0xff]
        %v1802 = vld [vmem:[%s219 + $0x68] sm:$0xff]
        %v1803 = vld [vmem:[%s219 + $0x70] sm:$0xff]
        %v1804 = vld [vmem:[%s219 + $0x78] sm:$0xff]
        %s1805 = scalar_lea.vmem %s213, 24
        %v1806 = vld [vmem:[%s1805] sm:$0xff]
        %v1807 = vld [vmem:[%s225] sm:$0xff]
        %v1808 = vld [vmem:[%s225 + $0x8] sm:$0xff]
        %v1809 = vld [vmem:[%s225 + $0x10] sm:$0xff]
        %v1810 = vld [vmem:[%s225 + $0x18] sm:$0xff]
        %v1811 = vld [vmem:[%s225 + $0x20] sm:$0xff]
        %v1812 = vld [vmem:[%s225 + $0x28] sm:$0xff]
        %v1813 = vld [vmem:[%s225 + $0x30] sm:$0xff]
        %v1814 = vld [vmem:[%s225 + $0x38] sm:$0xff]
        %v1815 = vld [vmem:[%s225 + $0x40] sm:$0xff]
        %v1816 = vld [vmem:[%s225 + $0x48] sm:$0xff]
        %v1817 = vld [vmem:[%s225 + $0x50] sm:$0xff]
        %v1818 = vld [vmem:[%s225 + $0x58] sm:$0xff]
        %v1819 = vld [vmem:[%s225 + $0x60] sm:$0xff]
        %v1820 = vld [vmem:[%s225 + $0x68] sm:$0xff]
        %v1821 = vld [vmem:[%s225 + $0x70] sm:$0xff]
        %v1822 = vld [vmem:[%s225 + $0x78] sm:$0xff]
        %1824 = vset.pattern.permute.xlu0 0
        %1825 = vperm.xlu0 %1824, %v1807
        %v1826 = vpop.permute.xlu0 %1825
        %1829 = vset.pattern.permute.xlu0 0
        %1830 = vperm.xlu0 %1829, %v1808
        %v1831 = vpop.permute.xlu0 %1830
        %1834 = vset.pattern.permute.xlu0 0
        %1835 = vperm.xlu0 %1834, %v1809
        %v1836 = vpop.permute.xlu0 %1835
        %1839 = vset.pattern.permute.xlu0 0
        %1840 = vperm.xlu0 %1839, %v1810
        %v1841 = vpop.permute.xlu0 %1840
        %1844 = vset.pattern.permute.xlu0 0
        %1845 = vperm.xlu0 %1844, %v1811
        %v1846 = vpop.permute.xlu0 %1845
        %1849 = vset.pattern.permute.xlu0 0
        %1850 = vperm.xlu0 %1849, %v1812
        %v1851 = vpop.permute.xlu0 %1850
        %1854 = vset.pattern.permute.xlu0 0
        %1855 = vperm.xlu0 %1854, %v1813
        %v1856 = vpop.permute.xlu0 %1855
        %1859 = vset.pattern.permute.xlu0 0
        %1860 = vperm.xlu0 %1859, %v1814
        %v1861 = vpop.permute.xlu0 %1860
        %1864 = vset.pattern.permute.xlu0 0
        %1865 = vperm.xlu0 %1864, %v1815
        %v1866 = vpop.permute.xlu0 %1865
        %1869 = vset.pattern.permute.xlu0 0
        %1870 = vperm.xlu0 %1869, %v1816
        %v1871 = vpop.permute.xlu0 %1870
        %1874 = vset.pattern.permute.xlu0 0
        %1875 = vperm.xlu0 %1874, %v1817
        %v1876 = vpop.permute.xlu0 %1875
        %1879 = vset.pattern.permute.xlu0 0
        %1880 = vperm.xlu0 %1879, %v1818
        %v1881 = vpop.permute.xlu0 %1880
        %1884 = vset.pattern.permute.xlu0 0
        %1885 = vperm.xlu0 %1884, %v1819
        %v1886 = vpop.permute.xlu0 %1885
        %1889 = vset.pattern.permute.xlu0 0
        %1890 = vperm.xlu0 %1889, %v1820
        %v1891 = vpop.permute.xlu0 %1890
        %1894 = vset.pattern.permute.xlu0 0
        %1895 = vperm.xlu0 %1894, %v1821
        %v1896 = vpop.permute.xlu0 %1895
        %1899 = vset.pattern.permute.xlu0 0
        %1900 = vperm.xlu0 %1899, %v1822
        %v1901 = vpop.permute.xlu0 %1900
        %v1904 = vcombine.high %v1806, %v1806
        %v1906 = vsel %vm347, %v1789, 0
        %v1909 = vsel %vm347, %v1790, 0
        %v1912 = vsel %vm347, %v1791, 0
        %v1915 = vsel %vm347, %v1792, 0
        %v1918 = vsel %vm347, %v1793, 0
        %v1921 = vsel %vm347, %v1794, 0
        %v1924 = vsel %vm347, %v1795, 0
        %v1927 = vsel %vm347, %v1796, 0
        %v1930 = vsel %vm347, %v1797, 0
        %v1933 = vsel %vm347, %v1798, 0
        %v1936 = vsel %vm347, %v1799, 0
        %v1939 = vsel %vm347, %v1800, 0
        %v1942 = vsel %vm347, %v1801, 0
        %v1945 = vsel %vm347, %v1802, 0
        %v1948 = vsel %vm347, %v1803, 0
        %v1951 = vsel %vm347, %v1804, 0
        %v1953 = vsel %vm396, %v1806, 0
        %v1955 = vsel %vm396, %v1904, 0
        %1957 = vmatprep.subr.mxu0 0.0
        %1958 = vmatpush1.msra.mxu0 0.0
        %1959 = vmatprep.subr.mxu0 0.0
        %1960 = vmatpush1.msra.mxu0 0.0
        %1961 = vmatprep.subr.mxu0 0.0
        %1962 = vmatpush1.msra.mxu0 0.0
        %1963 = vmatprep.subr.mxu0 0.0
        %1964 = vmatpush1.msra.mxu0 0.0
        %1965 = vmatprep.subr.mxu0 0.0
        %1966 = vmatpush1.msra.mxu0 0.0
        %1967 = vmatprep.subr.mxu0 0.0
        %1968 = vmatpush1.msra.mxu0 0.0
        %1969 = vmatprep.subr.mxu0 0.0
        %1970 = vmatpush1.msra.mxu0 0.0
        %1971 = vmatprep.subr.mxu0 0.0
        %1972 = vmatpush1.msra.mxu0 0.0
        %1973 = vmatprep.subr.mxu0 0.0
        %1974 = vmatpush1.msra.mxu0 0.0
        %1975 = vmatprep.subr.mxu0 0.0
        %1976 = vmatpush1.msra.mxu0 0.0
        %1977 = vmatprep.subr.mxu0 0.0
        %1978 = vmatpush1.msra.mxu0 0.0
        %1979 = vmatprep.subr.mxu0 0.0
        %1980 = vmatpush1.msra.mxu0 0.0
        %1981 = vmatprep.subr.mxu0 0.0
        %1982 = vmatpush1.msra.mxu0 0.0
        %1983 = vmatprep.subr.mxu0 0.0
        %1984 = vmatpush1.msra.mxu0 0.0
        %1985 = vmatprep.subr.mxu0 0.0
        %1986 = vmatpush1.msra.mxu0 0.0
        %1987 = vmatprep.subr.mxu0 %v1955
        %1988 = vmatpush1.msra.mxu0 %v1953
        %1989 = vmatprep.subr.mxu0 0.0
        %1990 = vmatpush2.msra.mxu0 0.0
        %1991 = vmatprep.subr.mxu0 0.0
        %1992 = vmatpush2.msra.mxu0 0.0
        %1993 = vmatprep.subr.mxu0 0.0
        %1994 = vmatpush2.msra.mxu0 0.0
        %1995 = vmatprep.subr.mxu0 0.0
        %1996 = vmatpush2.msra.mxu0 0.0
        %1997 = vmatprep.subr.mxu0 0.0
        %1998 = vmatpush2.msra.mxu0 0.0
        %1999 = vmatprep.subr.mxu0 0.0
        %2000 = vmatpush2.msra.mxu0 0.0
        %2001 = vmatprep.subr.mxu0 0.0
        %2002 = vmatpush2.msra.mxu0 0.0
        %2003 = vmatprep.subr.mxu0 0.0
        %2004 = vmatpush2.msra.mxu0 0.0
        %2005 = vmatprep.subr.mxu0 0.0
        %2006 = vmatpush2.msra.mxu0 0.0
        %2007 = vmatprep.subr.mxu0 0.0
        %2008 = vmatpush2.msra.mxu0 0.0
        %2009 = vmatprep.subr.mxu0 0.0
        %2010 = vmatpush2.msra.mxu0 0.0
        %2011 = vmatprep.subr.mxu0 0.0
        %2012 = vmatpush2.msra.mxu0 0.0
        %2013 = vmatprep.subr.mxu0 0.0
        %2014 = vmatpush2.msra.mxu0 0.0
        %2015 = vmatprep.subr.mxu0 0.0
        %2016 = vmatpush2.msra.mxu0 0.0
        %2017 = vmatprep.subr.mxu0 0.0
        %2018 = vmatpush2.msra.mxu0 0.0
        %2019 = vmatprep.subr.mxu0 0.0
        %2020 = vmatpush2.msra.mxu0 0.0
        %2021 = vmatprep.mubr.f32.mxu0 0.0
        %2022 = vmatmul.mubr.f32.gmra.mxu0 %v1906
        %v2023 = vpop.f32.mrf.mxu0
        %v2024 = vadd.f32 %v1826, %v2023
        %v2025 = vpop.f32.mrf.mxu0
        %v2026 = vadd.f32 %v1826, %v2025
        %2027 = vmatprep.mubr.f32.mxu0 0.0
        %2028 = vmatmul.mubr.f32.gmra.mxu0 %v1909
        %v2029 = vpop.f32.mrf.mxu0
        %v2030 = vadd.f32 %v1831, %v2029
        %v2031 = vpop.f32.mrf.mxu0
        %v2032 = vadd.f32 %v1831, %v2031
        %2033 = vmatprep.mubr.f32.mxu0 0.0
        %2034 = vmatmul.mubr.f32.gmra.mxu0 %v1912
        %v2035 = vpop.f32.mrf.mxu0
        %v2036 = vadd.f32 %v1836, %v2035
        %v2037 = vpop.f32.mrf.mxu0
        %v2038 = vadd.f32 %v1836, %v2037
        %2039 = vmatprep.mubr.f32.mxu0 0.0
        %2040 = vmatmul.mubr.f32.gmra.mxu0 %v1915
        %v2041 = vpop.f32.mrf.mxu0
        %v2042 = vadd.f32 %v1841, %v2041
        %v2043 = vpop.f32.mrf.mxu0
        %v2044 = vadd.f32 %v1841, %v2043
        %2045 = vmatprep.mubr.f32.mxu0 0.0
        %2046 = vmatmul.mubr.f32.gmra.mxu0 %v1918
        %v2047 = vpop.f32.mrf.mxu0
        %v2048 = vadd.f32 %v1846, %v2047
        %v2049 = vpop.f32.mrf.mxu0
        %v2050 = vadd.f32 %v1846, %v2049
        %2051 = vmatprep.mubr.f32.mxu0 0.0
        %2052 = vmatmul.mubr.f32.gmra.mxu0 %v1921
        %v2053 = vpop.f32.mrf.mxu0
        %v2054 = vadd.f32 %v1851, %v2053
        %v2055 = vpop.f32.mrf.mxu0
        %v2056 = vadd.f32 %v1851, %v2055
        %2057 = vmatprep.mubr.f32.mxu0 0.0
        %2058 = vmatmul.mubr.f32.gmra.mxu0 %v1924
        %v2059 = vpop.f32.mrf.mxu0
        %v2060 = vadd.f32 %v1856, %v2059
        %v2061 = vpop.f32.mrf.mxu0
        %v2062 = vadd.f32 %v1856, %v2061
        %2063 = vmatprep.mubr.f32.mxu0 0.0
        %2064 = vmatmul.mubr.f32.gmra.mxu0 %v1927
        %v2065 = vpop.f32.mrf.mxu0
        %v2066 = vadd.f32 %v1861, %v2065
        %v2067 = vpop.f32.mrf.mxu0
        %v2068 = vadd.f32 %v1861, %v2067
        %2069 = vmatprep.mubr.f32.mxu0 0.0
        %2070 = vmatmul.mubr.f32.gmra.mxu0 %v1930
        %v2071 = vpop.f32.mrf.mxu0
        %v2072 = vadd.f32 %v1866, %v2071
        %v2073 = vpop.f32.mrf.mxu0
        %v2074 = vadd.f32 %v1866, %v2073
        %2075 = vmatprep.mubr.f32.mxu0 0.0
        %2076 = vmatmul.mubr.f32.gmra.mxu0 %v1933
        %v2077 = vpop.f32.mrf.mxu0
        %v2078 = vadd.f32 %v1871, %v2077
        %v2079 = vpop.f32.mrf.mxu0
        %v2080 = vadd.f32 %v1871, %v2079
        %2081 = vmatprep.mubr.f32.mxu0 0.0
        %2082 = vmatmul.mubr.f32.gmra.mxu0 %v1936
        %v2083 = vpop.f32.mrf.mxu0
        %v2084 = vadd.f32 %v1876, %v2083
        %v2085 = vpop.f32.mrf.mxu0
        %v2086 = vadd.f32 %v1876, %v2085
        %2087 = vmatprep.mubr.f32.mxu0 0.0
        %2088 = vmatmul.mubr.f32.gmra.mxu0 %v1939
        %v2089 = vpop.f32.mrf.mxu0
        %v2090 = vadd.f32 %v1881, %v2089
        %v2091 = vpop.f32.mrf.mxu0
        %v2092 = vadd.f32 %v1881, %v2091
        %2093 = vmatprep.mubr.f32.mxu0 0.0
        %2094 = vmatmul.mubr.f32.gmra.mxu0 %v1942
        %v2095 = vpop.f32.mrf.mxu0
        %v2096 = vadd.f32 %v1886, %v2095
        %v2097 = vpop.f32.mrf.mxu0
        %v2098 = vadd.f32 %v1886, %v2097
        %2099 = vmatprep.mubr.f32.mxu0 0.0
        %2100 = vmatmul.mubr.f32.gmra.mxu0 %v1945
        %v2101 = vpop.f32.mrf.mxu0
        %v2102 = vadd.f32 %v1891, %v2101
        %v2103 = vpop.f32.mrf.mxu0
        %v2104 = vadd.f32 %v1891, %v2103
        %2105 = vmatprep.mubr.f32.mxu0 0.0
        %2106 = vmatmul.mubr.f32.gmra.mxu0 %v1948
        %v2107 = vpop.f32.mrf.mxu0
        %v2108 = vadd.f32 %v1896, %v2107
        %v2109 = vpop.f32.mrf.mxu0
        %v2110 = vadd.f32 %v1896, %v2109
        %2111 = vmatprep.mubr.f32.mxu0 0.0
        %2112 = vmatmul.mubr.f32.gmra.mxu0 %v1951
        %v2113 = vpop.f32.mrf.mxu0
        %v2114 = vadd.f32 %v1901, %v2113
        %v2115 = vpop.f32.mrf.mxu0
        %v2116 = vadd.f32 %v1901, %v2115
        %2117 = vdwg.mxu0
        %v2118 = vmax.f32 %v2024, 0.0
        %v2119 = vmax.f32 %v2026, 0.0
        %v2120 = vmax.f32 %v2030, 0.0
        %v2121 = vmax.f32 %v2032, 0.0
        %v2122 = vmax.f32 %v2036, 0.0
        %v2123 = vmax.f32 %v2038, 0.0
        %v2124 = vmax.f32 %v2042, 0.0
        %v2125 = vmax.f32 %v2044, 0.0
        %v2126 = vmax.f32 %v2048, 0.0
        %v2127 = vmax.f32 %v2050, 0.0
        %v2128 = vmax.f32 %v2054, 0.0
        %v2129 = vmax.f32 %v2056, 0.0
        %v2130 = vmax.f32 %v2060, 0.0
        %v2131 = vmax.f32 %v2062, 0.0
        %v2132 = vmax.f32 %v2066, 0.0
        %v2133 = vmax.f32 %v2068, 0.0
        %v2134 = vmax.f32 %v2072, 0.0
        %v2135 = vmax.f32 %v2074, 0.0
        %v2136 = vmax.f32 %v2078, 0.0
        %v2137 = vmax.f32 %v2080, 0.0
        %v2138 = vmax.f32 %v2084, 0.0
        %v2139 = vmax.f32 %v2086, 0.0
        %v2140 = vmax.f32 %v2090, 0.0
        %v2141 = vmax.f32 %v2092, 0.0
        %v2142 = vmax.f32 %v2096, 0.0
        %v2143 = vmax.f32 %v2098, 0.0
        %v2144 = vmax.f32 %v2102, 0.0
        %v2145 = vmax.f32 %v2104, 0.0
        %v2146 = vmax.f32 %v2108, 0.0
        %v2147 = vmax.f32 %v2110, 0.0
        %v2148 = vmax.f32 %v2114, 0.0
        %v2149 = vmax.f32 %v2116, 0.0
        %v2150 = vld [vmem:[#allocation2 + $0x3] sm:$0x1]
        %v2151 = vadd.f32 %v2118, %v2119
        %2152 = vadd.xlane.f32.xlu0 %v2151
        %v2153 = vpop.xlane.xlu0 %2152
        %v2154 = vadd.f32 %v2120, %v2121
        %2155 = vadd.xlane.f32.xlu0 %v2154
        %v2156 = vpop.xlane.xlu0 %2155
        %v2157 = vadd.f32 %v2122, %v2123
        %2158 = vadd.xlane.f32.xlu0 %v2157
        %v2159 = vpop.xlane.xlu0 %2158
        %v2160 = vadd.f32 %v2124, %v2125
        %2161 = vadd.xlane.f32.xlu0 %v2160
        %v2162 = vpop.xlane.xlu0 %2161
        %v2163 = vadd.f32 %v2126, %v2127
        %2164 = vadd.xlane.f32.xlu0 %v2163
        %v2165 = vpop.xlane.xlu0 %2164
        %v2166 = vadd.f32 %v2128, %v2129
        %2167 = vadd.xlane.f32.xlu0 %v2166
        %v2168 = vpop.xlane.xlu0 %2167
        %v2169 = vadd.f32 %v2130, %v2131
        %2170 = vadd.xlane.f32.xlu0 %v2169
        %v2171 = vpop.xlane.xlu0 %2170
        %v2172 = vadd.f32 %v2132, %v2133
        %2173 = vadd.xlane.f32.xlu0 %v2172
        %v2174 = vpop.xlane.xlu0 %2173
        %v2175 = vadd.f32 %v2134, %v2135
        %2176 = vadd.xlane.f32.xlu0 %v2175
        %v2177 = vpop.xlane.xlu0 %2176
        %v2178 = vadd.f32 %v2136, %v2137
        %2179 = vadd.xlane.f32.xlu0 %v2178
        %v2180 = vpop.xlane.xlu0 %2179
        %v2181 = vadd.f32 %v2138, %v2139
        %2182 = vadd.xlane.f32.xlu0 %v2181
        %v2183 = vpop.xlane.xlu0 %2182
        %v2184 = vadd.f32 %v2140, %v2141
        %2185 = vadd.xlane.f32.xlu0 %v2184
        %v2186 = vpop.xlane.xlu0 %2185
        %v2187 = vadd.f32 %v2142, %v2143
        %2188 = vadd.xlane.f32.xlu0 %v2187
        %v2189 = vpop.xlane.xlu0 %2188
        %v2190 = vadd.f32 %v2144, %v2145
        %2191 = vadd.xlane.f32.xlu0 %v2190
        %v2192 = vpop.xlane.xlu0 %2191
        %v2193 = vadd.f32 %v2146, %v2147
        %2194 = vadd.xlane.f32.xlu0 %v2193
        %v2195 = vpop.xlane.xlu0 %2194
        %v2196 = vadd.f32 %v2148, %v2149
        %2197 = vadd.xlane.f32.xlu0 %v2196
        %v2198 = vpop.xlane.xlu0 %2197
        %v2215 = vlaneseq
        %v2216 = vshrl.u32 %v2215, 7
        %v2217 = vsub.s32 %v660, %v2216
        %v2218 = vrot.slane %v2153, %v2217
        %v2219 = vlaneseq
        %v2220 = vshrl.u32 %v2219, 7
        %v2221 = vsub.s32 %v665, %v2220
        %v2222 = vrot.slane %v2156, %v2221
        %v2223 = vsel %vm670, %v2222, %v2218
        %v2224 = vlaneseq
        %v2225 = vshrl.u32 %v2224, 7
        %v2226 = vsub.s32 %v672, %v2225
        %v2227 = vrot.slane %v2159, %v2226
        %v2228 = vsel %vm677, %v2227, %v2223
        %v2229 = vlaneseq
        %v2230 = vshrl.u32 %v2229, 7
        %v2231 = vsub.s32 %v679, %v2230
        %v2232 = vrot.slane %v2162, %v2231
        %v2233 = vsel %vm684, %v2232, %v2228
        %v2234 = vlaneseq
        %v2235 = vshrl.u32 %v2234, 7
        %v2236 = vsub.s32 %v686, %v2235
        %v2237 = vrot.slane %v2165, %v2236
        %v2238 = vsel %vm691, %v2237, %v2233
        %v2239 = vlaneseq
        %v2240 = vshrl.u32 %v2239, 7
        %v2241 = vsub.s32 %v693, %v2240
        %v2242 = vrot.slane %v2168, %v2241
        %v2243 = vsel %vm698, %v2242, %v2238
        %v2244 = vlaneseq
        %v2245 = vshrl.u32 %v2244, 7
        %v2246 = vsub.s32 %v700, %v2245
        %v2247 = vrot.slane %v2171, %v2246
        %v2248 = vsel %vm705, %v2247, %v2243
        %v2249 = vlaneseq
        %v2250 = vshrl.u32 %v2249, 7
        %v2251 = vsub.s32 %v707, %v2250
        %v2252 = vrot.slane %v2174, %v2251
        %v2253 = vsel %vm712, %v2252, %v2248
        %v2254 = vlaneseq
        %v2255 = vshrl.u32 %v2254, 7
        %v2256 = vsub.s32 %v714, %v2255
        %v2257 = vrot.slane %v2177, %v2256
        %v2258 = vsel %vm719, %v2257, %v2253
        %v2259 = vlaneseq
        %v2260 = vshrl.u32 %v2259, 7
        %v2261 = vsub.s32 %v721, %v2260
        %v2262 = vrot.slane %v2180, %v2261
        %v2263 = vsel %vm726, %v2262, %v2258
        %v2264 = vlaneseq
        %v2265 = vshrl.u32 %v2264, 7
        %v2266 = vsub.s32 %v728, %v2265
        %v2267 = vrot.slane %v2183, %v2266
        %v2268 = vsel %vm733, %v2267, %v2263
        %v2269 = vlaneseq
        %v2270 = vshrl.u32 %v2269, 7
        %v2271 = vsub.s32 %v735, %v2270
        %v2272 = vrot.slane %v2186, %v2271
        %v2273 = vsel %vm740, %v2272, %v2268
        %v2274 = vlaneseq
        %v2275 = vshrl.u32 %v2274, 7
        %v2276 = vsub.s32 %v742, %v2275
        %v2277 = vrot.slane %v2189, %v2276
        %v2278 = vsel %vm747, %v2277, %v2273
        %v2279 = vlaneseq
        %v2280 = vshrl.u32 %v2279, 7
        %v2281 = vsub.s32 %v749, %v2280
        %v2282 = vrot.slane %v2192, %v2281
        %v2283 = vsel %vm754, %v2282, %v2278
        %v2284 = vlaneseq
        %v2285 = vshrl.u32 %v2284, 7
        %v2286 = vsub.s32 %v756, %v2285
        %v2287 = vrot.slane %v2195, %v2286
        %v2288 = vsel %vm761, %v2287, %v2283
        %v2289 = vlaneseq
        %v2290 = vshrl.u32 %v2289, 7
        %v2291 = vsub.s32 %v763, %v2290
        %v2292 = vrot.slane %v2198, %v2291
        %v2293 = vsel %vm768, %v2292, %v2288
        %v2295 = vadd.f32 %v2150, %v2293
        %2296 = vst [vmem:[#allocation2 + $0x3] sm:$0x1] %v2295
        %v2297 = vld [vmem:[%s219] sm:$0xff]
        %v2298 = vld [vmem:[%s219 + $0x8] sm:$0xff]
        %v2299 = vld [vmem:[%s219 + $0x10] sm:$0xff]
        %v2300 = vld [vmem:[%s219 + $0x18] sm:$0xff]
        %v2301 = vld [vmem:[%s219 + $0x20] sm:$0xff]
        %v2302 = vld [vmem:[%s219 + $0x28] sm:$0xff]
        %v2303 = vld [vmem:[%s219 + $0x30] sm:$0xff]
        %v2304 = vld [vmem:[%s219 + $0x38] sm:$0xff]
        %v2305 = vld [vmem:[%s219 + $0x40] sm:$0xff]
        %v2306 = vld [vmem:[%s219 + $0x48] sm:$0xff]
        %v2307 = vld [vmem:[%s219 + $0x50] sm:$0xff]
        %v2308 = vld [vmem:[%s219 + $0x58] sm:$0xff]
        %v2309 = vld [vmem:[%s219 + $0x60] sm:$0xff]
        %v2310 = vld [vmem:[%s219 + $0x68] sm:$0xff]
        %v2311 = vld [vmem:[%s219 + $0x70] sm:$0xff]
        %v2312 = vld [vmem:[%s219 + $0x78] sm:$0xff]
        %s2313 = scalar_lea.vmem %s213, 32
        %v2314 = vld [vmem:[%s2313] sm:$0xff]
        %v2315 = vld [vmem:[%s225] sm:$0xff]
        %v2316 = vld [vmem:[%s225 + $0x8] sm:$0xff]
        %v2317 = vld [vmem:[%s225 + $0x10] sm:$0xff]
        %v2318 = vld [vmem:[%s225 + $0x18] sm:$0xff]
        %v2319 = vld [vmem:[%s225 + $0x20] sm:$0xff]
        %v2320 = vld [vmem:[%s225 + $0x28] sm:$0xff]
        %v2321 = vld [vmem:[%s225 + $0x30] sm:$0xff]
        %v2322 = vld [vmem:[%s225 + $0x38] sm:$0xff]
        %v2323 = vld [vmem:[%s225 + $0x40] sm:$0xff]
        %v2324 = vld [vmem:[%s225 + $0x48] sm:$0xff]
        %v2325 = vld [vmem:[%s225 + $0x50] sm:$0xff]
        %v2326 = vld [vmem:[%s225 + $0x58] sm:$0xff]
        %v2327 = vld [vmem:[%s225 + $0x60] sm:$0xff]
        %v2328 = vld [vmem:[%s225 + $0x68] sm:$0xff]
        %v2329 = vld [vmem:[%s225 + $0x70] sm:$0xff]
        %v2330 = vld [vmem:[%s225 + $0x78] sm:$0xff]
        %2332 = vset.pattern.permute.xlu0 0
        %2333 = vperm.xlu0 %2332, %v2315
        %v2334 = vpop.permute.xlu0 %2333
        %2337 = vset.pattern.permute.xlu0 0
        %2338 = vperm.xlu0 %2337, %v2316
        %v2339 = vpop.permute.xlu0 %2338
        %2342 = vset.pattern.permute.xlu0 0
        %2343 = vperm.xlu0 %2342, %v2317
        %v2344 = vpop.permute.xlu0 %2343
        %2347 = vset.pattern.permute.xlu0 0
        %2348 = vperm.xlu0 %2347, %v2318
        %v2349 = vpop.permute.xlu0 %2348
        %2352 = vset.pattern.permute.xlu0 0
        %2353 = vperm.xlu0 %2352, %v2319
        %v2354 = vpop.permute.xlu0 %2353
        %2357 = vset.pattern.permute.xlu0 0
        %2358 = vperm.xlu0 %2357, %v2320
        %v2359 = vpop.permute.xlu0 %2358
        %2362 = vset.pattern.permute.xlu0 0
        %2363 = vperm.xlu0 %2362, %v2321
        %v2364 = vpop.permute.xlu0 %2363
        %2367 = vset.pattern.permute.xlu0 0
        %2368 = vperm.xlu0 %2367, %v2322
        %v2369 = vpop.permute.xlu0 %2368
        %2372 = vset.pattern.permute.xlu0 0
        %2373 = vperm.xlu0 %2372, %v2323
        %v2374 = vpop.permute.xlu0 %2373
        %2377 = vset.pattern.permute.xlu0 0
        %2378 = vperm.xlu0 %2377, %v2324
        %v2379 = vpop.permute.xlu0 %2378
        %2382 = vset.pattern.permute.xlu0 0
        %2383 = vperm.xlu0 %2382, %v2325
        %v2384 = vpop.permute.xlu0 %2383
        %2387 = vset.pattern.permute.xlu0 0
        %2388 = vperm.xlu0 %2387, %v2326
        %v2389 = vpop.permute.xlu0 %2388
        %2392 = vset.pattern.permute.xlu0 0
        %2393 = vperm.xlu0 %2392, %v2327
        %v2394 = vpop.permute.xlu0 %2393
        %2397 = vset.pattern.permute.xlu0 0
        %2398 = vperm.xlu0 %2397, %v2328
        %v2399 = vpop.permute.xlu0 %2398
        %2402 = vset.pattern.permute.xlu0 0
        %2403 = vperm.xlu0 %2402, %v2329
        %v2404 = vpop.permute.xlu0 %2403
        %2407 = vset.pattern.permute.xlu0 0
        %2408 = vperm.xlu0 %2407, %v2330
        %v2409 = vpop.permute.xlu0 %2408
        %v2412 = vcombine.high %v2314, %v2314
        %v2414 = vsel %vm347, %v2297, 0
        %v2417 = vsel %vm347, %v2298, 0
        %v2420 = vsel %vm347, %v2299, 0
        %v2423 = vsel %vm347, %v2300, 0
        %v2426 = vsel %vm347, %v2301, 0
        %v2429 = vsel %vm347, %v2302, 0
        %v2432 = vsel %vm347, %v2303, 0
        %v2435 = vsel %vm347, %v2304, 0
        %v2438 = vsel %vm347, %v2305, 0
        %v2441 = vsel %vm347, %v2306, 0
        %v2444 = vsel %vm347, %v2307, 0
        %v2447 = vsel %vm347, %v2308, 0
        %v2450 = vsel %vm347, %v2309, 0
        %v2453 = vsel %vm347, %v2310, 0
        %v2456 = vsel %vm347, %v2311, 0
        %v2459 = vsel %vm347, %v2312, 0
        %v2461 = vsel %vm396, %v2314, 0
        %v2463 = vsel %vm396, %v2412, 0
        %2465 = vmatprep.subr.mxu0 0.0
        %2466 = vmatpush1.msra.mxu0 0.0
        %2467 = vmatprep.subr.mxu0 0.0
        %2468 = vmatpush1.msra.mxu0 0.0
        %2469 = vmatprep.subr.mxu0 0.0
        %2470 = vmatpush1.msra.mxu0 0.0
        %2471 = vmatprep.subr.mxu0 0.0
        %2472 = vmatpush1.msra.mxu0 0.0
        %2473 = vmatprep.subr.mxu0 0.0
        %2474 = vmatpush1.msra.mxu0 0.0
        %2475 = vmatprep.subr.mxu0 0.0
        %2476 = vmatpush1.msra.mxu0 0.0
        %2477 = vmatprep.subr.mxu0 0.0
        %2478 = vmatpush1.msra.mxu0 0.0
        %2479 = vmatprep.subr.mxu0 0.0
        %2480 = vmatpush1.msra.mxu0 0.0
        %2481 = vmatprep.subr.mxu0 0.0
        %2482 = vmatpush1.msra.mxu0 0.0
        %2483 = vmatprep.subr.mxu0 0.0
        %2484 = vmatpush1.msra.mxu0 0.0
        %2485 = vmatprep.subr.mxu0 0.0
        %2486 = vmatpush1.msra.mxu0 0.0
        %2487 = vmatprep.subr.mxu0 0.0
        %2488 = vmatpush1.msra.mxu0 0.0
        %2489 = vmatprep.subr.mxu0 0.0
        %2490 = vmatpush1.msra.mxu0 0.0
        %2491 = vmatprep.subr.mxu0 0.0
        %2492 = vmatpush1.msra.mxu0 0.0
        %2493 = vmatprep.subr.mxu0 0.0
        %2494 = vmatpush1.msra.mxu0 0.0
        %2495 = vmatprep.subr.mxu0 %v2463
        %2496 = vmatpush1.msra.mxu0 %v2461
        %2497 = vmatprep.subr.mxu0 0.0
        %2498 = vmatpush2.msra.mxu0 0.0
        %2499 = vmatprep.subr.mxu0 0.0
        %2500 = vmatpush2.msra.mxu0 0.0
        %2501 = vmatprep.subr.mxu0 0.0
        %2502 = vmatpush2.msra.mxu0 0.0
        %2503 = vmatprep.subr.mxu0 0.0
        %2504 = vmatpush2.msra.mxu0 0.0
        %2505 = vmatprep.subr.mxu0 0.0
        %2506 = vmatpush2.msra.mxu0 0.0
        %2507 = vmatprep.subr.mxu0 0.0
        %2508 = vmatpush2.msra.mxu0 0.0
        %2509 = vmatprep.subr.mxu0 0.0
        %2510 = vmatpush2.msra.mxu0 0.0
        %2511 = vmatprep.subr.mxu0 0.0
        %2512 = vmatpush2.msra.mxu0 0.0
        %2513 = vmatprep.subr.mxu0 0.0
        %2514 = vmatpush2.msra.mxu0 0.0
        %2515 = vmatprep.subr.mxu0 0.0
        %2516 = vmatpush2.msra.mxu0 0.0
        %2517 = vmatprep.subr.mxu0 0.0
        %2518 = vmatpush2.msra.mxu0 0.0
        %2519 = vmatprep.subr.mxu0 0.0
        %2520 = vmatpush2.msra.mxu0 0.0
        %2521 = vmatprep.subr.mxu0 0.0
        %2522 = vmatpush2.msra.mxu0 0.0
        %2523 = vmatprep.subr.mxu0 0.0
        %2524 = vmatpush2.msra.mxu0 0.0
        %2525 = vmatprep.subr.mxu0 0.0
        %2526 = vmatpush2.msra.mxu0 0.0
        %2527 = vmatprep.subr.mxu0 0.0
        %2528 = vmatpush2.msra.mxu0 0.0
        %2529 = vmatprep.mubr.f32.mxu0 0.0
        %2530 = vmatmul.mubr.f32.gmra.mxu0 %v2414
        %v2531 = vpop.f32.mrf.mxu0
        %v2532 = vadd.f32 %v2334, %v2531
        %v2533 = vpop.f32.mrf.mxu0
        %v2534 = vadd.f32 %v2334, %v2533
        %2535 = vmatprep.mubr.f32.mxu0 0.0
        %2536 = vmatmul.mubr.f32.gmra.mxu0 %v2417
        %v2537 = vpop.f32.mrf.mxu0
        %v2538 = vadd.f32 %v2339, %v2537
        %v2539 = vpop.f32.mrf.mxu0
        %v2540 = vadd.f32 %v2339, %v2539
        %2541 = vmatprep.mubr.f32.mxu0 0.0
        %2542 = vmatmul.mubr.f32.gmra.mxu0 %v2420
        %v2543 = vpop.f32.mrf.mxu0
        %v2544 = vadd.f32 %v2344, %v2543
        %v2545 = vpop.f32.mrf.mxu0
        %v2546 = vadd.f32 %v2344, %v2545
        %2547 = vmatprep.mubr.f32.mxu0 0.0
        %2548 = vmatmul.mubr.f32.gmra.mxu0 %v2423
        %v2549 = vpop.f32.mrf.mxu0
        %v2550 = vadd.f32 %v2349, %v2549
        %v2551 = vpop.f32.mrf.mxu0
        %v2552 = vadd.f32 %v2349, %v2551
        %2553 = vmatprep.mubr.f32.mxu0 0.0
        %2554 = vmatmul.mubr.f32.gmra.mxu0 %v2426
        %v2555 = vpop.f32.mrf.mxu0
        %v2556 = vadd.f32 %v2354, %v2555
        %v2557 = vpop.f32.mrf.mxu0
        %v2558 = vadd.f32 %v2354, %v2557
        %2559 = vmatprep.mubr.f32.mxu0 0.0
        %2560 = vmatmul.mubr.f32.gmra.mxu0 %v2429
        %v2561 = vpop.f32.mrf.mxu0
        %v2562 = vadd.f32 %v2359, %v2561
        %v2563 = vpop.f32.mrf.mxu0
        %v2564 = vadd.f32 %v2359, %v2563
        %2565 = vmatprep.mubr.f32.mxu0 0.0
        %2566 = vmatmul.mubr.f32.gmra.mxu0 %v2432
        %v2567 = vpop.f32.mrf.mxu0
        %v2568 = vadd.f32 %v2364, %v2567
        %v2569 = vpop.f32.mrf.mxu0
        %v2570 = vadd.f32 %v2364, %v2569
        %2571 = vmatprep.mubr.f32.mxu0 0.0
        %2572 = vmatmul.mubr.f32.gmra.mxu0 %v2435
        %v2573 = vpop.f32.mrf.mxu0
        %v2574 = vadd.f32 %v2369, %v2573
        %v2575 = vpop.f32.mrf.mxu0
        %v2576 = vadd.f32 %v2369, %v2575
        %2577 = vmatprep.mubr.f32.mxu0 0.0
        %2578 = vmatmul.mubr.f32.gmra.mxu0 %v2438
        %v2579 = vpop.f32.mrf.mxu0
        %v2580 = vadd.f32 %v2374, %v2579
        %v2581 = vpop.f32.mrf.mxu0
        %v2582 = vadd.f32 %v2374, %v2581
        %2583 = vmatprep.mubr.f32.mxu0 0.0
        %2584 = vmatmul.mubr.f32.gmra.mxu0 %v2441
        %v2585 = vpop.f32.mrf.mxu0
        %v2586 = vadd.f32 %v2379, %v2585
        %v2587 = vpop.f32.mrf.mxu0
        %v2588 = vadd.f32 %v2379, %v2587
        %2589 = vmatprep.mubr.f32.mxu0 0.0
        %2590 = vmatmul.mubr.f32.gmra.mxu0 %v2444
        %v2591 = vpop.f32.mrf.mxu0
        %v2592 = vadd.f32 %v2384, %v2591
        %v2593 = vpop.f32.mrf.mxu0
        %v2594 = vadd.f32 %v2384, %v2593
        %2595 = vmatprep.mubr.f32.mxu0 0.0
        %2596 = vmatmul.mubr.f32.gmra.mxu0 %v2447
        %v2597 = vpop.f32.mrf.mxu0
        %v2598 = vadd.f32 %v2389, %v2597
        %v2599 = vpop.f32.mrf.mxu0
        %v2600 = vadd.f32 %v2389, %v2599
        %2601 = vmatprep.mubr.f32.mxu0 0.0
        %2602 = vmatmul.mubr.f32.gmra.mxu0 %v2450
        %v2603 = vpop.f32.mrf.mxu0
        %v2604 = vadd.f32 %v2394, %v2603
        %v2605 = vpop.f32.mrf.mxu0
        %v2606 = vadd.f32 %v2394, %v2605
        %2607 = vmatprep.mubr.f32.mxu0 0.0
        %2608 = vmatmul.mubr.f32.gmra.mxu0 %v2453
        %v2609 = vpop.f32.mrf.mxu0
        %v2610 = vadd.f32 %v2399, %v2609
        %v2611 = vpop.f32.mrf.mxu0
        %v2612 = vadd.f32 %v2399, %v2611
        %2613 = vmatprep.mubr.f32.mxu0 0.0
        %2614 = vmatmul.mubr.f32.gmra.mxu0 %v2456
        %v2615 = vpop.f32.mrf.mxu0
        %v2616 = vadd.f32 %v2404, %v2615
        %v2617 = vpop.f32.mrf.mxu0
        %v2618 = vadd.f32 %v2404, %v2617
        %2619 = vmatprep.mubr.f32.mxu0 0.0
        %2620 = vmatmul.mubr.f32.gmra.mxu0 %v2459
        %v2621 = vpop.f32.mrf.mxu0
        %v2622 = vadd.f32 %v2409, %v2621
        %v2623 = vpop.f32.mrf.mxu0
        %v2624 = vadd.f32 %v2409, %v2623
        %2625 = vdwg.mxu0
        %v2626 = vmax.f32 %v2532, 0.0
        %v2627 = vmax.f32 %v2534, 0.0
        %v2628 = vmax.f32 %v2538, 0.0
        %v2629 = vmax.f32 %v2540, 0.0
        %v2630 = vmax.f32 %v2544, 0.0
        %v2631 = vmax.f32 %v2546, 0.0
        %v2632 = vmax.f32 %v2550, 0.0
        %v2633 = vmax.f32 %v2552, 0.0
        %v2634 = vmax.f32 %v2556, 0.0
        %v2635 = vmax.f32 %v2558, 0.0
        %v2636 = vmax.f32 %v2562, 0.0
        %v2637 = vmax.f32 %v2564, 0.0
        %v2638 = vmax.f32 %v2568, 0.0
        %v2639 = vmax.f32 %v2570, 0.0
        %v2640 = vmax.f32 %v2574, 0.0
        %v2641 = vmax.f32 %v2576, 0.0
        %v2642 = vmax.f32 %v2580, 0.0
        %v2643 = vmax.f32 %v2582, 0.0
        %v2644 = vmax.f32 %v2586, 0.0
        %v2645 = vmax.f32 %v2588, 0.0
        %v2646 = vmax.f32 %v2592, 0.0
        %v2647 = vmax.f32 %v2594, 0.0
        %v2648 = vmax.f32 %v2598, 0.0
        %v2649 = vmax.f32 %v2600, 0.0
        %v2650 = vmax.f32 %v2604, 0.0
        %v2651 = vmax.f32 %v2606, 0.0
        %v2652 = vmax.f32 %v2610, 0.0
        %v2653 = vmax.f32 %v2612, 0.0
        %v2654 = vmax.f32 %v2616, 0.0
        %v2655 = vmax.f32 %v2618, 0.0
        %v2656 = vmax.f32 %v2622, 0.0
        %v2657 = vmax.f32 %v2624, 0.0
        %v2658 = vld [vmem:[#allocation2 + $0x4] sm:$0x1]
        %v2659 = vadd.f32 %v2626, %v2627
        %2660 = vadd.xlane.f32.xlu0 %v2659
        %v2661 = vpop.xlane.xlu0 %2660
        %v2662 = vadd.f32 %v2628, %v2629
        %2663 = vadd.xlane.f32.xlu0 %v2662
        %v2664 = vpop.xlane.xlu0 %2663
        %v2665 = vadd.f32 %v2630, %v2631
        %2666 = vadd.xlane.f32.xlu0 %v2665
        %v2667 = vpop.xlane.xlu0 %2666
        %v2668 = vadd.f32 %v2632, %v2633
        %2669 = vadd.xlane.f32.xlu0 %v2668
        %v2670 = vpop.xlane.xlu0 %2669
        %v2671 = vadd.f32 %v2634, %v2635
        %2672 = vadd.xlane.f32.xlu0 %v2671
        %v2673 = vpop.xlane.xlu0 %2672
        %v2674 = vadd.f32 %v2636, %v2637
        %2675 = vadd.xlane.f32.xlu0 %v2674
        %v2676 = vpop.xlane.xlu0 %2675
        %v2677 = vadd.f32 %v2638, %v2639
        %2678 = vadd.xlane.f32.xlu0 %v2677
        %v2679 = vpop.xlane.xlu0 %2678
        %v2680 = vadd.f32 %v2640, %v2641
        %2681 = vadd.xlane.f32.xlu0 %v2680
        %v2682 = vpop.xlane.xlu0 %2681
        %v2683 = vadd.f32 %v2642, %v2643
        %2684 = vadd.xlane.f32.xlu0 %v2683
        %v2685 = vpop.xlane.xlu0 %2684
        %v2686 = vadd.f32 %v2644, %v2645
        %2687 = vadd.xlane.f32.xlu0 %v2686
        %v2688 = vpop.xlane.xlu0 %2687
        %v2689 = vadd.f32 %v2646, %v2647
        %2690 = vadd.xlane.f32.xlu0 %v2689
        %v2691 = vpop.xlane.xlu0 %2690
        %v2692 = vadd.f32 %v2648, %v2649
        %2693 = vadd.xlane.f32.xlu0 %v2692
        %v2694 = vpop.xlane.xlu0 %2693
        %v2695 = vadd.f32 %v2650, %v2651
        %2696 = vadd.xlane.f32.xlu0 %v2695
        %v2697 = vpop.xlane.xlu0 %2696
        %v2698 = vadd.f32 %v2652, %v2653
        %2699 = vadd.xlane.f32.xlu0 %v2698
        %v2700 = vpop.xlane.xlu0 %2699
        %v2701 = vadd.f32 %v2654, %v2655
        %2702 = vadd.xlane.f32.xlu0 %v2701
        %v2703 = vpop.xlane.xlu0 %2702
        %v2704 = vadd.f32 %v2656, %v2657
        %2705 = vadd.xlane.f32.xlu0 %v2704
        %v2706 = vpop.xlane.xlu0 %2705
        %v2723 = vlaneseq
        %v2724 = vshrl.u32 %v2723, 7
        %v2725 = vsub.s32 %v660, %v2724
        %v2726 = vrot.slane %v2661, %v2725
        %v2727 = vlaneseq
        %v2728 = vshrl.u32 %v2727, 7
        %v2729 = vsub.s32 %v665, %v2728
        %v2730 = vrot.slane %v2664, %v2729
        %v2731 = vsel %vm670, %v2730, %v2726
        %v2732 = vlaneseq
        %v2733 = vshrl.u32 %v2732, 7
        %v2734 = vsub.s32 %v672, %v2733
        %v2735 = vrot.slane %v2667, %v2734
        %v2736 = vsel %vm677, %v2735, %v2731
        %v2737 = vlaneseq
        %v2738 = vshrl.u32 %v2737, 7
        %v2739 = vsub.s32 %v679, %v2738
        %v2740 = vrot.slane %v2670, %v2739
        %v2741 = vsel %vm684, %v2740, %v2736
        %v2742 = vlaneseq
        %v2743 = vshrl.u32 %v2742, 7
        %v2744 = vsub.s32 %v686, %v2743
        %v2745 = vrot.slane %v2673, %v2744
        %v2746 = vsel %vm691, %v2745, %v2741
        %v2747 = vlaneseq
        %v2748 = vshrl.u32 %v2747, 7
        %v2749 = vsub.s32 %v693, %v2748
        %v2750 = vrot.slane %v2676, %v2749
        %v2751 = vsel %vm698, %v2750, %v2746
        %v2752 = vlaneseq
        %v2753 = vshrl.u32 %v2752, 7
        %v2754 = vsub.s32 %v700, %v2753
        %v2755 = vrot.slane %v2679, %v2754
        %v2756 = vsel %vm705, %v2755, %v2751
        %v2757 = vlaneseq
        %v2758 = vshrl.u32 %v2757, 7
        %v2759 = vsub.s32 %v707, %v2758
        %v2760 = vrot.slane %v2682, %v2759
        %v2761 = vsel %vm712, %v2760, %v2756
        %v2762 = vlaneseq
        %v2763 = vshrl.u32 %v2762, 7
        %v2764 = vsub.s32 %v714, %v2763
        %v2765 = vrot.slane %v2685, %v2764
        %v2766 = vsel %vm719, %v2765, %v2761
        %v2767 = vlaneseq
        %v2768 = vshrl.u32 %v2767, 7
        %v2769 = vsub.s32 %v721, %v2768
        %v2770 = vrot.slane %v2688, %v2769
        %v2771 = vsel %vm726, %v2770, %v2766
        %v2772 = vlaneseq
        %v2773 = vshrl.u32 %v2772, 7
        %v2774 = vsub.s32 %v728, %v2773
        %v2775 = vrot.slane %v2691, %v2774
        %v2776 = vsel %vm733, %v2775, %v2771
        %v2777 = vlaneseq
        %v2778 = vshrl.u32 %v2777, 7
        %v2779 = vsub.s32 %v735, %v2778
        %v2780 = vrot.slane %v2694, %v2779
        %v2781 = vsel %vm740, %v2780, %v2776
        %v2782 = vlaneseq
        %v2783 = vshrl.u32 %v2782, 7
        %v2784 = vsub.s32 %v742, %v2783
        %v2785 = vrot.slane %v2697, %v2784
        %v2786 = vsel %vm747, %v2785, %v2781
        %v2787 = vlaneseq
        %v2788 = vshrl.u32 %v2787, 7
        %v2789 = vsub.s32 %v749, %v2788
        %v2790 = vrot.slane %v2700, %v2789
        %v2791 = vsel %vm754, %v2790, %v2786
        %v2792 = vlaneseq
        %v2793 = vshrl.u32 %v2792, 7
        %v2794 = vsub.s32 %v756, %v2793
        %v2795 = vrot.slane %v2703, %v2794
        %v2796 = vsel %vm761, %v2795, %v2791
        %v2797 = vlaneseq
        %v2798 = vshrl.u32 %v2797, 7
        %v2799 = vsub.s32 %v763, %v2798
        %v2800 = vrot.slane %v2706, %v2799
        %v2801 = vsel %vm768, %v2800, %v2796
        %v2803 = vadd.f32 %v2658, %v2801
        %2804 = vst [vmem:[#allocation2 + $0x4] sm:$0x1] %v2803
        %v2805 = vld [vmem:[%s219] sm:$0xff]
        %v2806 = vld [vmem:[%s219 + $0x8] sm:$0xff]
        %v2807 = vld [vmem:[%s219 + $0x10] sm:$0xff]
        %v2808 = vld [vmem:[%s219 + $0x18] sm:$0xff]
        %v2809 = vld [vmem:[%s219 + $0x20] sm:$0xff]
        %v2810 = vld [vmem:[%s219 + $0x28] sm:$0xff]
        %v2811 = vld [vmem:[%s219 + $0x30] sm:$0xff]
        %v2812 = vld [vmem:[%s219 + $0x38] sm:$0xff]
        %v2813 = vld [vmem:[%s219 + $0x40] sm:$0xff]
        %v2814 = vld [vmem:[%s219 + $0x48] sm:$0xff]
        %v2815 = vld [vmem:[%s219 + $0x50] sm:$0xff]
        %v2816 = vld [vmem:[%s219 + $0x58] sm:$0xff]
        %v2817 = vld [vmem:[%s219 + $0x60] sm:$0xff]
        %v2818 = vld [vmem:[%s219 + $0x68] sm:$0xff]
        %v2819 = vld [vmem:[%s219 + $0x70] sm:$0xff]
        %v2820 = vld [vmem:[%s219 + $0x78] sm:$0xff]
        %s2821 = scalar_lea.vmem %s213, 40
        %v2822 = vld [vmem:[%s2821] sm:$0xff]
        %v2823 = vld [vmem:[%s225] sm:$0xff]
        %v2824 = vld [vmem:[%s225 + $0x8] sm:$0xff]
        %v2825 = vld [vmem:[%s225 + $0x10] sm:$0xff]
        %v2826 = vld [vmem:[%s225 + $0x18] sm:$0xff]
        %v2827 = vld [vmem:[%s225 + $0x20] sm:$0xff]
        %v2828 = vld [vmem:[%s225 + $0x28] sm:$0xff]
        %v2829 = vld [vmem:[%s225 + $0x30] sm:$0xff]
        %v2830 = vld [vmem:[%s225 + $0x38] sm:$0xff]
        %v2831 = vld [vmem:[%s225 + $0x40] sm:$0xff]
        %v2832 = vld [vmem:[%s225 + $0x48] sm:$0xff]
        %v2833 = vld [vmem:[%s225 + $0x50] sm:$0xff]
        %v2834 = vld [vmem:[%s225 + $0x58] sm:$0xff]
        %v2835 = vld [vmem:[%s225 + $0x60] sm:$0xff]
        %v2836 = vld [vmem:[%s225 + $0x68] sm:$0xff]
        %v2837 = vld [vmem:[%s225 + $0x70] sm:$0xff]
        %v2838 = vld [vmem:[%s225 + $0x78] sm:$0xff]
        %2840 = vset.pattern.permute.xlu0 0
        %2841 = vperm.xlu0 %2840, %v2823
        %v2842 = vpop.permute.xlu0 %2841
        %2845 = vset.pattern.permute.xlu0 0
        %2846 = vperm.xlu0 %2845, %v2824
        %v2847 = vpop.permute.xlu0 %2846
        %2850 = vset.pattern.permute.xlu0 0
        %2851 = vperm.xlu0 %2850, %v2825
        %v2852 = vpop.permute.xlu0 %2851
        %2855 = vset.pattern.permute.xlu0 0
        %2856 = vperm.xlu0 %2855, %v2826
        %v2857 = vpop.permute.xlu0 %2856
        %2860 = vset.pattern.permute.xlu0 0
        %2861 = vperm.xlu0 %2860, %v2827
        %v2862 = vpop.permute.xlu0 %2861
        %2865 = vset.pattern.permute.xlu0 0
        %2866 = vperm.xlu0 %2865, %v2828
        %v2867 = vpop.permute.xlu0 %2866
        %2870 = vset.pattern.permute.xlu0 0
        %2871 = vperm.xlu0 %2870, %v2829
        %v2872 = vpop.permute.xlu0 %2871
        %2875 = vset.pattern.permute.xlu0 0
        %2876 = vperm.xlu0 %2875, %v2830
        %v2877 = vpop.permute.xlu0 %2876
        %2880 = vset.pattern.permute.xlu0 0
        %2881 = vperm.xlu0 %2880, %v2831
        %v2882 = vpop.permute.xlu0 %2881
        %2885 = vset.pattern.permute.xlu0 0
        %2886 = vperm.xlu0 %2885, %v2832
        %v2887 = vpop.permute.xlu0 %2886
        %2890 = vset.pattern.permute.xlu0 0
        %2891 = vperm.xlu0 %2890, %v2833
        %v2892 = vpop.permute.xlu0 %2891
        %2895 = vset.pattern.permute.xlu0 0
        %2896 = vperm.xlu0 %2895, %v2834
        %v2897 = vpop.permute.xlu0 %2896
        %2900 = vset.pattern.permute.xlu0 0
        %2901 = vperm.xlu0 %2900, %v2835
        %v2902 = vpop.permute.xlu0 %2901
        %2905 = vset.pattern.permute.xlu0 0
        %2906 = vperm.xlu0 %2905, %v2836
        %v2907 = vpop.permute.xlu0 %2906
        %2910 = vset.pattern.permute.xlu0 0
        %2911 = vperm.xlu0 %2910, %v2837
        %v2912 = vpop.permute.xlu0 %2911
        %2915 = vset.pattern.permute.xlu0 0
        %2916 = vperm.xlu0 %2915, %v2838
        %v2917 = vpop.permute.xlu0 %2916
        %v2920 = vcombine.high %v2822, %v2822
        %v2922 = vsel %vm347, %v2805, 0
        %v2925 = vsel %vm347, %v2806, 0
        %v2928 = vsel %vm347, %v2807, 0
        %v2931 = vsel %vm347, %v2808, 0
        %v2934 = vsel %vm347, %v2809, 0
        %v2937 = vsel %vm347, %v2810, 0
        %v2940 = vsel %vm347, %v2811, 0
        %v2943 = vsel %vm347, %v2812, 0
        %v2946 = vsel %vm347, %v2813, 0
        %v2949 = vsel %vm347, %v2814, 0
        %v2952 = vsel %vm347, %v2815, 0
        %v2955 = vsel %vm347, %v2816, 0
        %v2958 = vsel %vm347, %v2817, 0
        %v2961 = vsel %vm347, %v2818, 0
        %v2964 = vsel %vm347, %v2819, 0
        %v2967 = vsel %vm347, %v2820, 0
        %v2969 = vsel %vm396, %v2822, 0
        %v2971 = vsel %vm396, %v2920, 0
        %2973 = vmatprep.subr.mxu0 0.0
        %2974 = vmatpush1.msra.mxu0 0.0
        %2975 = vmatprep.subr.mxu0 0.0
        %2976 = vmatpush1.msra.mxu0 0.0
        %2977 = vmatprep.subr.mxu0 0.0
        %2978 = vmatpush1.msra.mxu0 0.0
        %2979 = vmatprep.subr.mxu0 0.0
        %2980 = vmatpush1.msra.mxu0 0.0
        %2981 = vmatprep.subr.mxu0 0.0
        %2982 = vmatpush1.msra.mxu0 0.0
        %2983 = vmatprep.subr.mxu0 0.0
        %2984 = vmatpush1.msra.mxu0 0.0
        %2985 = vmatprep.subr.mxu0 0.0
        %2986 = vmatpush1.msra.mxu0 0.0
        %2987 = vmatprep.subr.mxu0 0.0
        %2988 = vmatpush1.msra.mxu0 0.0
        %2989 = vmatprep.subr.mxu0 0.0
        %2990 = vmatpush1.msra.mxu0 0.0
        %2991 = vmatprep.subr.mxu0 0.0
        %2992 = vmatpush1.msra.mxu0 0.0
        %2993 = vmatprep.subr.mxu0 0.0
        %2994 = vmatpush1.msra.mxu0 0.0
        %2995 = vmatprep.subr.mxu0 0.0
        %2996 = vmatpush1.msra.mxu0 0.0
        %2997 = vmatprep.subr.mxu0 0.0
        %2998 = vmatpush1.msra.mxu0 0.0
        %2999 = vmatprep.subr.mxu0 0.0
        %3000 = vmatpush1.msra.mxu0 0.0
        %3001 = vmatprep.subr.mxu0 0.0
        %3002 = vmatpush1.msra.mxu0 0.0
        %3003 = vmatprep.subr.mxu0 %v2971
        %3004 = vmatpush1.msra.mxu0 %v2969
        %3005 = vmatprep.subr.mxu0 0.0
        %3006 = vmatpush2.msra.mxu0 0.0
        %3007 = vmatprep.subr.mxu0 0.0
        %3008 = vmatpush2.msra.mxu0 0.0
        %3009 = vmatprep.subr.mxu0 0.0
        %3010 = vmatpush2.msra.mxu0 0.0
        %3011 = vmatprep.subr.mxu0 0.0
        %3012 = vmatpush2.msra.mxu0 0.0
        %3013 = vmatprep.subr.mxu0 0.0
        %3014 = vmatpush2.msra.mxu0 0.0
        %3015 = vmatprep.subr.mxu0 0.0
        %3016 = vmatpush2.msra.mxu0 0.0
        %3017 = vmatprep.subr.mxu0 0.0
        %3018 = vmatpush2.msra.mxu0 0.0
        %3019 = vmatprep.subr.mxu0 0.0
        %3020 = vmatpush2.msra.mxu0 0.0
        %3021 = vmatprep.subr.mxu0 0.0
        %3022 = vmatpush2.msra.mxu0 0.0
        %3023 = vmatprep.subr.mxu0 0.0
        %3024 = vmatpush2.msra.mxu0 0.0
        %3025 = vmatprep.subr.mxu0 0.0
        %3026 = vmatpush2.msra.mxu0 0.0
        %3027 = vmatprep.subr.mxu0 0.0
        %3028 = vmatpush2.msra.mxu0 0.0
        %3029 = vmatprep.subr.mxu0 0.0
        %3030 = vmatpush2.msra.mxu0 0.0
        %3031 = vmatprep.subr.mxu0 0.0
        %3032 = vmatpush2.msra.mxu0 0.0
        %3033 = vmatprep.subr.mxu0 0.0
        %3034 = vmatpush2.msra.mxu0 0.0
        %3035 = vmatprep.subr.mxu0 0.0
        %3036 = vmatpush2.msra.mxu0 0.0
        %3037 = vmatprep.mubr.f32.mxu0 0.0
        %3038 = vmatmul.mubr.f32.gmra.mxu0 %v2922
        %v3039 = vpop.f32.mrf.mxu0
        %v3040 = vadd.f32 %v2842, %v3039
        %v3041 = vpop.f32.mrf.mxu0
        %v3042 = vadd.f32 %v2842, %v3041
        %3043 = vmatprep.mubr.f32.mxu0 0.0
        %3044 = vmatmul.mubr.f32.gmra.mxu0 %v2925
        %v3045 = vpop.f32.mrf.mxu0
        %v3046 = vadd.f32 %v2847, %v3045
        %v3047 = vpop.f32.mrf.mxu0
        %v3048 = vadd.f32 %v2847, %v3047
        %3049 = vmatprep.mubr.f32.mxu0 0.0
        %3050 = vmatmul.mubr.f32.gmra.mxu0 %v2928
        %v3051 = vpop.f32.mrf.mxu0
        %v3052 = vadd.f32 %v2852, %v3051
        %v3053 = vpop.f32.mrf.mxu0
        %v3054 = vadd.f32 %v2852, %v3053
        %3055 = vmatprep.mubr.f32.mxu0 0.0
        %3056 = vmatmul.mubr.f32.gmra.mxu0 %v2931
        %v3057 = vpop.f32.mrf.mxu0
        %v3058 = vadd.f32 %v2857, %v3057
        %v3059 = vpop.f32.mrf.mxu0
        %v3060 = vadd.f32 %v2857, %v3059
        %3061 = vmatprep.mubr.f32.mxu0 0.0
        %3062 = vmatmul.mubr.f32.gmra.mxu0 %v2934
        %v3063 = vpop.f32.mrf.mxu0
        %v3064 = vadd.f32 %v2862, %v3063
        %v3065 = vpop.f32.mrf.mxu0
        %v3066 = vadd.f32 %v2862, %v3065
        %3067 = vmatprep.mubr.f32.mxu0 0.0
        %3068 = vmatmul.mubr.f32.gmra.mxu0 %v2937
        %v3069 = vpop.f32.mrf.mxu0
        %v3070 = vadd.f32 %v2867, %v3069
        %v3071 = vpop.f32.mrf.mxu0
        %v3072 = vadd.f32 %v2867, %v3071
        %3073 = vmatprep.mubr.f32.mxu0 0.0
        %3074 = vmatmul.mubr.f32.gmra.mxu0 %v2940
        %v3075 = vpop.f32.mrf.mxu0
        %v3076 = vadd.f32 %v2872, %v3075
        %v3077 = vpop.f32.mrf.mxu0
        %v3078 = vadd.f32 %v2872, %v3077
        %3079 = vmatprep.mubr.f32.mxu0 0.0
        %3080 = vmatmul.mubr.f32.gmra.mxu0 %v2943
        %v3081 = vpop.f32.mrf.mxu0
        %v3082 = vadd.f32 %v2877, %v3081
        %v3083 = vpop.f32.mrf.mxu0
        %v3084 = vadd.f32 %v2877, %v3083
        %3085 = vmatprep.mubr.f32.mxu0 0.0
        %3086 = vmatmul.mubr.f32.gmra.mxu0 %v2946
        %v3087 = vpop.f32.mrf.mxu0
        %v3088 = vadd.f32 %v2882, %v3087
        %v3089 = vpop.f32.mrf.mxu0
        %v3090 = vadd.f32 %v2882, %v3089
        %3091 = vmatprep.mubr.f32.mxu0 0.0
        %3092 = vmatmul.mubr.f32.gmra.mxu0 %v2949
        %v3093 = vpop.f32.mrf.mxu0
        %v3094 = vadd.f32 %v2887, %v3093
        %v3095 = vpop.f32.mrf.mxu0
        %v3096 = vadd.f32 %v2887, %v3095
        %3097 = vmatprep.mubr.f32.mxu0 0.0
        %3098 = vmatmul.mubr.f32.gmra.mxu0 %v2952
        %v3099 = vpop.f32.mrf.mxu0
        %v3100 = vadd.f32 %v2892, %v3099
        %v3101 = vpop.f32.mrf.mxu0
        %v3102 = vadd.f32 %v2892, %v3101
        %3103 = vmatprep.mubr.f32.mxu0 0.0
        %3104 = vmatmul.mubr.f32.gmra.mxu0 %v2955
        %v3105 = vpop.f32.mrf.mxu0
        %v3106 = vadd.f32 %v2897, %v3105
        %v3107 = vpop.f32.mrf.mxu0
        %v3108 = vadd.f32 %v2897, %v3107
        %3109 = vmatprep.mubr.f32.mxu0 0.0
        %3110 = vmatmul.mubr.f32.gmra.mxu0 %v2958
        %v3111 = vpop.f32.mrf.mxu0
        %v3112 = vadd.f32 %v2902, %v3111
        %v3113 = vpop.f32.mrf.mxu0
        %v3114 = vadd.f32 %v2902, %v3113
        %3115 = vmatprep.mubr.f32.mxu0 0.0
        %3116 = vmatmul.mubr.f32.gmra.mxu0 %v2961
        %v3117 = vpop.f32.mrf.mxu0
        %v3118 = vadd.f32 %v2907, %v3117
        %v3119 = vpop.f32.mrf.mxu0
        %v3120 = vadd.f32 %v2907, %v3119
        %3121 = vmatprep.mubr.f32.mxu0 0.0
        %3122 = vmatmul.mubr.f32.gmra.mxu0 %v2964
        %v3123 = vpop.f32.mrf.mxu0
        %v3124 = vadd.f32 %v2912, %v3123
        %v3125 = vpop.f32.mrf.mxu0
        %v3126 = vadd.f32 %v2912, %v3125
        %3127 = vmatprep.mubr.f32.mxu0 0.0
        %3128 = vmatmul.mubr.f32.gmra.mxu0 %v2967
        %v3129 = vpop.f32.mrf.mxu0
        %v3130 = vadd.f32 %v2917, %v3129
        %v3131 = vpop.f32.mrf.mxu0
        %v3132 = vadd.f32 %v2917, %v3131
        %3133 = vdwg.mxu0
        %v3134 = vmax.f32 %v3040, 0.0
        %v3135 = vmax.f32 %v3042, 0.0
        %v3136 = vmax.f32 %v3046, 0.0
        %v3137 = vmax.f32 %v3048, 0.0
        %v3138 = vmax.f32 %v3052, 0.0
        %v3139 = vmax.f32 %v3054, 0.0
        %v3140 = vmax.f32 %v3058, 0.0
        %v3141 = vmax.f32 %v3060, 0.0
        %v3142 = vmax.f32 %v3064, 0.0
        %v3143 = vmax.f32 %v3066, 0.0
        %v3144 = vmax.f32 %v3070, 0.0
        %v3145 = vmax.f32 %v3072, 0.0
        %v3146 = vmax.f32 %v3076, 0.0
        %v3147 = vmax.f32 %v3078, 0.0
        %v3148 = vmax.f32 %v3082, 0.0
        %v3149 = vmax.f32 %v3084, 0.0
        %v3150 = vmax.f32 %v3088, 0.0
        %v3151 = vmax.f32 %v3090, 0.0
        %v3152 = vmax.f32 %v3094, 0.0
        %v3153 = vmax.f32 %v3096, 0.0
        %v3154 = vmax.f32 %v3100, 0.0
        %v3155 = vmax.f32 %v3102, 0.0
        %v3156 = vmax.f32 %v3106, 0.0
        %v3157 = vmax.f32 %v3108, 0.0
        %v3158 = vmax.f32 %v3112, 0.0
        %v3159 = vmax.f32 %v3114, 0.0
        %v3160 = vmax.f32 %v3118, 0.0
        %v3161 = vmax.f32 %v3120, 0.0
        %v3162 = vmax.f32 %v3124, 0.0
        %v3163 = vmax.f32 %v3126, 0.0
        %v3164 = vmax.f32 %v3130, 0.0
        %v3165 = vmax.f32 %v3132, 0.0
        %v3166 = vld [vmem:[#allocation2 + $0x5] sm:$0x1]
        %v3167 = vadd.f32 %v3134, %v3135
        %3168 = vadd.xlane.f32.xlu0 %v3167
        %v3169 = vpop.xlane.xlu0 %3168
        %v3170 = vadd.f32 %v3136, %v3137
        %3171 = vadd.xlane.f32.xlu0 %v3170
        %v3172 = vpop.xlane.xlu0 %3171
        %v3173 = vadd.f32 %v3138, %v3139
        %3174 = vadd.xlane.f32.xlu0 %v3173
        %v3175 = vpop.xlane.xlu0 %3174
        %v3176 = vadd.f32 %v3140, %v3141
        %3177 = vadd.xlane.f32.xlu0 %v3176
        %v3178 = vpop.xlane.xlu0 %3177
        %v3179 = vadd.f32 %v3142, %v3143
        %3180 = vadd.xlane.f32.xlu0 %v3179
        %v3181 = vpop.xlane.xlu0 %3180
        %v3182 = vadd.f32 %v3144, %v3145
        %3183 = vadd.xlane.f32.xlu0 %v3182
        %v3184 = vpop.xlane.xlu0 %3183
        %v3185 = vadd.f32 %v3146, %v3147
        %3186 = vadd.xlane.f32.xlu0 %v3185
        %v3187 = vpop.xlane.xlu0 %3186
        %v3188 = vadd.f32 %v3148, %v3149
        %3189 = vadd.xlane.f32.xlu0 %v3188
        %v3190 = vpop.xlane.xlu0 %3189
        %v3191 = vadd.f32 %v3150, %v3151
        %3192 = vadd.xlane.f32.xlu0 %v3191
        %v3193 = vpop.xlane.xlu0 %3192
        %v3194 = vadd.f32 %v3152, %v3153
        %3195 = vadd.xlane.f32.xlu0 %v3194
        %v3196 = vpop.xlane.xlu0 %3195
        %v3197 = vadd.f32 %v3154, %v3155
        %3198 = vadd.xlane.f32.xlu0 %v3197
        %v3199 = vpop.xlane.xlu0 %3198
        %v3200 = vadd.f32 %v3156, %v3157
        %3201 = vadd.xlane.f32.xlu0 %v3200
        %v3202 = vpop.xlane.xlu0 %3201
        %v3203 = vadd.f32 %v3158, %v3159
        %3204 = vadd.xlane.f32.xlu0 %v3203
        %v3205 = vpop.xlane.xlu0 %3204
        %v3206 = vadd.f32 %v3160, %v3161
        %3207 = vadd.xlane.f32.xlu0 %v3206
        %v3208 = vpop.xlane.xlu0 %3207
        %v3209 = vadd.f32 %v3162, %v3163
        %3210 = vadd.xlane.f32.xlu0 %v3209
        %v3211 = vpop.xlane.xlu0 %3210
        %v3212 = vadd.f32 %v3164, %v3165
        %3213 = vadd.xlane.f32.xlu0 %v3212
        %v3214 = vpop.xlane.xlu0 %3213
        %v3231 = vlaneseq
        %v3232 = vshrl.u32 %v3231, 7
        %v3233 = vsub.s32 %v660, %v3232
        %v3234 = vrot.slane %v3169, %v3233
        %v3235 = vlaneseq
        %v3236 = vshrl.u32 %v3235, 7
        %v3237 = vsub.s32 %v665, %v3236
        %v3238 = vrot.slane %v3172, %v3237
        %v3239 = vsel %vm670, %v3238, %v3234
        %v3240 = vlaneseq
        %v3241 = vshrl.u32 %v3240, 7
        %v3242 = vsub.s32 %v672, %v3241
        %v3243 = vrot.slane %v3175, %v3242
        %v3244 = vsel %vm677, %v3243, %v3239
        %v3245 = vlaneseq
        %v3246 = vshrl.u32 %v3245, 7
        %v3247 = vsub.s32 %v679, %v3246
        %v3248 = vrot.slane %v3178, %v3247
        %v3249 = vsel %vm684, %v3248, %v3244
        %v3250 = vlaneseq
        %v3251 = vshrl.u32 %v3250, 7
        %v3252 = vsub.s32 %v686, %v3251
        %v3253 = vrot.slane %v3181, %v3252
        %v3254 = vsel %vm691, %v3253, %v3249
        %v3255 = vlaneseq
        %v3256 = vshrl.u32 %v3255, 7
        %v3257 = vsub.s32 %v693, %v3256
        %v3258 = vrot.slane %v3184, %v3257
        %v3259 = vsel %vm698, %v3258, %v3254
        %v3260 = vlaneseq
        %v3261 = vshrl.u32 %v3260, 7
        %v3262 = vsub.s32 %v700, %v3261
        %v3263 = vrot.slane %v3187, %v3262
        %v3264 = vsel %vm705, %v3263, %v3259
        %v3265 = vlaneseq
        %v3266 = vshrl.u32 %v3265, 7
        %v3267 = vsub.s32 %v707, %v3266
        %v3268 = vrot.slane %v3190, %v3267
        %v3269 = vsel %vm712, %v3268, %v3264
        %v3270 = vlaneseq
        %v3271 = vshrl.u32 %v3270, 7
        %v3272 = vsub.s32 %v714, %v3271
        %v3273 = vrot.slane %v3193, %v3272
        %v3274 = vsel %vm719, %v3273, %v3269
        %v3275 = vlaneseq
        %v3276 = vshrl.u32 %v3275, 7
        %v3277 = vsub.s32 %v721, %v3276
        %v3278 = vrot.slane %v3196, %v3277
        %v3279 = vsel %vm726, %v3278, %v3274
        %v3280 = vlaneseq
        %v3281 = vshrl.u32 %v3280, 7
        %v3282 = vsub.s32 %v728, %v3281
        %v3283 = vrot.slane %v3199, %v3282
        %v3284 = vsel %vm733, %v3283, %v3279
        %v3285 = vlaneseq
        %v3286 = vshrl.u32 %v3285, 7
        %v3287 = vsub.s32 %v735, %v3286
        %v3288 = vrot.slane %v3202, %v3287
        %v3289 = vsel %vm740, %v3288, %v3284
        %v3290 = vlaneseq
        %v3291 = vshrl.u32 %v3290, 7
        %v3292 = vsub.s32 %v742, %v3291
        %v3293 = vrot.slane %v3205, %v3292
        %v3294 = vsel %vm747, %v3293, %v3289
        %v3295 = vlaneseq
        %v3296 = vshrl.u32 %v3295, 7
        %v3297 = vsub.s32 %v749, %v3296
        %v3298 = vrot.slane %v3208, %v3297
        %v3299 = vsel %vm754, %v3298, %v3294
        %v3300 = vlaneseq
        %v3301 = vshrl.u32 %v3300, 7
        %v3302 = vsub.s32 %v756, %v3301
        %v3303 = vrot.slane %v3211, %v3302
        %v3304 = vsel %vm761, %v3303, %v3299
        %v3305 = vlaneseq
        %v3306 = vshrl.u32 %v3305, 7
        %v3307 = vsub.s32 %v763, %v3306
        %v3308 = vrot.slane %v3214, %v3307
        %v3309 = vsel %vm768, %v3308, %v3304
        %v3311 = vadd.f32 %v3166, %v3309
        %3312 = vst [vmem:[#allocation2 + $0x5] sm:$0x1] %v3311
        %v3313 = vld [vmem:[%s219] sm:$0xff]
        %v3314 = vld [vmem:[%s219 + $0x8] sm:$0xff]
        %v3315 = vld [vmem:[%s219 + $0x10] sm:$0xff]
        %v3316 = vld [vmem:[%s219 + $0x18] sm:$0xff]
        %v3317 = vld [vmem:[%s219 + $0x20] sm:$0xff]
        %v3318 = vld [vmem:[%s219 + $0x28] sm:$0xff]
        %v3319 = vld [vmem:[%s219 + $0x30] sm:$0xff]
        %v3320 = vld [vmem:[%s219 + $0x38] sm:$0xff]
        %v3321 = vld [vmem:[%s219 + $0x40] sm:$0xff]
        %v3322 = vld [vmem:[%s219 + $0x48] sm:$0xff]
        %v3323 = vld [vmem:[%s219 + $0x50] sm:$0xff]
        %v3324 = vld [vmem:[%s219 + $0x58] sm:$0xff]
        %v3325 = vld [vmem:[%s219 + $0x60] sm:$0xff]
        %v3326 = vld [vmem:[%s219 + $0x68] sm:$0xff]
        %v3327 = vld [vmem:[%s219 + $0x70] sm:$0xff]
        %v3328 = vld [vmem:[%s219 + $0x78] sm:$0xff]
        %s3329 = scalar_lea.vmem %s213, 48
        %v3330 = vld [vmem:[%s3329] sm:$0xff]
        %v3331 = vld [vmem:[%s225] sm:$0xff]
        %v3332 = vld [vmem:[%s225 + $0x8] sm:$0xff]
        %v3333 = vld [vmem:[%s225 + $0x10] sm:$0xff]
        %v3334 = vld [vmem:[%s225 + $0x18] sm:$0xff]
        %v3335 = vld [vmem:[%s225 + $0x20] sm:$0xff]
        %v3336 = vld [vmem:[%s225 + $0x28] sm:$0xff]
        %v3337 = vld [vmem:[%s225 + $0x30] sm:$0xff]
        %v3338 = vld [vmem:[%s225 + $0x38] sm:$0xff]
        %v3339 = vld [vmem:[%s225 + $0x40] sm:$0xff]
        %v3340 = vld [vmem:[%s225 + $0x48] sm:$0xff]
        %v3341 = vld [vmem:[%s225 + $0x50] sm:$0xff]
        %v3342 = vld [vmem:[%s225 + $0x58] sm:$0xff]
        %v3343 = vld [vmem:[%s225 + $0x60] sm:$0xff]
        %v3344 = vld [vmem:[%s225 + $0x68] sm:$0xff]
        %v3345 = vld [vmem:[%s225 + $0x70] sm:$0xff]
        %v3346 = vld [vmem:[%s225 + $0x78] sm:$0xff]
        %3348 = vset.pattern.permute.xlu0 0
        %3349 = vperm.xlu0 %3348, %v3331
        %v3350 = vpop.permute.xlu0 %3349
        %3353 = vset.pattern.permute.xlu0 0
        %3354 = vperm.xlu0 %3353, %v3332
        %v3355 = vpop.permute.xlu0 %3354
        %3358 = vset.pattern.permute.xlu0 0
        %3359 = vperm.xlu0 %3358, %v3333
        %v3360 = vpop.permute.xlu0 %3359
        %3363 = vset.pattern.permute.xlu0 0
        %3364 = vperm.xlu0 %3363, %v3334
        %v3365 = vpop.permute.xlu0 %3364
        %3368 = vset.pattern.permute.xlu0 0
        %3369 = vperm.xlu0 %3368, %v3335
        %v3370 = vpop.permute.xlu0 %3369
        %3373 = vset.pattern.permute.xlu0 0
        %3374 = vperm.xlu0 %3373, %v3336
        %v3375 = vpop.permute.xlu0 %3374
        %3378 = vset.pattern.permute.xlu0 0
        %3379 = vperm.xlu0 %3378, %v3337
        %v3380 = vpop.permute.xlu0 %3379
        %3383 = vset.pattern.permute.xlu0 0
        %3384 = vperm.xlu0 %3383, %v3338
        %v3385 = vpop.permute.xlu0 %3384
        %3388 = vset.pattern.permute.xlu0 0
        %3389 = vperm.xlu0 %3388, %v3339
        %v3390 = vpop.permute.xlu0 %3389
        %3393 = vset.pattern.permute.xlu0 0
        %3394 = vperm.xlu0 %3393, %v3340
        %v3395 = vpop.permute.xlu0 %3394
        %3398 = vset.pattern.permute.xlu0 0
        %3399 = vperm.xlu0 %3398, %v3341
        %v3400 = vpop.permute.xlu0 %3399
        %3403 = vset.pattern.permute.xlu0 0
        %3404 = vperm.xlu0 %3403, %v3342
        %v3405 = vpop.permute.xlu0 %3404
        %3408 = vset.pattern.permute.xlu0 0
        %3409 = vperm.xlu0 %3408, %v3343
        %v3410 = vpop.permute.xlu0 %3409
        %3413 = vset.pattern.permute.xlu0 0
        %3414 = vperm.xlu0 %3413, %v3344
        %v3415 = vpop.permute.xlu0 %3414
        %3418 = vset.pattern.permute.xlu0 0
        %3419 = vperm.xlu0 %3418, %v3345
        %v3420 = vpop.permute.xlu0 %3419
        %3423 = vset.pattern.permute.xlu0 0
        %3424 = vperm.xlu0 %3423, %v3346
        %v3425 = vpop.permute.xlu0 %3424
        %v3428 = vcombine.high %v3330, %v3330
        %v3430 = vsel %vm347, %v3313, 0
        %v3433 = vsel %vm347, %v3314, 0
        %v3436 = vsel %vm347, %v3315, 0
        %v3439 = vsel %vm347, %v3316, 0
        %v3442 = vsel %vm347, %v3317, 0
        %v3445 = vsel %vm347, %v3318, 0
        %v3448 = vsel %vm347, %v3319, 0
        %v3451 = vsel %vm347, %v3320, 0
        %v3454 = vsel %vm347, %v3321, 0
        %v3457 = vsel %vm347, %v3322, 0
        %v3460 = vsel %vm347, %v3323, 0
        %v3463 = vsel %vm347, %v3324, 0
        %v3466 = vsel %vm347, %v3325, 0
        %v3469 = vsel %vm347, %v3326, 0
        %v3472 = vsel %vm347, %v3327, 0
        %v3475 = vsel %vm347, %v3328, 0
        %v3477 = vsel %vm396, %v3330, 0
        %v3479 = vsel %vm396, %v3428, 0
        %3481 = vmatprep.subr.mxu0 0.0
        %3482 = vmatpush1.msra.mxu0 0.0
        %3483 = vmatprep.subr.mxu0 0.0
        %3484 = vmatpush1.msra.mxu0 0.0
        %3485 = vmatprep.subr.mxu0 0.0
        %3486 = vmatpush1.msra.mxu0 0.0
        %3487 = vmatprep.subr.mxu0 0.0
        %3488 = vmatpush1.msra.mxu0 0.0
        %3489 = vmatprep.subr.mxu0 0.0
        %3490 = vmatpush1.msra.mxu0 0.0
        %3491 = vmatprep.subr.mxu0 0.0
        %3492 = vmatpush1.msra.mxu0 0.0
        %3493 = vmatprep.subr.mxu0 0.0
        %3494 = vmatpush1.msra.mxu0 0.0
        %3495 = vmatprep.subr.mxu0 0.0
        %3496 = vmatpush1.msra.mxu0 0.0
        %3497 = vmatprep.subr.mxu0 0.0
        %3498 = vmatpush1.msra.mxu0 0.0
        %3499 = vmatprep.subr.mxu0 0.0
        %3500 = vmatpush1.msra.mxu0 0.0
        %3501 = vmatprep.subr.mxu0 0.0
        %3502 = vmatpush1.msra.mxu0 0.0
        %3503 = vmatprep.subr.mxu0 0.0
        %3504 = vmatpush1.msra.mxu0 0.0
        %3505 = vmatprep.subr.mxu0 0.0
        %3506 = vmatpush1.msra.mxu0 0.0
        %3507 = vmatprep.subr.mxu0 0.0
        %3508 = vmatpush1.msra.mxu0 0.0
        %3509 = vmatprep.subr.mxu0 0.0
        %3510 = vmatpush1.msra.mxu0 0.0
        %3511 = vmatprep.subr.mxu0 %v3479
        %3512 = vmatpush1.msra.mxu0 %v3477
        %3513 = vmatprep.subr.mxu0 0.0
        %3514 = vmatpush2.msra.mxu0 0.0
        %3515 = vmatprep.subr.mxu0 0.0
        %3516 = vmatpush2.msra.mxu0 0.0
        %3517 = vmatprep.subr.mxu0 0.0
        %3518 = vmatpush2.msra.mxu0 0.0
        %3519 = vmatprep.subr.mxu0 0.0
        %3520 = vmatpush2.msra.mxu0 0.0
        %3521 = vmatprep.subr.mxu0 0.0
        %3522 = vmatpush2.msra.mxu0 0.0
        %3523 = vmatprep.subr.mxu0 0.0
        %3524 = vmatpush2.msra.mxu0 0.0
        %3525 = vmatprep.subr.mxu0 0.0
        %3526 = vmatpush2.msra.mxu0 0.0
        %3527 = vmatprep.subr.mxu0 0.0
        %3528 = vmatpush2.msra.mxu0 0.0
        %3529 = vmatprep.subr.mxu0 0.0
        %3530 = vmatpush2.msra.mxu0 0.0
        %3531 = vmatprep.subr.mxu0 0.0
        %3532 = vmatpush2.msra.mxu0 0.0
        %3533 = vmatprep.subr.mxu0 0.0
        %3534 = vmatpush2.msra.mxu0 0.0
        %3535 = vmatprep.subr.mxu0 0.0
        %3536 = vmatpush2.msra.mxu0 0.0
        %3537 = vmatprep.subr.mxu0 0.0
        %3538 = vmatpush2.msra.mxu0 0.0
        %3539 = vmatprep.subr.mxu0 0.0
        %3540 = vmatpush2.msra.mxu0 0.0
        %3541 = vmatprep.subr.mxu0 0.0
        %3542 = vmatpush2.msra.mxu0 0.0
        %3543 = vmatprep.subr.mxu0 0.0
        %3544 = vmatpush2.msra.mxu0 0.0
        %3545 = vmatprep.mubr.f32.mxu0 0.0
        %3546 = vmatmul.mubr.f32.gmra.mxu0 %v3430
        %v3547 = vpop.f32.mrf.mxu0
        %v3548 = vadd.f32 %v3350, %v3547
        %v3549 = vpop.f32.mrf.mxu0
        %v3550 = vadd.f32 %v3350, %v3549
        %3551 = vmatprep.mubr.f32.mxu0 0.0
        %3552 = vmatmul.mubr.f32.gmra.mxu0 %v3433
        %v3553 = vpop.f32.mrf.mxu0
        %v3554 = vadd.f32 %v3355, %v3553
        %v3555 = vpop.f32.mrf.mxu0
        %v3556 = vadd.f32 %v3355, %v3555
        %3557 = vmatprep.mubr.f32.mxu0 0.0
        %3558 = vmatmul.mubr.f32.gmra.mxu0 %v3436
        %v3559 = vpop.f32.mrf.mxu0
        %v3560 = vadd.f32 %v3360, %v3559
        %v3561 = vpop.f32.mrf.mxu0
        %v3562 = vadd.f32 %v3360, %v3561
        %3563 = vmatprep.mubr.f32.mxu0 0.0
        %3564 = vmatmul.mubr.f32.gmra.mxu0 %v3439
        %v3565 = vpop.f32.mrf.mxu0
        %v3566 = vadd.f32 %v3365, %v3565
        %v3567 = vpop.f32.mrf.mxu0
        %v3568 = vadd.f32 %v3365, %v3567
        %3569 = vmatprep.mubr.f32.mxu0 0.0
        %3570 = vmatmul.mubr.f32.gmra.mxu0 %v3442
        %v3571 = vpop.f32.mrf.mxu0
        %v3572 = vadd.f32 %v3370, %v3571
        %v3573 = vpop.f32.mrf.mxu0
        %v3574 = vadd.f32 %v3370, %v3573
        %3575 = vmatprep.mubr.f32.mxu0 0.0
        %3576 = vmatmul.mubr.f32.gmra.mxu0 %v3445
        %v3577 = vpop.f32.mrf.mxu0
        %v3578 = vadd.f32 %v3375, %v3577
        %v3579 = vpop.f32.mrf.mxu0
        %v3580 = vadd.f32 %v3375, %v3579
        %3581 = vmatprep.mubr.f32.mxu0 0.0
        %3582 = vmatmul.mubr.f32.gmra.mxu0 %v3448
        %v3583 = vpop.f32.mrf.mxu0
        %v3584 = vadd.f32 %v3380, %v3583
        %v3585 = vpop.f32.mrf.mxu0
        %v3586 = vadd.f32 %v3380, %v3585
        %3587 = vmatprep.mubr.f32.mxu0 0.0
        %3588 = vmatmul.mubr.f32.gmra.mxu0 %v3451
        %v3589 = vpop.f32.mrf.mxu0
        %v3590 = vadd.f32 %v3385, %v3589
        %v3591 = vpop.f32.mrf.mxu0
        %v3592 = vadd.f32 %v3385, %v3591
        %3593 = vmatprep.mubr.f32.mxu0 0.0
        %3594 = vmatmul.mubr.f32.gmra.mxu0 %v3454
        %v3595 = vpop.f32.mrf.mxu0
        %v3596 = vadd.f32 %v3390, %v3595
        %v3597 = vpop.f32.mrf.mxu0
        %v3598 = vadd.f32 %v3390, %v3597
        %3599 = vmatprep.mubr.f32.mxu0 0.0
        %3600 = vmatmul.mubr.f32.gmra.mxu0 %v3457
        %v3601 = vpop.f32.mrf.mxu0
        %v3602 = vadd.f32 %v3395, %v3601
        %v3603 = vpop.f32.mrf.mxu0
        %v3604 = vadd.f32 %v3395, %v3603
        %3605 = vmatprep.mubr.f32.mxu0 0.0
        %3606 = vmatmul.mubr.f32.gmra.mxu0 %v3460
        %v3607 = vpop.f32.mrf.mxu0
        %v3608 = vadd.f32 %v3400, %v3607
        %v3609 = vpop.f32.mrf.mxu0
        %v3610 = vadd.f32 %v3400, %v3609
        %3611 = vmatprep.mubr.f32.mxu0 0.0
        %3612 = vmatmul.mubr.f32.gmra.mxu0 %v3463
        %v3613 = vpop.f32.mrf.mxu0
        %v3614 = vadd.f32 %v3405, %v3613
        %v3615 = vpop.f32.mrf.mxu0
        %v3616 = vadd.f32 %v3405, %v3615
        %3617 = vmatprep.mubr.f32.mxu0 0.0
        %3618 = vmatmul.mubr.f32.gmra.mxu0 %v3466
        %v3619 = vpop.f32.mrf.mxu0
        %v3620 = vadd.f32 %v3410, %v3619
        %v3621 = vpop.f32.mrf.mxu0
        %v3622 = vadd.f32 %v3410, %v3621
        %3623 = vmatprep.mubr.f32.mxu0 0.0
        %3624 = vmatmul.mubr.f32.gmra.mxu0 %v3469
        %v3625 = vpop.f32.mrf.mxu0
        %v3626 = vadd.f32 %v3415, %v3625
        %v3627 = vpop.f32.mrf.mxu0
        %v3628 = vadd.f32 %v3415, %v3627
        %3629 = vmatprep.mubr.f32.mxu0 0.0
        %3630 = vmatmul.mubr.f32.gmra.mxu0 %v3472
        %v3631 = vpop.f32.mrf.mxu0
        %v3632 = vadd.f32 %v3420, %v3631
        %v3633 = vpop.f32.mrf.mxu0
        %v3634 = vadd.f32 %v3420, %v3633
        %3635 = vmatprep.mubr.f32.mxu0 0.0
        %3636 = vmatmul.mubr.f32.gmra.mxu0 %v3475
        %v3637 = vpop.f32.mrf.mxu0
        %v3638 = vadd.f32 %v3425, %v3637
        %v3639 = vpop.f32.mrf.mxu0
        %v3640 = vadd.f32 %v3425, %v3639
        %3641 = vdwg.mxu0
        %v3642 = vmax.f32 %v3548, 0.0
        %v3643 = vmax.f32 %v3550, 0.0
        %v3644 = vmax.f32 %v3554, 0.0
        %v3645 = vmax.f32 %v3556, 0.0
        %v3646 = vmax.f32 %v3560, 0.0
        %v3647 = vmax.f32 %v3562, 0.0
        %v3648 = vmax.f32 %v3566, 0.0
        %v3649 = vmax.f32 %v3568, 0.0
        %v3650 = vmax.f32 %v3572, 0.0
        %v3651 = vmax.f32 %v3574, 0.0
        %v3652 = vmax.f32 %v3578, 0.0
        %v3653 = vmax.f32 %v3580, 0.0
        %v3654 = vmax.f32 %v3584, 0.0
        %v3655 = vmax.f32 %v3586, 0.0
        %v3656 = vmax.f32 %v3590, 0.0
        %v3657 = vmax.f32 %v3592, 0.0
        %v3658 = vmax.f32 %v3596, 0.0
        %v3659 = vmax.f32 %v3598, 0.0
        %v3660 = vmax.f32 %v3602, 0.0
        %v3661 = vmax.f32 %v3604, 0.0
        %v3662 = vmax.f32 %v3608, 0.0
        %v3663 = vmax.f32 %v3610, 0.0
        %v3664 = vmax.f32 %v3614, 0.0
        %v3665 = vmax.f32 %v3616, 0.0
        %v3666 = vmax.f32 %v3620, 0.0
        %v3667 = vmax.f32 %v3622, 0.0
        %v3668 = vmax.f32 %v3626, 0.0
        %v3669 = vmax.f32 %v3628, 0.0
        %v3670 = vmax.f32 %v3632, 0.0
        %v3671 = vmax.f32 %v3634, 0.0
        %v3672 = vmax.f32 %v3638, 0.0
        %v3673 = vmax.f32 %v3640, 0.0
        %v3674 = vld [vmem:[#allocation2 + $0x6] sm:$0x1]
        %v3675 = vadd.f32 %v3642, %v3643
        %3676 = vadd.xlane.f32.xlu0 %v3675
        %v3677 = vpop.xlane.xlu0 %3676
        %v3678 = vadd.f32 %v3644, %v3645
        %3679 = vadd.xlane.f32.xlu0 %v3678
        %v3680 = vpop.xlane.xlu0 %3679
        %v3681 = vadd.f32 %v3646, %v3647
        %3682 = vadd.xlane.f32.xlu0 %v3681
        %v3683 = vpop.xlane.xlu0 %3682
        %v3684 = vadd.f32 %v3648, %v3649
        %3685 = vadd.xlane.f32.xlu0 %v3684
        %v3686 = vpop.xlane.xlu0 %3685
        %v3687 = vadd.f32 %v3650, %v3651
        %3688 = vadd.xlane.f32.xlu0 %v3687
        %v3689 = vpop.xlane.xlu0 %3688
        %v3690 = vadd.f32 %v3652, %v3653
        %3691 = vadd.xlane.f32.xlu0 %v3690
        %v3692 = vpop.xlane.xlu0 %3691
        %v3693 = vadd.f32 %v3654, %v3655
        %3694 = vadd.xlane.f32.xlu0 %v3693
        %v3695 = vpop.xlane.xlu0 %3694
        %v3696 = vadd.f32 %v3656, %v3657
        %3697 = vadd.xlane.f32.xlu0 %v3696
        %v3698 = vpop.xlane.xlu0 %3697
        %v3699 = vadd.f32 %v3658, %v3659
        %3700 = vadd.xlane.f32.xlu0 %v3699
        %v3701 = vpop.xlane.xlu0 %3700
        %v3702 = vadd.f32 %v3660, %v3661
        %3703 = vadd.xlane.f32.xlu0 %v3702
        %v3704 = vpop.xlane.xlu0 %3703
        %v3705 = vadd.f32 %v3662, %v3663
        %3706 = vadd.xlane.f32.xlu0 %v3705
        %v3707 = vpop.xlane.xlu0 %3706
        %v3708 = vadd.f32 %v3664, %v3665
        %3709 = vadd.xlane.f32.xlu0 %v3708
        %v3710 = vpop.xlane.xlu0 %3709
        %v3711 = vadd.f32 %v3666, %v3667
        %3712 = vadd.xlane.f32.xlu0 %v3711
        %v3713 = vpop.xlane.xlu0 %3712
        %v3714 = vadd.f32 %v3668, %v3669
        %3715 = vadd.xlane.f32.xlu0 %v3714
        %v3716 = vpop.xlane.xlu0 %3715
        %v3717 = vadd.f32 %v3670, %v3671
        %3718 = vadd.xlane.f32.xlu0 %v3717
        %v3719 = vpop.xlane.xlu0 %3718
        %v3720 = vadd.f32 %v3672, %v3673
        %3721 = vadd.xlane.f32.xlu0 %v3720
        %v3722 = vpop.xlane.xlu0 %3721
        %v3739 = vlaneseq
        %v3740 = vshrl.u32 %v3739, 7
        %v3741 = vsub.s32 %v660, %v3740
        %v3742 = vrot.slane %v3677, %v3741
        %v3743 = vlaneseq
        %v3744 = vshrl.u32 %v3743, 7
        %v3745 = vsub.s32 %v665, %v3744
        %v3746 = vrot.slane %v3680, %v3745
        %v3747 = vsel %vm670, %v3746, %v3742
        %v3748 = vlaneseq
        %v3749 = vshrl.u32 %v3748, 7
        %v3750 = vsub.s32 %v672, %v3749
        %v3751 = vrot.slane %v3683, %v3750
        %v3752 = vsel %vm677, %v3751, %v3747
        %v3753 = vlaneseq
        %v3754 = vshrl.u32 %v3753, 7
        %v3755 = vsub.s32 %v679, %v3754
        %v3756 = vrot.slane %v3686, %v3755
        %v3757 = vsel %vm684, %v3756, %v3752
        %v3758 = vlaneseq
        %v3759 = vshrl.u32 %v3758, 7
        %v3760 = vsub.s32 %v686, %v3759
        %v3761 = vrot.slane %v3689, %v3760
        %v3762 = vsel %vm691, %v3761, %v3757
        %v3763 = vlaneseq
        %v3764 = vshrl.u32 %v3763, 7
        %v3765 = vsub.s32 %v693, %v3764
        %v3766 = vrot.slane %v3692, %v3765
        %v3767 = vsel %vm698, %v3766, %v3762
        %v3768 = vlaneseq
        %v3769 = vshrl.u32 %v3768, 7
        %v3770 = vsub.s32 %v700, %v3769
        %v3771 = vrot.slane %v3695, %v3770
        %v3772 = vsel %vm705, %v3771, %v3767
        %v3773 = vlaneseq
        %v3774 = vshrl.u32 %v3773, 7
        %v3775 = vsub.s32 %v707, %v3774
        %v3776 = vrot.slane %v3698, %v3775
        %v3777 = vsel %vm712, %v3776, %v3772
        %v3778 = vlaneseq
        %v3779 = vshrl.u32 %v3778, 7
        %v3780 = vsub.s32 %v714, %v3779
        %v3781 = vrot.slane %v3701, %v3780
        %v3782 = vsel %vm719, %v3781, %v3777
        %v3783 = vlaneseq
        %v3784 = vshrl.u32 %v3783, 7
        %v3785 = vsub.s32 %v721, %v3784
        %v3786 = vrot.slane %v3704, %v3785
        %v3787 = vsel %vm726, %v3786, %v3782
        %v3788 = vlaneseq
        %v3789 = vshrl.u32 %v3788, 7
        %v3790 = vsub.s32 %v728, %v3789
        %v3791 = vrot.slane %v3707, %v3790
        %v3792 = vsel %vm733, %v3791, %v3787
        %v3793 = vlaneseq
        %v3794 = vshrl.u32 %v3793, 7
        %v3795 = vsub.s32 %v735, %v3794
        %v3796 = vrot.slane %v3710, %v3795
        %v3797 = vsel %vm740, %v3796, %v3792
        %v3798 = vlaneseq
        %v3799 = vshrl.u32 %v3798, 7
        %v3800 = vsub.s32 %v742, %v3799
        %v3801 = vrot.slane %v3713, %v3800
        %v3802 = vsel %vm747, %v3801, %v3797
        %v3803 = vlaneseq
        %v3804 = vshrl.u32 %v3803, 7
        %v3805 = vsub.s32 %v749, %v3804
        %v3806 = vrot.slane %v3716, %v3805
        %v3807 = vsel %vm754, %v3806, %v3802
        %v3808 = vlaneseq
        %v3809 = vshrl.u32 %v3808, 7
        %v3810 = vsub.s32 %v756, %v3809
        %v3811 = vrot.slane %v3719, %v3810
        %v3812 = vsel %vm761, %v3811, %v3807
        %v3813 = vlaneseq
        %v3814 = vshrl.u32 %v3813, 7
        %v3815 = vsub.s32 %v763, %v3814
        %v3816 = vrot.slane %v3722, %v3815
        %v3817 = vsel %vm768, %v3816, %v3812
        %v3819 = vadd.f32 %v3674, %v3817
        %3820 = vst [vmem:[#allocation2 + $0x6] sm:$0x1] %v3819
        %v3821 = vld [vmem:[%s219] sm:$0xff]
        %v3822 = vld [vmem:[%s219 + $0x8] sm:$0xff]
        %v3823 = vld [vmem:[%s219 + $0x10] sm:$0xff]
        %v3824 = vld [vmem:[%s219 + $0x18] sm:$0xff]
        %v3825 = vld [vmem:[%s219 + $0x20] sm:$0xff]
        %v3826 = vld [vmem:[%s219 + $0x28] sm:$0xff]
        %v3827 = vld [vmem:[%s219 + $0x30] sm:$0xff]
        %v3828 = vld [vmem:[%s219 + $0x38] sm:$0xff]
        %v3829 = vld [vmem:[%s219 + $0x40] sm:$0xff]
        %v3830 = vld [vmem:[%s219 + $0x48] sm:$0xff]
        %v3831 = vld [vmem:[%s219 + $0x50] sm:$0xff]
        %v3832 = vld [vmem:[%s219 + $0x58] sm:$0xff]
        %v3833 = vld [vmem:[%s219 + $0x60] sm:$0xff]
        %v3834 = vld [vmem:[%s219 + $0x68] sm:$0xff]
        %v3835 = vld [vmem:[%s219 + $0x70] sm:$0xff]
        %v3836 = vld [vmem:[%s219 + $0x78] sm:$0xff]
        %s3837 = scalar_lea.vmem %s213, 56
        %v3838 = vld [vmem:[%s3837] sm:$0xff]
        %v3839 = vld [vmem:[%s225] sm:$0xff]
        %v3840 = vld [vmem:[%s225 + $0x8] sm:$0xff]
        %v3841 = vld [vmem:[%s225 + $0x10] sm:$0xff]
        %v3842 = vld [vmem:[%s225 + $0x18] sm:$0xff]
        %v3843 = vld [vmem:[%s225 + $0x20] sm:$0xff]
        %v3844 = vld [vmem:[%s225 + $0x28] sm:$0xff]
        %v3845 = vld [vmem:[%s225 + $0x30] sm:$0xff]
        %v3846 = vld [vmem:[%s225 + $0x38] sm:$0xff]
        %v3847 = vld [vmem:[%s225 + $0x40] sm:$0xff]
        %v3848 = vld [vmem:[%s225 + $0x48] sm:$0xff]
        %v3849 = vld [vmem:[%s225 + $0x50] sm:$0xff]
        %v3850 = vld [vmem:[%s225 + $0x58] sm:$0xff]
        %v3851 = vld [vmem:[%s225 + $0x60] sm:$0xff]
        %v3852 = vld [vmem:[%s225 + $0x68] sm:$0xff]
        %v3853 = vld [vmem:[%s225 + $0x70] sm:$0xff]
        %v3854 = vld [vmem:[%s225 + $0x78] sm:$0xff]
        %3856 = vset.pattern.permute.xlu0 0
        %3857 = vperm.xlu0 %3856, %v3839
        %v3858 = vpop.permute.xlu0 %3857
        %3861 = vset.pattern.permute.xlu0 0
        %3862 = vperm.xlu0 %3861, %v3840
        %v3863 = vpop.permute.xlu0 %3862
        %3866 = vset.pattern.permute.xlu0 0
        %3867 = vperm.xlu0 %3866, %v3841
        %v3868 = vpop.permute.xlu0 %3867
        %3871 = vset.pattern.permute.xlu0 0
        %3872 = vperm.xlu0 %3871, %v3842
        %v3873 = vpop.permute.xlu0 %3872
        %3876 = vset.pattern.permute.xlu0 0
        %3877 = vperm.xlu0 %3876, %v3843
        %v3878 = vpop.permute.xlu0 %3877
        %3881 = vset.pattern.permute.xlu0 0
        %3882 = vperm.xlu0 %3881, %v3844
        %v3883 = vpop.permute.xlu0 %3882
        %3886 = vset.pattern.permute.xlu0 0
        %3887 = vperm.xlu0 %3886, %v3845
        %v3888 = vpop.permute.xlu0 %3887
        %3891 = vset.pattern.permute.xlu0 0
        %3892 = vperm.xlu0 %3891, %v3846
        %v3893 = vpop.permute.xlu0 %3892
        %3896 = vset.pattern.permute.xlu0 0
        %3897 = vperm.xlu0 %3896, %v3847
        %v3898 = vpop.permute.xlu0 %3897
        %3901 = vset.pattern.permute.xlu0 0
        %3902 = vperm.xlu0 %3901, %v3848
        %v3903 = vpop.permute.xlu0 %3902
        %3906 = vset.pattern.permute.xlu0 0
        %3907 = vperm.xlu0 %3906, %v3849
        %v3908 = vpop.permute.xlu0 %3907
        %3911 = vset.pattern.permute.xlu0 0
        %3912 = vperm.xlu0 %3911, %v3850
        %v3913 = vpop.permute.xlu0 %3912
        %3916 = vset.pattern.permute.xlu0 0
        %3917 = vperm.xlu0 %3916, %v3851
        %v3918 = vpop.permute.xlu0 %3917
        %3921 = vset.pattern.permute.xlu0 0
        %3922 = vperm.xlu0 %3921, %v3852
        %v3923 = vpop.permute.xlu0 %3922
        %3926 = vset.pattern.permute.xlu0 0
        %3927 = vperm.xlu0 %3926, %v3853
        %v3928 = vpop.permute.xlu0 %3927
        %3931 = vset.pattern.permute.xlu0 0
        %3932 = vperm.xlu0 %3931, %v3854
        %v3933 = vpop.permute.xlu0 %3932
        %v3936 = vcombine.high %v3838, %v3838
        %v3938 = vsel %vm347, %v3821, 0
        %v3941 = vsel %vm347, %v3822, 0
        %v3944 = vsel %vm347, %v3823, 0
        %v3947 = vsel %vm347, %v3824, 0
        %v3950 = vsel %vm347, %v3825, 0
        %v3953 = vsel %vm347, %v3826, 0
        %v3956 = vsel %vm347, %v3827, 0
        %v3959 = vsel %vm347, %v3828, 0
        %v3962 = vsel %vm347, %v3829, 0
        %v3965 = vsel %vm347, %v3830, 0
        %v3968 = vsel %vm347, %v3831, 0
        %v3971 = vsel %vm347, %v3832, 0
        %v3974 = vsel %vm347, %v3833, 0
        %v3977 = vsel %vm347, %v3834, 0
        %v3980 = vsel %vm347, %v3835, 0
        %v3983 = vsel %vm347, %v3836, 0
        %v3985 = vsel %vm396, %v3838, 0
        %v3987 = vsel %vm396, %v3936, 0
        %3989 = vmatprep.subr.mxu0 0.0
        %3990 = vmatpush1.msra.mxu0 0.0
        %3991 = vmatprep.subr.mxu0 0.0
        %3992 = vmatpush1.msra.mxu0 0.0
        %3993 = vmatprep.subr.mxu0 0.0
        %3994 = vmatpush1.msra.mxu0 0.0
        %3995 = vmatprep.subr.mxu0 0.0
        %3996 = vmatpush1.msra.mxu0 0.0
        %3997 = vmatprep.subr.mxu0 0.0
        %3998 = vmatpush1.msra.mxu0 0.0
        %3999 = vmatprep.subr.mxu0 0.0
        %4000 = vmatpush1.msra.mxu0 0.0
        %4001 = vmatprep.subr.mxu0 0.0
        %4002 = vmatpush1.msra.mxu0 0.0
        %4003 = vmatprep.subr.mxu0 0.0
        %4004 = vmatpush1.msra.mxu0 0.0
        %4005 = vmatprep.subr.mxu0 0.0
        %4006 = vmatpush1.msra.mxu0 0.0
        %4007 = vmatprep.subr.mxu0 0.0
        %4008 = vmatpush1.msra.mxu0 0.0
        %4009 = vmatprep.subr.mxu0 0.0
        %4010 = vmatpush1.msra.mxu0 0.0
        %4011 = vmatprep.subr.mxu0 0.0
        %4012 = vmatpush1.msra.mxu0 0.0
        %4013 = vmatprep.subr.mxu0 0.0
        %4014 = vmatpush1.msra.mxu0 0.0
        %4015 = vmatprep.subr.mxu0 0.0
        %4016 = vmatpush1.msra.mxu0 0.0
        %4017 = vmatprep.subr.mxu0 0.0
        %4018 = vmatpush1.msra.mxu0 0.0
        %4019 = vmatprep.subr.mxu0 %v3987
        %4020 = vmatpush1.msra.mxu0 %v3985
        %4021 = vmatprep.subr.mxu0 0.0
        %4022 = vmatpush2.msra.mxu0 0.0
        %4023 = vmatprep.subr.mxu0 0.0
        %4024 = vmatpush2.msra.mxu0 0.0
        %4025 = vmatprep.subr.mxu0 0.0
        %4026 = vmatpush2.msra.mxu0 0.0
        %4027 = vmatprep.subr.mxu0 0.0
        %4028 = vmatpush2.msra.mxu0 0.0
        %4029 = vmatprep.subr.mxu0 0.0
        %4030 = vmatpush2.msra.mxu0 0.0
        %4031 = vmatprep.subr.mxu0 0.0
        %4032 = vmatpush2.msra.mxu0 0.0
        %4033 = vmatprep.subr.mxu0 0.0
        %4034 = vmatpush2.msra.mxu0 0.0
        %4035 = vmatprep.subr.mxu0 0.0
        %4036 = vmatpush2.msra.mxu0 0.0
        %4037 = vmatprep.subr.mxu0 0.0
        %4038 = vmatpush2.msra.mxu0 0.0
        %4039 = vmatprep.subr.mxu0 0.0
        %4040 = vmatpush2.msra.mxu0 0.0
        %4041 = vmatprep.subr.mxu0 0.0
        %4042 = vmatpush2.msra.mxu0 0.0
        %4043 = vmatprep.subr.mxu0 0.0
        %4044 = vmatpush2.msra.mxu0 0.0
        %4045 = vmatprep.subr.mxu0 0.0
        %4046 = vmatpush2.msra.mxu0 0.0
        %4047 = vmatprep.subr.mxu0 0.0
        %4048 = vmatpush2.msra.mxu0 0.0
        %4049 = vmatprep.subr.mxu0 0.0
        %4050 = vmatpush2.msra.mxu0 0.0
        %4051 = vmatprep.subr.mxu0 0.0
        %4052 = vmatpush2.msra.mxu0 0.0
        %4053 = vmatprep.mubr.f32.mxu0 0.0
        %4054 = vmatmul.mubr.f32.gmra.mxu0 %v3938
        %v4055 = vpop.f32.mrf.mxu0
        %v4056 = vadd.f32 %v3858, %v4055
        %v4057 = vpop.f32.mrf.mxu0
        %v4058 = vadd.f32 %v3858, %v4057
        %4059 = vmatprep.mubr.f32.mxu0 0.0
        %4060 = vmatmul.mubr.f32.gmra.mxu0 %v3941
        %v4061 = vpop.f32.mrf.mxu0
        %v4062 = vadd.f32 %v3863, %v4061
        %v4063 = vpop.f32.mrf.mxu0
        %v4064 = vadd.f32 %v3863, %v4063
        %4065 = vmatprep.mubr.f32.mxu0 0.0
        %4066 = vmatmul.mubr.f32.gmra.mxu0 %v3944
        %v4067 = vpop.f32.mrf.mxu0
        %v4068 = vadd.f32 %v3868, %v4067
        %v4069 = vpop.f32.mrf.mxu0
        %v4070 = vadd.f32 %v3868, %v4069
        %4071 = vmatprep.mubr.f32.mxu0 0.0
        %4072 = vmatmul.mubr.f32.gmra.mxu0 %v3947
        %v4073 = vpop.f32.mrf.mxu0
        %v4074 = vadd.f32 %v3873, %v4073
        %v4075 = vpop.f32.mrf.mxu0
        %v4076 = vadd.f32 %v3873, %v4075
        %4077 = vmatprep.mubr.f32.mxu0 0.0
        %4078 = vmatmul.mubr.f32.gmra.mxu0 %v3950
        %v4079 = vpop.f32.mrf.mxu0
        %v4080 = vadd.f32 %v3878, %v4079
        %v4081 = vpop.f32.mrf.mxu0
        %v4082 = vadd.f32 %v3878, %v4081
        %4083 = vmatprep.mubr.f32.mxu0 0.0
        %4084 = vmatmul.mubr.f32.gmra.mxu0 %v3953
        %v4085 = vpop.f32.mrf.mxu0
        %v4086 = vadd.f32 %v3883, %v4085
        %v4087 = vpop.f32.mrf.mxu0
        %v4088 = vadd.f32 %v3883, %v4087
        %4089 = vmatprep.mubr.f32.mxu0 0.0
        %4090 = vmatmul.mubr.f32.gmra.mxu0 %v3956
        %v4091 = vpop.f32.mrf.mxu0
        %v4092 = vadd.f32 %v3888, %v4091
        %v4093 = vpop.f32.mrf.mxu0
        %v4094 = vadd.f32 %v3888, %v4093
        %4095 = vmatprep.mubr.f32.mxu0 0.0
        %4096 = vmatmul.mubr.f32.gmra.mxu0 %v3959
        %v4097 = vpop.f32.mrf.mxu0
        %v4098 = vadd.f32 %v3893, %v4097
        %v4099 = vpop.f32.mrf.mxu0
        %v4100 = vadd.f32 %v3893, %v4099
        %4101 = vmatprep.mubr.f32.mxu0 0.0
        %4102 = vmatmul.mubr.f32.gmra.mxu0 %v3962
        %v4103 = vpop.f32.mrf.mxu0
        %v4104 = vadd.f32 %v3898, %v4103
        %v4105 = vpop.f32.mrf.mxu0
        %v4106 = vadd.f32 %v3898, %v4105
        %4107 = vmatprep.mubr.f32.mxu0 0.0
        %4108 = vmatmul.mubr.f32.gmra.mxu0 %v3965
        %v4109 = vpop.f32.mrf.mxu0
        %v4110 = vadd.f32 %v3903, %v4109
        %v4111 = vpop.f32.mrf.mxu0
        %v4112 = vadd.f32 %v3903, %v4111
        %4113 = vmatprep.mubr.f32.mxu0 0.0
        %4114 = vmatmul.mubr.f32.gmra.mxu0 %v3968
        %v4115 = vpop.f32.mrf.mxu0
        %v4116 = vadd.f32 %v3908, %v4115
        %v4117 = vpop.f32.mrf.mxu0
        %v4118 = vadd.f32 %v3908, %v4117
        %4119 = vmatprep.mubr.f32.mxu0 0.0
        %4120 = vmatmul.mubr.f32.gmra.mxu0 %v3971
        %v4121 = vpop.f32.mrf.mxu0
        %v4122 = vadd.f32 %v3913, %v4121
        %v4123 = vpop.f32.mrf.mxu0
        %v4124 = vadd.f32 %v3913, %v4123
        %4125 = vmatprep.mubr.f32.mxu0 0.0
        %4126 = vmatmul.mubr.f32.gmra.mxu0 %v3974
        %v4127 = vpop.f32.mrf.mxu0
        %v4128 = vadd.f32 %v3918, %v4127
        %v4129 = vpop.f32.mrf.mxu0
        %v4130 = vadd.f32 %v3918, %v4129
        %4131 = vmatprep.mubr.f32.mxu0 0.0
        %4132 = vmatmul.mubr.f32.gmra.mxu0 %v3977
        %v4133 = vpop.f32.mrf.mxu0
        %v4134 = vadd.f32 %v3923, %v4133
        %v4135 = vpop.f32.mrf.mxu0
        %v4136 = vadd.f32 %v3923, %v4135
        %4137 = vmatprep.mubr.f32.mxu0 0.0
        %4138 = vmatmul.mubr.f32.gmra.mxu0 %v3980
        %v4139 = vpop.f32.mrf.mxu0
        %v4140 = vadd.f32 %v3928, %v4139
        %v4141 = vpop.f32.mrf.mxu0
        %v4142 = vadd.f32 %v3928, %v4141
        %4143 = vmatprep.mubr.f32.mxu0 0.0
        %4144 = vmatmul.mubr.f32.gmra.mxu0 %v3983
        %v4145 = vpop.f32.mrf.mxu0
        %v4146 = vadd.f32 %v3933, %v4145
        %v4147 = vpop.f32.mrf.mxu0
        %v4148 = vadd.f32 %v3933, %v4147
        %4149 = vdwg.mxu0
        %v4150 = vmax.f32 %v4056, 0.0
        %v4151 = vmax.f32 %v4058, 0.0
        %v4152 = vmax.f32 %v4062, 0.0
        %v4153 = vmax.f32 %v4064, 0.0
        %v4154 = vmax.f32 %v4068, 0.0
        %v4155 = vmax.f32 %v4070, 0.0
        %v4156 = vmax.f32 %v4074, 0.0
        %v4157 = vmax.f32 %v4076, 0.0
        %v4158 = vmax.f32 %v4080, 0.0
        %v4159 = vmax.f32 %v4082, 0.0
        %v4160 = vmax.f32 %v4086, 0.0
        %v4161 = vmax.f32 %v4088, 0.0
        %v4162 = vmax.f32 %v4092, 0.0
        %v4163 = vmax.f32 %v4094, 0.0
        %v4164 = vmax.f32 %v4098, 0.0
        %v4165 = vmax.f32 %v4100, 0.0
        %v4166 = vmax.f32 %v4104, 0.0
        %v4167 = vmax.f32 %v4106, 0.0
        %v4168 = vmax.f32 %v4110, 0.0
        %v4169 = vmax.f32 %v4112, 0.0
        %v4170 = vmax.f32 %v4116, 0.0
        %v4171 = vmax.f32 %v4118, 0.0
        %v4172 = vmax.f32 %v4122, 0.0
        %v4173 = vmax.f32 %v4124, 0.0
        %v4174 = vmax.f32 %v4128, 0.0
        %v4175 = vmax.f32 %v4130, 0.0
        %v4176 = vmax.f32 %v4134, 0.0
        %v4177 = vmax.f32 %v4136, 0.0
        %v4178 = vmax.f32 %v4140, 0.0
        %v4179 = vmax.f32 %v4142, 0.0
        %v4180 = vmax.f32 %v4146, 0.0
        %v4181 = vmax.f32 %v4148, 0.0
        %v4182 = vld [vmem:[#allocation2 + $0x7] sm:$0x1]
        %v4183 = vadd.f32 %v4150, %v4151
        %4184 = vadd.xlane.f32.xlu0 %v4183
        %v4185 = vpop.xlane.xlu0 %4184
        %v4186 = vadd.f32 %v4152, %v4153
        %4187 = vadd.xlane.f32.xlu0 %v4186
        %v4188 = vpop.xlane.xlu0 %4187
        %v4189 = vadd.f32 %v4154, %v4155
        %4190 = vadd.xlane.f32.xlu0 %v4189
        %v4191 = vpop.xlane.xlu0 %4190
        %v4192 = vadd.f32 %v4156, %v4157
        %4193 = vadd.xlane.f32.xlu0 %v4192
        %v4194 = vpop.xlane.xlu0 %4193
        %v4195 = vadd.f32 %v4158, %v4159
        %4196 = vadd.xlane.f32.xlu0 %v4195
        %v4197 = vpop.xlane.xlu0 %4196
        %v4198 = vadd.f32 %v4160, %v4161
        %4199 = vadd.xlane.f32.xlu0 %v4198
        %v4200 = vpop.xlane.xlu0 %4199
        %v4201 = vadd.f32 %v4162, %v4163
        %4202 = vadd.xlane.f32.xlu0 %v4201
        %v4203 = vpop.xlane.xlu0 %4202
        %v4204 = vadd.f32 %v4164, %v4165
        %4205 = vadd.xlane.f32.xlu0 %v4204
        %v4206 = vpop.xlane.xlu0 %4205
        %v4207 = vadd.f32 %v4166, %v4167
        %4208 = vadd.xlane.f32.xlu0 %v4207
        %v4209 = vpop.xlane.xlu0 %4208
        %v4210 = vadd.f32 %v4168, %v4169
        %4211 = vadd.xlane.f32.xlu0 %v4210
        %v4212 = vpop.xlane.xlu0 %4211
        %v4213 = vadd.f32 %v4170, %v4171
        %4214 = vadd.xlane.f32.xlu0 %v4213
        %v4215 = vpop.xlane.xlu0 %4214
        %v4216 = vadd.f32 %v4172, %v4173
        %4217 = vadd.xlane.f32.xlu0 %v4216
        %v4218 = vpop.xlane.xlu0 %4217
        %v4219 = vadd.f32 %v4174, %v4175
        %4220 = vadd.xlane.f32.xlu0 %v4219
        %v4221 = vpop.xlane.xlu0 %4220
        %v4222 = vadd.f32 %v4176, %v4177
        %4223 = vadd.xlane.f32.xlu0 %v4222
        %v4224 = vpop.xlane.xlu0 %4223
        %v4225 = vadd.f32 %v4178, %v4179
        %4226 = vadd.xlane.f32.xlu0 %v4225
        %v4227 = vpop.xlane.xlu0 %4226
        %v4228 = vadd.f32 %v4180, %v4181
        %4229 = vadd.xlane.f32.xlu0 %v4228
        %v4230 = vpop.xlane.xlu0 %4229
        %v4247 = vlaneseq
        %v4248 = vshrl.u32 %v4247, 7
        %v4249 = vsub.s32 %v660, %v4248
        %v4250 = vrot.slane %v4185, %v4249
        %v4251 = vlaneseq
        %v4252 = vshrl.u32 %v4251, 7
        %v4253 = vsub.s32 %v665, %v4252
        %v4254 = vrot.slane %v4188, %v4253
        %v4255 = vsel %vm670, %v4254, %v4250
        %v4256 = vlaneseq
        %v4257 = vshrl.u32 %v4256, 7
        %v4258 = vsub.s32 %v672, %v4257
        %v4259 = vrot.slane %v4191, %v4258
        %v4260 = vsel %vm677, %v4259, %v4255
        %v4261 = vlaneseq
        %v4262 = vshrl.u32 %v4261, 7
        %v4263 = vsub.s32 %v679, %v4262
        %v4264 = vrot.slane %v4194, %v4263
        %v4265 = vsel %vm684, %v4264, %v4260
        %v4266 = vlaneseq
        %v4267 = vshrl.u32 %v4266, 7
        %v4268 = vsub.s32 %v686, %v4267
        %v4269 = vrot.slane %v4197, %v4268
        %v4270 = vsel %vm691, %v4269, %v4265
        %v4271 = vlaneseq
        %v4272 = vshrl.u32 %v4271, 7
        %v4273 = vsub.s32 %v693, %v4272
        %v4274 = vrot.slane %v4200, %v4273
        %v4275 = vsel %vm698, %v4274, %v4270
        %v4276 = vlaneseq
        %v4277 = vshrl.u32 %v4276, 7
        %v4278 = vsub.s32 %v700, %v4277
        %v4279 = vrot.slane %v4203, %v4278
        %v4280 = vsel %vm705, %v4279, %v4275
        %v4281 = vlaneseq
        %v4282 = vshrl.u32 %v4281, 7
        %v4283 = vsub.s32 %v707, %v4282
        %v4284 = vrot.slane %v4206, %v4283
        %v4285 = vsel %vm712, %v4284, %v4280
        %v4286 = vlaneseq
        %v4287 = vshrl.u32 %v4286, 7
        %v4288 = vsub.s32 %v714, %v4287
        %v4289 = vrot.slane %v4209, %v4288
        %v4290 = vsel %vm719, %v4289, %v4285
        %v4291 = vlaneseq
        %v4292 = vshrl.u32 %v4291, 7
        %v4293 = vsub.s32 %v721, %v4292
        %v4294 = vrot.slane %v4212, %v4293
        %v4295 = vsel %vm726, %v4294, %v4290
        %v4296 = vlaneseq
        %v4297 = vshrl.u32 %v4296, 7
        %v4298 = vsub.s32 %v728, %v4297
        %v4299 = vrot.slane %v4215, %v4298
        %v4300 = vsel %vm733, %v4299, %v4295
        %v4301 = vlaneseq
        %v4302 = vshrl.u32 %v4301, 7
        %v4303 = vsub.s32 %v735, %v4302
        %v4304 = vrot.slane %v4218, %v4303
        %v4305 = vsel %vm740, %v4304, %v4300
        %v4306 = vlaneseq
        %v4307 = vshrl.u32 %v4306, 7
        %v4308 = vsub.s32 %v742, %v4307
        %v4309 = vrot.slane %v4221, %v4308
        %v4310 = vsel %vm747, %v4309, %v4305
        %v4311 = vlaneseq
        %v4312 = vshrl.u32 %v4311, 7
        %v4313 = vsub.s32 %v749, %v4312
        %v4314 = vrot.slane %v4224, %v4313
        %v4315 = vsel %vm754, %v4314, %v4310
        %v4316 = vlaneseq
        %v4317 = vshrl.u32 %v4316, 7
        %v4318 = vsub.s32 %v756, %v4317
        %v4319 = vrot.slane %v4227, %v4318
        %v4320 = vsel %vm761, %v4319, %v4315
        %v4321 = vlaneseq
        %v4322 = vshrl.u32 %v4321, 7
        %v4323 = vsub.s32 %v763, %v4322
        %v4324 = vrot.slane %v4230, %v4323
        %v4325 = vsel %vm768, %v4324, %v4320
        %v4327 = vadd.f32 %v4182, %v4325
        %4328 = vst [vmem:[#allocation2 + $0x7] sm:$0x1] %v4327
        // Predicated region
        $region37: #{tpu_custom_call.1} parent=31 // pred_check
          %p4329 = pneg %p227
        $region38: #{tpu_custom_call.1} parent=31 // pred_check_branch
          %4331 = sbr.rel (%p4329) target = $region40
        $region39: #{tpu_custom_call.1} parent=31 // pred_region
          %v4332 = vld [vmem:[#allocation2] sm:$0xff]
          %v4333 = vmul.f32 %v4332, 0.00390625
          %v4334 = vpack.c.bf16 %v4333, %v4333
          %4335 = vst [vmem:[%s208] sm:$0xf] %v4334
        $region40: #{tpu_custom_call.1} parent=31 // pred_fallthru
          _
        %s4336 = sand.u32 %s115, 1
        %s4337 = scalar_lea.sflag [#allocation4], %s4336
        %s4338 = sand.u32 %s115, 1
        %s4339 = smul.addr %s4338, 4
        %s4340 = scalar_lea.vmem [#allocation3], %s4339
        // Predicated region
        $region41: #{tpu_custom_call.1} parent=31 // pred_check
          %p4341 = pneg %p125
        $region42: #{tpu_custom_call.1} parent=31 // pred_check_branch
          %4343 = sbr.rel (%p4341) target = $region44
        $region43: #{tpu_custom_call.1} parent=31 // pred_region
          %s4345 = ssub.s32 64, 64
          %4346 = vsyncadd %s4337, %s4345
          %s4347 = smul.addr %s21, 64
          %s4348 = scalar_lea.hbm %s3, %s4347
          %s4350 = sshll.u32 %s4340, 4
          %s4351 = int_to_ptr.vmem [resolvable:$true] %s4350
          %4353 = dma.vmem_to_hbm [thread:$0]  %s4351, 64, %s4348, %s4337
        $region44: #{tpu_custom_call.1} parent=31 // pred_fallthru
          _
      $region32: #{tpu_custom_call.1} parent=5 // pred_fallthru
        _
      %p4354 = scmp.le.s32.totalorder 2, %s12
      // Predicated region
      $region45: #{tpu_custom_call.1} parent=5 // pred_check
        %p4355 = pneg %p4354
      $region46: #{tpu_custom_call.1} parent=5 // pred_check_branch
        %4357 = sbr.rel (%p4355) target = $region48
      $region47: #{tpu_custom_call.1} parent=5 // pred_region
        %s4358 = ssub.s32 %s12, 2
        // Predicated region
        $region49: #{tpu_custom_call.1} parent=47 // pred_check
          %p4359 = pneg %p131
        $region50: #{tpu_custom_call.1} parent=47 // pred_check_branch
          %4361 = sbr.rel (%p4359) target = $region52
        $region51: #{tpu_custom_call.1} parent=47 // pred_region
          %s4362 = sand.u32 %s116, 1
          %s4363 = scalar_lea.sflag [#allocation4], %s4362
          %s4364 = sand.u32 %s116, 1
          %s4365 = smul.addr %s4364, 4
          %s4366 = scalar_lea.vmem [#allocation3], %s4365
          %4367 = dma.done %s4363, 64
        $region52: #{tpu_custom_call.1} parent=47 // pred_fallthru
          _
      $region48: #{tpu_custom_call.1} parent=5 // pred_fallthru
        _
    $region6: #{tpu_custom_call.1} parent=1 // loop_footer
      %s16 = sadd.s32 1, %s12
    $region7: #{tpu_custom_call.1} parent=1 // loop_footer_branch
      %11 = sbr.rel target = $region3
    $region8: #{tpu_custom_call.1} parent=1 // loop_exit
      _
    %4368 = vsyncpa [#allocation4], 1
    %s4369 = scalar_lea.sflag [#allocation4], 1
    %4370 = vsyncpa %s4369, 1

</llo_original>
